<compile_context>
chip_gen: v6e
topology: v6e:2x2x1
jax: 0.10.0
libtpu: 0.0.40
codegen_flags: <defaults>
</compile_context>

<pallas_src>
import numpy as np
import jax
import jax.numpy as jnp
from jax import lax
from jax.experimental import pallas as pl
from jax.experimental.pallas import tpu as pltpu

SIGMAS = (1e-06, 1e-05, 0.0001, 0.001, 0.01, 0.1, 1, 5, 10, 15, 20, 25, 30,
          35, 100, 1000.0, 10000.0, 100000.0, 1000000.0)
BETAS = tuple(float(1.0 / (2.0 * s)) for s in SIGMAS)
_NBETAS = len(BETAS)


def _default_exp_dtype():
    """bf16 EUP exists on v6e/v7x (~2x exp throughput); v5e and older do not."""
    try:
        kind = jax.devices()[0].device_kind.lower()
    except Exception:
        return jnp.float32
    if any(tag in kind for tag in ("v6", "v7", "7x")):
        return jnp.bfloat16
    return jnp.float32


# ---------------------------------------------------------------------------
# In-kernel helpers (pure jnp/lax; traced inside the Pallas kernels).
# ---------------------------------------------------------------------------
def _gram_nt(a, b):
    """a @ b.T on the MXU (contract last dims, no explicit transpose op)."""
    return lax.dot_general(a, b, (((1,), (1,)), ((), ())),
                           preferred_element_type=jnp.float32)


def _matmul(a, b):
    return lax.dot_general(a, b, (((1,), (0,)), ((), ())),
                           preferred_element_type=jnp.float32)


def _kernel_sum(d, exp_dtype):
    """sum_{ij} sum_s exp(-beta_s * d[i,j]).

    One (m,n) accumulator + a single reduction at the end (instead of 19
    per-beta XLU reductions).  exp is evaluated in `exp_dtype` (bf16 halves the
    single-slot EUP cost on v6e/v7x); scaling and accumulation stay f32.
    """
    acc = None
    for beta in BETAS:                                  # static, 19 sigmas
        x = d * jnp.float32(-beta)
        e = jnp.exp(x.astype(exp_dtype)).astype(jnp.float32)
        acc = e if acc is None else acc + e
    return jnp.sum(acc)


def _pair_dist(cols_mat, rows_mat, inst):
    """Second-level squared distances from (m,I) col-features / (I,n) row-features.

    Direct per-feature differences (no a2+b2-2ab cancellation): d >= 0 and the
    self diagonal is exactly 0, so exp(-beta*d) never overflows even at
    beta = 5e5.
    """
    d = None
    for c in range(inst):                               # static, I == instances
        diff = cols_mat[:, c:c + 1] - rows_mat[c:c + 1, :]
        sq = diff * diff
        d = sq if d is None else d + sq
    return d


def _use_self_split(m):
    """Half-split a symmetric self term only when it reduces padded-vreg work."""
    full = (-(-m // 8)) * (-(-m // 128))
    h = m // 2
    halves = 3 * (-(-h // 8)) * (-(-h // 128))
    return (m % 2 == 0) and halves < full


def _self_kernel_sum(cols_mat, rows_mat, inst, exp_dtype):
    """Kernel sum for the symmetric self term K(x,x): AA + BB + 2*AB blocks."""
    m = cols_mat.shape[0]
    if not _use_self_split(m):
        return _kernel_sum(_pair_dist(cols_mat, rows_mat, inst), exp_dtype)
    h = m // 2
    ca, cb = cols_mat[:h], cols_mat[h:]
    ra, rb = rows_mat[:, :h], rows_mat[:, h:]
    s_aa = _kernel_sum(_pair_dist(ca, ra, inst), exp_dtype)
    s_bb = _kernel_sum(_pair_dist(cb, rb, inst), exp_dtype)
    s_ab = _kernel_sum(_pair_dist(ca, rb, inst), exp_dtype)   # BA block skipped
    return s_aa + s_bb + 2.0 * s_ab


def _exp_elements(m):
    """Elements fed through the 19-beta exp for one mmd_loss with m rows."""
    self_elems = 3 * (m // 2) ** 2 if _use_self_split(m) else m * m
    return 2 * self_elems + m * m


# ---------------------------------------------------------------------------
# Fused within/between-class (+ optional global) MMD kernel.
# ---------------------------------------------------------------------------
def _make_mmd_kernel(instances, include_global, exp_dtype):
    inst = instances

    def kernel(s_ref, t_ref, rsel_ref, rselt_ref, mask_w_ref,
               mask_bc_ref, mask_br_ref, oh_ref, oht_ref, out_ref):
        s = s_ref[...].astype(jnp.float32)            # (B, F) source features
        t = t_ref[...].astype(jnp.float32)            # (B, F) target features
        b, f_dim = s.shape
        ones_row = jnp.ones((1, f_dim), jnp.float32)

        def norms(f):
            sq = f * f
            ncol = jnp.sum(sq, axis=1, keepdims=True)       # (B, 1) XLU reduce
            nrow = _gram_nt(ones_row, sq)                   # (1, B) via MXU
            return ncol, nrow

        ns_col, ns_row = norms(s)
        nt_col, nt_row = norms(t)
        g_ss = _gram_nt(s, s)
        g_tt = _gram_nt(t, t)
        # First-level pairwise squared distances; the clamp guards a2+b2-2ab
        # cancellation (second-level self diagonals are exactly zero anyway
        # because cols/rows gather bitwise-identical values from d_*).
        d_s = jnp.maximum(ns_col + ns_row - 2.0 * g_ss, 0.0)   # (B, B)
        d_t = jnp.maximum(nt_col + nt_row - 2.0 * g_tt, 0.0)   # (B, B)

        rsel = rsel_ref[...]          # (M, B) 0/1 row-gather selector
        rselt = rselt_ref[...]        # (B, M) = rsel.T
        mask_w = mask_w_ref[...]      # (B, B) block-diagonal within mask
        mask_bc = mask_bc_ref[...]    # (M, B) between-pair column-block mask
        mask_br = mask_br_ref[...]    # (B, M) = mask_bc.T
        oh = oh_ref[...]              # (B, I) one-hot (j % I == c)
        oht = oht_ref[...]            # (I, B) = oh.T

        # Distance-feature gather: the concatenated (M, I) distance matrix of
        # the reference is produced as (mask * value) one-hot matmuls on the
        # MXU; its transpose is rebuilt the same way from the symmetric d_*
        # (no skinny transposes, no HBM round-trip).
        def gather_within(dfull):
            masked = dfull * mask_w
            return _matmul(masked, oh), _matmul(oht, masked)     # (B,I), (I,B)

        def gather_between(dfull):
            cols_mat = _matmul(_matmul(rsel, dfull) * mask_bc, oh)    # (M, I)
            rows_mat = _matmul(oht, _matmul(dfull, rselt) * mask_br)  # (I, M)
            return cols_mat, rows_mat

        sw_c, sw_r = gather_within(d_s)
        tw_c, tw_r = gather_within(d_t)
        sb_c, sb_r = gather_between(d_s)
        tb_c, tb_r = gather_between(d_t)

        def mmd(x_c, x_r, y_c, y_r):
            m = x_c.shape[0]
            s_xx = _self_kernel_sum(x_c, x_r, inst, exp_dtype)
            s_yy = _self_kernel_sum(y_c, y_r, inst, exp_dtype)
            s_xy = _kernel_sum(_pair_dist(x_c, y_r, inst), exp_dtype)
            return (s_xx + s_yy - 2.0 * s_xy) / jnp.float32(m * m)

        out_ref[0] = mmd(sw_c, sw_r, tw_c, tw_r)       # mmd_loss(wcs, wct)
        out_ref[1] = mmd(sb_c, sb_r, tb_c, tb_r)       # mmd_loss(bcs, bct)

        if include_global:
            # Global MMD reuses d_s / d_t; only the cross Gram is new.
            g_st = _gram_nt(s, t)
            d_st = jnp.maximum(ns_col + nt_row - 2.0 * g_st, 0.0)
            inv = jnp.float32(1.0 / (b * b))
            out_ref[2] = (_kernel_sum(d_s, exp_dtype)
                          + _kernel_sum(d_t, exp_dtype)
                          - 2.0 * _kernel_sum(d_st, exp_dtype)) * inv

    return kernel


# ---------------------------------------------------------------------------
# Standalone global MMD kernel (global_only=True path).
# ---------------------------------------------------------------------------
def _make_global_kernel(exp_dtype):
    def kernel(x_ref, y_ref, out_ref):
        x = x_ref[...].astype(jnp.float32)
        y = y_ref[...].astype(jnp.float32)
        n, f_dim = x.shape
        m = y.shape[0]
        ones_row = jnp.ones((1, f_dim), jnp.float32)

        def norms(f):
            sq = f * f
            return jnp.sum(sq, axis=1, keepdims=True), _gram_nt(ones_row, sq)

        nx_c, nx_r = norms(x)
        ny_c, ny_r = norms(y)
        dxx = jnp.maximum(nx_c + nx_r - 2.0 * _gram_nt(x, x), 0.0)
        dyy = jnp.maximum(ny_c + ny_r - 2.0 * _gram_nt(y, y), 0.0)
        dxy = jnp.maximum(nx_c + ny_r - 2.0 * _gram_nt(x, y), 0.0)
        out_ref[0] = (_kernel_sum(dxx, exp_dtype) / jnp.float32(n * n)
                      + _kernel_sum(dyy, exp_dtype) / jnp.float32(m * m)
                      - 2.0 * _kernel_sum(dxy, exp_dtype) / jnp.float32(n * m))

    return kernel


# ---------------------------------------------------------------------------
# Static selector / mask construction (numpy, built once at module init).
# ---------------------------------------------------------------------------
def _build_constants(batch_size, instances):
    i_ = instances
    b = batch_size
    assert b % i_ == 0, "batch_size must be divisible by instances"
    g = b // i_
    assert g >= 2, "need at least two groups (batch_size // instances >= 2)"

    # Same pair ordering as the reference forward loop.
    pairs = [(0, 1)] + [(i, j) for i in range(1, g) for j in range(g) if j != i]
    m = len(pairs) * i_

    rsel = np.zeros((m, b), np.float32)       # between-class 0/1 row gather
    mask_bc = np.zeros((m, b), np.float32)    # between-class column-block mask
    for p, (a, c) in enumerate(pairs):
        for q in range(i_):
            r = p * i_ + q
            rsel[r, a * i_ + q] = 1.0
            mask_bc[r, c * i_:(c + 1) * i_] = 1.0

    rows = np.arange(b)
    mask_w = (rows[:, None] // i_ == rows[None, :] // i_).astype(np.float32)
    onehot = (rows[:, None] % i_ == np.arange(i_)[None, :]).astype(np.float32)

    arrs = (rsel, rsel.T, mask_w, mask_bc, mask_bc.T, onehot, onehot.T)
    return tuple(jnp.asarray(np.ascontiguousarray(a)) for a in arrs), m


# ---------------------------------------------------------------------------
# Module wrapper
# ---------------------------------------------------------------------------
class MaximumMeanDiscrepancyPallas:
    def __init__(self, batch_size=32, instances=4, global_only=False,
                 distance_only=True, exp_dtype=None):
        self.batch_size = batch_size
        self.instances = instances
        self.global_only = global_only
        self.distance_only = distance_only
        self.exp_dtype = _default_exp_dtype() if exp_dtype is None else exp_dtype
        self._call_cache = {}
        if global_only:
            self._global_kernel = _make_global_kernel(self.exp_dtype)
        else:
            self._consts, self._m_bc = _build_constants(batch_size, instances)
            self._n_out = 2 if distance_only else 3
            self._kernel = _make_mmd_kernel(instances, not distance_only,
                                            self.exp_dtype)

    # -- fused wc/bc (+ global) path ---------------------------------------
    def _fused_cost(self, f_dim, feat_itemsize):
        b, m_bc, inst = self.batch_size, self._m_bc, self.instances
        elems = _exp_elements(b) + _exp_elements(m_bc)
        if not self.distance_only:
            elems += 3 * b * b
        flops = (3 * _NBETAS + 3 * inst) * elems              # exp path + pair_dist
        flops += 2 * b * b * f_dim * (2 if self.distance_only else 3)   # Grams
        flops += 2 * (2 * m_bc * b * b + 2 * m_bc * b * inst + 2 * b * b * inst)
        bytes_in = (2 * b * f_dim * feat_itemsize
                    + sum(int(a.size) * 4 for a in self._consts))
        return pl.CostEstimate(flops=int(flops),
                               transcendentals=int(_NBETAS * elems),
                               bytes_accessed=int(bytes_in + 4 * self._n_out))

    def _fused_fn(self, f_dim, feat_dtype):
        key = (int(f_dim), jnp.dtype(feat_dtype).name)
        fn = self._call_cache.get(key)
        if fn is None:
            fn = pl.pallas_call(
                self._kernel,
                out_shape=jax.ShapeDtypeStruct((self._n_out,), jnp.float32),
                in_specs=[pl.BlockSpec(memory_space=pltpu.MemorySpace.VMEM)] * 9,
                out_specs=pl.BlockSpec(memory_space=pltpu.MemorySpace.SMEM),
                cost_estimate=self._fused_cost(f_dim,
                                               np.dtype(feat_dtype).itemsize),
            )
            self._call_cache[key] = fn
        return fn

    def _fused(self, source, target):
        fn = self._fused_fn(source.shape[1], source.dtype)
        return fn(source, target, *self._consts)

    # -- standalone global path --------------------------------------------
    def _global(self, x, y):
        n, f_dim = int(x.shape[0]), int(x.shape[1])
        m = int(y.shape[0])
        elems = n * n + m * m + n * m
        ce = pl.CostEstimate(
            flops=int((3 * _NBETAS + 5) * elems + 2 * f_dim * elems),
            transcendentals=int(_NBETAS * elems),
            bytes_accessed=int((n + m) * f_dim * np.dtype(x.dtype).itemsize + 4))
        out = pl.pallas_call(
            self._global_kernel,
            out_shape=jax.ShapeDtypeStruct((1,), jnp.float32),
            in_specs=[pl.BlockSpec(memory_space=pltpu.MemorySpace.VMEM)] * 2,
            out_specs=pl.BlockSpec(memory_space=pltpu.MemorySpace.SMEM),
            cost_estimate=ce,
        )(x, y)
        return out[0]

    def __call__(self, source_features, target_features):
        if self.global_only:
            return self._global(source_features, target_features)
        out = self._fused(source_features, target_features)
        if self.distance_only:
            return out[0], out[1]
        return out[0], out[1], out[2]


# ---------------------------------------------------------------------------
# Pure-JAX reference (mirrors the PyTorch module) for validation.
# ---------------------------------------------------------------------------
def _euclid_sq(a, b):
    return jnp.sum((a[:, None, :] - b[None, :, :]) ** 2, axis=-1)


def _ref_kernel_mean(a, b):
    betas = jnp.array(BETAS, jnp.float32)
    d = _euclid_sq(a, b)
    return jnp.mean(jnp.sum(jnp.exp(-betas[:, None, None] * d[None]), axis=0))


def _ref_mmd(a, b):
    return (_ref_kernel_mean(a, a) + _ref_kernel_mean(b, b)
            - 2.0 * _ref_kernel_mean(a, b))


def _reference_wc_bc(source, target, batch_size, instances):
    g = batch_size // instances

    def build(feats):
        t = feats.reshape(g, instances, feats.shape[-1])
        wc = jnp.concatenate([_euclid_sq(t[k], t[k]) for k in range(g)], axis=0)
        pairs = [(0, 1)] + [(i, j) for i in range(1, g) for j in range(g) if j != i]
        bc = jnp.concatenate([_euclid_sq(t[i], t[j]) for i, j in pairs], axis=0)
        return wc, bc

    wct, bct = build(target)
    wcs, bcs = build(source)
    return _ref_mmd(wcs, wct), _ref_mmd(bcs, bct)


# ---------------------------------------------------------------------------
# Self-test
# ---------------------------------------------------------------------------
if __name__ == "__main__":
    def check(value, ref, tag, tol):
        v, r = float(value), float(ref)
        ok = np.isfinite(v) and np.isfinite(r) and abs(v - r) <= tol * (1.0 + abs(r))
        assert ok, (tag, v, r)

    def run_checks(exp_dtype, tol):
        # Small config: exercises the 2-output fused kernel + the global kernel.
        b1, i1, f1 = 8, 4, 32
        k1, k2 = jax.random.split(jax.random.PRNGKey(0))
        src = jax.random.normal(k1, (b1, f1), jnp.float32)
        tgt = jax.random.normal(k2, (b1, f1), jnp.float32)
        mmd = MaximumMeanDiscrepancyPallas(batch_size=b1, instances=i1,
                                           distance_only=True, exp_dtype=exp_dtype)
        wc, bc = mmd(src, tgt)
        glob = MaximumMeanDiscrepancyPallas(batch_size=b1, instances=i1,
                                            global_only=True,
                                            exp_dtype=exp_dtype)(src, tgt)
        jax.block_until_ready((wc, bc, glob))
        rwc, rbc = _reference_wc_bc(src, tgt, b1, i1)
        check(wc, rwc, "wc8", tol)
        check(bc, rbc, "bc8", tol)
        check(glob, _ref_mmd(src, tgt), "global8", tol)

        # Default config: 3-output fused kernel (global fused in); triangular
        # self-split is active on the 200-row between-class terms.
        b2, i2, f2 = 32, 4, 32
        k3, k4 = jax.random.split(jax.random.PRNGKey(1))
        src2 = jax.random.normal(k3, (b2, f2), jnp.float32)
        tgt2 = jax.random.normal(k4, (b2, f2), jnp.float32)
        mmd2 = MaximumMeanDiscrepancyPallas(batch_size=b2, instances=i2,
                                            distance_only=False,
                                            exp_dtype=exp_dtype)
        wc2, bc2, glob2 = mmd2(src2, tgt2)
        jax.block_until_ready((wc2, bc2, glob2))
        rwc2, rbc2 = _reference_wc_bc(src2, tgt2, b2, i2)
        check(wc2, rwc2, "wc32", tol)
        check(bc2, rbc2, "bc32", tol)
        check(glob2, _ref_mmd(src2, tgt2), "global32", tol)

    # Always validate the exact f32-exp path at a tight tolerance.
    run_checks(jnp.float32, 5e-2)
    # On v6e/v7x also exercise the faster bf16-EUP exp path (looser tolerance).
    if _default_exp_dtype() == jnp.bfloat16:
        run_checks(jnp.bfloat16, 2e-1)
    print("KERNEL_OK")
</pallas_src>

<mosaic_0001>
module attributes {stable_mosaic.version = 11 : i64} {
  func.func @kernel(%arg0: memref<8x32xf32, #tpu.memory_space<vmem>>, %arg1: memref<8x32xf32, #tpu.memory_space<vmem>>, %arg2: memref<8x8xf32, #tpu.memory_space<vmem>>, %arg3: memref<8x8xf32, #tpu.memory_space<vmem>>, %arg4: memref<8x8xf32, #tpu.memory_space<vmem>>, %arg5: memref<8x8xf32, #tpu.memory_space<vmem>>, %arg6: memref<8x8xf32, #tpu.memory_space<vmem>>, %arg7: memref<8x4xf32, #tpu.memory_space<vmem>>, %arg8: memref<4x8xf32, #tpu.memory_space<vmem>>, %arg9: memref<2xf32, #tpu.memory_space<smem>>) attributes {dimension_semantics = [], scalar_prefetch = 0 : i64, scratch_operands = 0 : i64, tpu.core_type = #tpu.core_type<tc>} {
    %c0 = arith.constant 0 : index
    %c0_0 = arith.constant 0 : index
    %0 = vector.load %arg0[%c0, %c0_0] : memref<8x32xf32, #tpu.memory_space<vmem>>, vector<8x32xf32>
    %c0_1 = arith.constant 0 : index
    %c0_2 = arith.constant 0 : index
    %1 = vector.load %arg1[%c0_1, %c0_2] : memref<8x32xf32, #tpu.memory_space<vmem>>, vector<8x32xf32>
    %cst = arith.constant 1.000000e+00 : f32
    %2 = vector.broadcast %cst : f32 to vector<1x32xf32>
    %3 = arith.mulf %0, %0 : vector<8x32xf32>
    %cst_3 = arith.constant dense<0.000000e+00> : vector<8xf32>
    %4 = vector.multi_reduction <add>, %3, %cst_3 [1] : vector<8x32xf32> to vector<8xf32>
    %5 = vector.shape_cast %4 : vector<8xf32> to vector<8x1xf32>
    %cst_4 = arith.constant dense<0.000000e+00> : vector<1x8xf32>
    %6 = tpu.matmul %2, %3, %cst_4 {dimension_numbers = #tpu.dot_dimension_numbers<[1], [1], [0], [0], [0, 0, 1, 0], [], []>} : vector<1x32xf32>, vector<8x32xf32>, vector<1x8xf32> -> vector<1x8xf32>
    %7 = arith.mulf %1, %1 : vector<8x32xf32>
    %cst_5 = arith.constant dense<0.000000e+00> : vector<8xf32>
    %8 = vector.multi_reduction <add>, %7, %cst_5 [1] : vector<8x32xf32> to vector<8xf32>
    %9 = vector.shape_cast %8 : vector<8xf32> to vector<8x1xf32>
    %cst_6 = arith.constant dense<0.000000e+00> : vector<1x8xf32>
    %10 = tpu.matmul %2, %7, %cst_6 {dimension_numbers = #tpu.dot_dimension_numbers<[1], [1], [0], [0], [0, 0, 1, 0], [], []>} : vector<1x32xf32>, vector<8x32xf32>, vector<1x8xf32> -> vector<1x8xf32>
    %cst_7 = arith.constant dense<0.000000e+00> : vector<8x8xf32>
    %11 = tpu.matmul %0, %0, %cst_7 {dimension_numbers = #tpu.dot_dimension_numbers<[1], [1], [0], [0], [0, 0, 1, 0], [], []>} : vector<8x32xf32>, vector<8x32xf32>, vector<8x8xf32> -> vector<8x8xf32>
    %cst_8 = arith.constant dense<0.000000e+00> : vector<8x8xf32>
    %12 = tpu.matmul %1, %1, %cst_8 {dimension_numbers = #tpu.dot_dimension_numbers<[1], [1], [0], [0], [0, 0, 1, 0], [], []>} : vector<8x32xf32>, vector<8x32xf32>, vector<8x8xf32> -> vector<8x8xf32>
    %13 = vector.broadcast %5 : vector<8x1xf32> to vector<8x8xf32>
    %14 = vector.broadcast %6 : vector<1x8xf32> to vector<8x8xf32>
    %15 = arith.addf %13, %14 : vector<8x8xf32>
    %cst_9 = arith.constant 2.000000e+00 : f32
    %16 = vector.broadcast %cst_9 : f32 to vector<8x8xf32>
    %17 = arith.mulf %16, %11 : vector<8x8xf32>
    %18 = arith.subf %15, %17 : vector<8x8xf32>
    %cst_10 = arith.constant 0.000000e+00 : f32
    %19 = vector.broadcast %cst_10 : f32 to vector<8x8xf32>
    %20 = arith.maximumf %18, %19 : vector<8x8xf32>
    %21 = vector.broadcast %9 : vector<8x1xf32> to vector<8x8xf32>
    %22 = vector.broadcast %10 : vector<1x8xf32> to vector<8x8xf32>
    %23 = arith.addf %21, %22 : vector<8x8xf32>
    %cst_11 = arith.constant 2.000000e+00 : f32
    %24 = vector.broadcast %cst_11 : f32 to vector<8x8xf32>
    %25 = arith.mulf %24, %12 : vector<8x8xf32>
    %26 = arith.subf %23, %25 : vector<8x8xf32>
    %cst_12 = arith.constant 0.000000e+00 : f32
    %27 = vector.broadcast %cst_12 : f32 to vector<8x8xf32>
    %28 = arith.maximumf %26, %27 : vector<8x8xf32>
    %c0_13 = arith.constant 0 : index
    %c0_14 = arith.constant 0 : index
    %29 = vector.load %arg2[%c0_13, %c0_14] : memref<8x8xf32, #tpu.memory_space<vmem>>, vector<8x8xf32>
    %c0_15 = arith.constant 0 : index
    %c0_16 = arith.constant 0 : index
    %30 = vector.load %arg3[%c0_15, %c0_16] : memref<8x8xf32, #tpu.memory_space<vmem>>, vector<8x8xf32>
    %c0_17 = arith.constant 0 : index
    %c0_18 = arith.constant 0 : index
    %31 = vector.load %arg4[%c0_17, %c0_18] : memref<8x8xf32, #tpu.memory_space<vmem>>, vector<8x8xf32>
    %c0_19 = arith.constant 0 : index
    %c0_20 = arith.constant 0 : index
    %32 = vector.load %arg5[%c0_19, %c0_20] : memref<8x8xf32, #tpu.memory_space<vmem>>, vector<8x8xf32>
    %c0_21 = arith.constant 0 : index
    %c0_22 = arith.constant 0 : index
    %33 = vector.load %arg6[%c0_21, %c0_22] : memref<8x8xf32, #tpu.memory_space<vmem>>, vector<8x8xf32>
    %c0_23 = arith.constant 0 : index
    %c0_24 = arith.constant 0 : index
    %34 = vector.load %arg7[%c0_23, %c0_24] : memref<8x4xf32, #tpu.memory_space<vmem>>, vector<8x4xf32>
    %c0_25 = arith.constant 0 : index
    %c0_26 = arith.constant 0 : index
    %35 = vector.load %arg8[%c0_25, %c0_26] : memref<4x8xf32, #tpu.memory_space<vmem>>, vector<4x8xf32>
    %36 = arith.mulf %20, %31 : vector<8x8xf32>
    %cst_27 = arith.constant dense<0.000000e+00> : vector<8x4xf32>
    %37 = tpu.matmul %36, %34, %cst_27 {dimension_numbers = #tpu.dot_dimension_numbers<[1], [0], [0], [1], [0, 0, 1, 1], [], []>} : vector<8x8xf32>, vector<8x4xf32>, vector<8x4xf32> -> vector<8x4xf32>
    %cst_28 = arith.constant dense<0.000000e+00> : vector<4x8xf32>
    %38 = tpu.matmul %35, %36, %cst_28 {dimension_numbers = #tpu.dot_dimension_numbers<[1], [0], [0], [1], [0, 0, 1, 1], [], []>} : vector<4x8xf32>, vector<8x8xf32>, vector<4x8xf32> -> vector<4x8xf32>
    %39 = arith.mulf %28, %31 : vector<8x8xf32>
    %cst_29 = arith.constant dense<0.000000e+00> : vector<8x4xf32>
    %40 = tpu.matmul %39, %34, %cst_29 {dimension_numbers = #tpu.dot_dimension_numbers<[1], [0], [0], [1], [0, 0, 1, 1], [], []>} : vector<8x8xf32>, vector<8x4xf32>, vector<8x4xf32> -> vector<8x4xf32>
    %cst_30 = arith.constant dense<0.000000e+00> : vector<4x8xf32>
    %41 = tpu.matmul %35, %39, %cst_30 {dimension_numbers = #tpu.dot_dimension_numbers<[1], [0], [0], [1], [0, 0, 1, 1], [], []>} : vector<4x8xf32>, vector<8x8xf32>, vector<4x8xf32> -> vector<4x8xf32>
    %cst_31 = arith.constant dense<0.000000e+00> : vector<8x8xf32>
    %42 = tpu.matmul %29, %20, %cst_31 {dimension_numbers = #tpu.dot_dimension_numbers<[1], [0], [0], [1], [0, 0, 1, 1], [], []>} : vector<8x8xf32>, vector<8x8xf32>, vector<8x8xf32> -> vector<8x8xf32>
    %43 = arith.mulf %42, %32 : vector<8x8xf32>
    %cst_32 = arith.constant dense<0.000000e+00> : vector<8x4xf32>
    %44 = tpu.matmul %43, %34, %cst_32 {dimension_numbers = #tpu.dot_dimension_numbers<[1], [0], [0], [1], [0, 0, 1, 1], [], []>} : vector<8x8xf32>, vector<8x4xf32>, vector<8x4xf32> -> vector<8x4xf32>
    %cst_33 = arith.constant dense<0.000000e+00> : vector<8x8xf32>
    %45 = tpu.matmul %20, %30, %cst_33 {dimension_numbers = #tpu.dot_dimension_numbers<[1], [0], [0], [1], [0, 0, 1, 1], [], []>} : vector<8x8xf32>, vector<8x8xf32>, vector<8x8xf32> -> vector<8x8xf32>
    %46 = arith.mulf %45, %33 : vector<8x8xf32>
    %cst_34 = arith.constant dense<0.000000e+00> : vector<4x8xf32>
    %47 = tpu.matmul %35, %46, %cst_34 {dimension_numbers = #tpu.dot_dimension_numbers<[1], [0], [0], [1], [0, 0, 1, 1], [], []>} : vector<4x8xf32>, vector<8x8xf32>, vector<4x8xf32> -> vector<4x8xf32>
    %cst_35 = arith.constant dense<0.000000e+00> : vector<8x8xf32>
    %48 = tpu.matmul %29, %28, %cst_35 {dimension_numbers = #tpu.dot_dimension_numbers<[1], [0], [0], [1], [0, 0, 1, 1], [], []>} : vector<8x8xf32>, vector<8x8xf32>, vector<8x8xf32> -> vector<8x8xf32>
    %49 = arith.mulf %48, %32 : vector<8x8xf32>
    %cst_36 = arith.constant dense<0.000000e+00> : vector<8x4xf32>
    %50 = tpu.matmul %49, %34, %cst_36 {dimension_numbers = #tpu.dot_dimension_numbers<[1], [0], [0], [1], [0, 0, 1, 1], [], []>} : vector<8x8xf32>, vector<8x4xf32>, vector<8x4xf32> -> vector<8x4xf32>
    %cst_37 = arith.constant dense<0.000000e+00> : vector<8x8xf32>
    %51 = tpu.matmul %28, %30, %cst_37 {dimension_numbers = #tpu.dot_dimension_numbers<[1], [0], [0], [1], [0, 0, 1, 1], [], []>} : vector<8x8xf32>, vector<8x8xf32>, vector<8x8xf32> -> vector<8x8xf32>
    %52 = arith.mulf %51, %33 : vector<8x8xf32>
    %cst_38 = arith.constant dense<0.000000e+00> : vector<4x8xf32>
    %53 = tpu.matmul %35, %52, %cst_38 {dimension_numbers = #tpu.dot_dimension_numbers<[1], [0], [0], [1], [0, 0, 1, 1], [], []>} : vector<4x8xf32>, vector<8x8xf32>, vector<4x8xf32> -> vector<4x8xf32>
    %54 = vector.extract_strided_slice %37 {offsets = [0, 0], sizes = [8, 1], strides = [1, 1]} : vector<8x4xf32> to vector<8x1xf32>
    %55 = vector.extract_strided_slice %38 {offsets = [0, 0], sizes = [1, 8], strides = [1, 1]} : vector<4x8xf32> to vector<1x8xf32>
    %56 = vector.broadcast %54 : vector<8x1xf32> to vector<8x8xf32>
    %57 = vector.broadcast %55 : vector<1x8xf32> to vector<8x8xf32>
    %58 = arith.subf %56, %57 : vector<8x8xf32>
    %59 = arith.mulf %58, %58 : vector<8x8xf32>
    %60 = vector.extract_strided_slice %37 {offsets = [0, 1], sizes = [8, 1], strides = [1, 1]} : vector<8x4xf32> to vector<8x1xf32>
    %61 = vector.extract_strided_slice %38 {offsets = [1, 0], sizes = [1, 8], strides = [1, 1]} : vector<4x8xf32> to vector<1x8xf32>
    %62 = vector.broadcast %60 : vector<8x1xf32> to vector<8x8xf32>
    %63 = vector.broadcast %61 : vector<1x8xf32> to vector<8x8xf32>
    %64 = arith.subf %62, %63 : vector<8x8xf32>
    %65 = arith.mulf %64, %64 : vector<8x8xf32>
    %66 = arith.addf %59, %65 : vector<8x8xf32>
    %67 = vector.extract_strided_slice %37 {offsets = [0, 2], sizes = [8, 1], strides = [1, 1]} : vector<8x4xf32> to vector<8x1xf32>
    %68 = vector.extract_strided_slice %38 {offsets = [2, 0], sizes = [1, 8], strides = [1, 1]} : vector<4x8xf32> to vector<1x8xf32>
    %69 = vector.broadcast %67 : vector<8x1xf32> to vector<8x8xf32>
    %70 = vector.broadcast %68 : vector<1x8xf32> to vector<8x8xf32>
    %71 = arith.subf %69, %70 : vector<8x8xf32>
    %72 = arith.mulf %71, %71 : vector<8x8xf32>
    %73 = arith.addf %66, %72 : vector<8x8xf32>
    %74 = vector.extract_strided_slice %37 {offsets = [0, 3], sizes = [8, 1], strides = [1, 1]} : vector<8x4xf32> to vector<8x1xf32>
    %75 = vector.extract_strided_slice %38 {offsets = [3, 0], sizes = [1, 8], strides = [1, 1]} : vector<4x8xf32> to vector<1x8xf32>
    %76 = vector.broadcast %74 : vector<8x1xf32> to vector<8x8xf32>
    %77 = vector.broadcast %75 : vector<1x8xf32> to vector<8x8xf32>
    %78 = arith.subf %76, %77 : vector<8x8xf32>
    %79 = arith.mulf %78, %78 : vector<8x8xf32>
    %80 = arith.addf %73, %79 : vector<8x8xf32>
    %cst_39 = arith.constant -5.000000e+05 : f32
    %81 = vector.broadcast %cst_39 : f32 to vector<8x8xf32>
    %82 = arith.mulf %80, %81 : vector<8x8xf32>
    %83 = math.exp %82 : vector<8x8xf32>
    %cst_40 = arith.constant -5.000000e+04 : f32
    %84 = vector.broadcast %cst_40 : f32 to vector<8x8xf32>
    %85 = arith.mulf %80, %84 : vector<8x8xf32>
    %86 = math.exp %85 : vector<8x8xf32>
    %87 = arith.addf %83, %86 : vector<8x8xf32>
    %cst_41 = arith.constant -5.000000e+03 : f32
    %88 = vector.broadcast %cst_41 : f32 to vector<8x8xf32>
    %89 = arith.mulf %80, %88 : vector<8x8xf32>
    %90 = math.exp %89 : vector<8x8xf32>
    %91 = arith.addf %87, %90 : vector<8x8xf32>
    %cst_42 = arith.constant -5.000000e+02 : f32
    %92 = vector.broadcast %cst_42 : f32 to vector<8x8xf32>
    %93 = arith.mulf %80, %92 : vector<8x8xf32>
    %94 = math.exp %93 : vector<8x8xf32>
    %95 = arith.addf %91, %94 : vector<8x8xf32>
    %cst_43 = arith.constant -5.000000e+01 : f32
    %96 = vector.broadcast %cst_43 : f32 to vector<8x8xf32>
    %97 = arith.mulf %80, %96 : vector<8x8xf32>
    %98 = math.exp %97 : vector<8x8xf32>
    %99 = arith.addf %95, %98 : vector<8x8xf32>
    %cst_44 = arith.constant -5.000000e+00 : f32
    %100 = vector.broadcast %cst_44 : f32 to vector<8x8xf32>
    %101 = arith.mulf %80, %100 : vector<8x8xf32>
    %102 = math.exp %101 : vector<8x8xf32>
    %103 = arith.addf %99, %102 : vector<8x8xf32>
    %cst_45 = arith.constant -5.000000e-01 : f32
    %104 = vector.broadcast %cst_45 : f32 to vector<8x8xf32>
    %105 = arith.mulf %80, %104 : vector<8x8xf32>
    %106 = math.exp %105 : vector<8x8xf32>
    %107 = arith.addf %103, %106 : vector<8x8xf32>
    %cst_46 = arith.constant -1.000000e-01 : f32
    %108 = vector.broadcast %cst_46 : f32 to vector<8x8xf32>
    %109 = arith.mulf %80, %108 : vector<8x8xf32>
    %110 = math.exp %109 : vector<8x8xf32>
    %111 = arith.addf %107, %110 : vector<8x8xf32>
    %cst_47 = arith.constant -5.000000e-02 : f32
    %112 = vector.broadcast %cst_47 : f32 to vector<8x8xf32>
    %113 = arith.mulf %80, %112 : vector<8x8xf32>
    %114 = math.exp %113 : vector<8x8xf32>
    %115 = arith.addf %111, %114 : vector<8x8xf32>
    %cst_48 = arith.constant -0.0333333351 : f32
    %116 = vector.broadcast %cst_48 : f32 to vector<8x8xf32>
    %117 = arith.mulf %80, %116 : vector<8x8xf32>
    %118 = math.exp %117 : vector<8x8xf32>
    %119 = arith.addf %115, %118 : vector<8x8xf32>
    %cst_49 = arith.constant -2.500000e-02 : f32
    %120 = vector.broadcast %cst_49 : f32 to vector<8x8xf32>
    %121 = arith.mulf %80, %120 : vector<8x8xf32>
    %122 = math.exp %121 : vector<8x8xf32>
    %123 = arith.addf %119, %122 : vector<8x8xf32>
    %cst_50 = arith.constant -2.000000e-02 : f32
    %124 = vector.broadcast %cst_50 : f32 to vector<8x8xf32>
    %125 = arith.mulf %80, %124 : vector<8x8xf32>
    %126 = math.exp %125 : vector<8x8xf32>
    %127 = arith.addf %123, %126 : vector<8x8xf32>
    %cst_51 = arith.constant -0.0166666675 : f32
    %128 = vector.broadcast %cst_51 : f32 to vector<8x8xf32>
    %129 = arith.mulf %80, %128 : vector<8x8xf32>
    %130 = math.exp %129 : vector<8x8xf32>
    %131 = arith.addf %127, %130 : vector<8x8xf32>
    %cst_52 = arith.constant -0.0142857144 : f32
    %132 = vector.broadcast %cst_52 : f32 to vector<8x8xf32>
    %133 = arith.mulf %80, %132 : vector<8x8xf32>
    %134 = math.exp %133 : vector<8x8xf32>
    %135 = arith.addf %131, %134 : vector<8x8xf32>
    %cst_53 = arith.constant -5.000000e-03 : f32
    %136 = vector.broadcast %cst_53 : f32 to vector<8x8xf32>
    %137 = arith.mulf %80, %136 : vector<8x8xf32>
    %138 = math.exp %137 : vector<8x8xf32>
    %139 = arith.addf %135, %138 : vector<8x8xf32>
    %cst_54 = arith.constant -5.000000e-04 : f32
    %140 = vector.broadcast %cst_54 : f32 to vector<8x8xf32>
    %141 = arith.mulf %80, %140 : vector<8x8xf32>
    %142 = math.exp %141 : vector<8x8xf32>
    %143 = arith.addf %139, %142 : vector<8x8xf32>
    %cst_55 = arith.constant -5.000000e-05 : f32
    %144 = vector.broadcast %cst_55 : f32 to vector<8x8xf32>
    %145 = arith.mulf %80, %144 : vector<8x8xf32>
    %146 = math.exp %145 : vector<8x8xf32>
    %147 = arith.addf %143, %146 : vector<8x8xf32>
    %cst_56 = arith.constant -5.000000e-06 : f32
    %148 = vector.broadcast %cst_56 : f32 to vector<8x8xf32>
    %149 = arith.mulf %80, %148 : vector<8x8xf32>
    %150 = math.exp %149 : vector<8x8xf32>
    %151 = arith.addf %147, %150 : vector<8x8xf32>
    %cst_57 = arith.constant -5.000000e-07 : f32
    %152 = vector.broadcast %cst_57 : f32 to vector<8x8xf32>
    %153 = arith.mulf %80, %152 : vector<8x8xf32>
    %154 = math.exp %153 : vector<8x8xf32>
    %155 = arith.addf %151, %154 : vector<8x8xf32>
    %156 = vector.shape_cast %155 : vector<8x8xf32> to vector<1x8x8xf32>
    %cst_58 = arith.constant dense<0.000000e+00> : vector<1xf32>
    %157 = vector.multi_reduction <add>, %156, %cst_58 [1, 2] : vector<1x8x8xf32> to vector<1xf32>
    %158 = vector.shape_cast %157 : vector<1xf32> to vector<1x1x1xf32>
    %159 = vector.extract %158[0, 0, 0] : f32 from vector<1x1x1xf32>
    %160 = vector.extract_strided_slice %40 {offsets = [0, 0], sizes = [8, 1], strides = [1, 1]} : vector<8x4xf32> to vector<8x1xf32>
    %161 = vector.extract_strided_slice %41 {offsets = [0, 0], sizes = [1, 8], strides = [1, 1]} : vector<4x8xf32> to vector<1x8xf32>
    %162 = vector.broadcast %160 : vector<8x1xf32> to vector<8x8xf32>
    %163 = vector.broadcast %161 : vector<1x8xf32> to vector<8x8xf32>
    %164 = arith.subf %162, %163 : vector<8x8xf32>
    %165 = arith.mulf %164, %164 : vector<8x8xf32>
    %166 = vector.extract_strided_slice %40 {offsets = [0, 1], sizes = [8, 1], strides = [1, 1]} : vector<8x4xf32> to vector<8x1xf32>
    %167 = vector.extract_strided_slice %41 {offsets = [1, 0], sizes = [1, 8], strides = [1, 1]} : vector<4x8xf32> to vector<1x8xf32>
    %168 = vector.broadcast %166 : vector<8x1xf32> to vector<8x8xf32>
    %169 = vector.broadcast %167 : vector<1x8xf32> to vector<8x8xf32>
    %170 = arith.subf %168, %169 : vector<8x8xf32>
    %171 = arith.mulf %170, %170 : vector<8x8xf32>
    %172 = arith.addf %165, %171 : vector<8x8xf32>
    %173 = vector.extract_strided_slice %40 {offsets = [0, 2], sizes = [8, 1], strides = [1, 1]} : vector<8x4xf32> to vector<8x1xf32>
    %174 = vector.extract_strided_slice %41 {offsets = [2, 0], sizes = [1, 8], strides = [1, 1]} : vector<4x8xf32> to vector<1x8xf32>
    %175 = vector.broadcast %173 : vector<8x1xf32> to vector<8x8xf32>
    %176 = vector.broadcast %174 : vector<1x8xf32> to vector<8x8xf32>
    %177 = arith.subf %175, %176 : vector<8x8xf32>
    %178 = arith.mulf %177, %177 : vector<8x8xf32>
    %179 = arith.addf %172, %178 : vector<8x8xf32>
    %180 = vector.extract_strided_slice %40 {offsets = [0, 3], sizes = [8, 1], strides = [1, 1]} : vector<8x4xf32> to vector<8x1xf32>
    %181 = vector.extract_strided_slice %41 {offsets = [3, 0], sizes = [1, 8], strides = [1, 1]} : vector<4x8xf32> to vector<1x8xf32>
    %182 = vector.broadcast %180 : vector<8x1xf32> to vector<8x8xf32>
    %183 = vector.broadcast %181 : vector<1x8xf32> to vector<8x8xf32>
    %184 = arith.subf %182, %183 : vector<8x8xf32>
    %185 = arith.mulf %184, %184 : vector<8x8xf32>
    %186 = arith.addf %179, %185 : vector<8x8xf32>
    %cst_59 = arith.constant -5.000000e+05 : f32
    %187 = vector.broadcast %cst_59 : f32 to vector<8x8xf32>
    %188 = arith.mulf %186, %187 : vector<8x8xf32>
    %189 = math.exp %188 : vector<8x8xf32>
    %cst_60 = arith.constant -5.000000e+04 : f32
    %190 = vector.broadcast %cst_60 : f32 to vector<8x8xf32>
    %191 = arith.mulf %186, %190 : vector<8x8xf32>
    %192 = math.exp %191 : vector<8x8xf32>
    %193 = arith.addf %189, %192 : vector<8x8xf32>
    %cst_61 = arith.constant -5.000000e+03 : f32
    %194 = vector.broadcast %cst_61 : f32 to vector<8x8xf32>
    %195 = arith.mulf %186, %194 : vector<8x8xf32>
    %196 = math.exp %195 : vector<8x8xf32>
    %197 = arith.addf %193, %196 : vector<8x8xf32>
    %cst_62 = arith.constant -5.000000e+02 : f32
    %198 = vector.broadcast %cst_62 : f32 to vector<8x8xf32>
    %199 = arith.mulf %186, %198 : vector<8x8xf32>
    %200 = math.exp %199 : vector<8x8xf32>
    %201 = arith.addf %197, %200 : vector<8x8xf32>
    %cst_63 = arith.constant -5.000000e+01 : f32
    %202 = vector.broadcast %cst_63 : f32 to vector<8x8xf32>
    %203 = arith.mulf %186, %202 : vector<8x8xf32>
    %204 = math.exp %203 : vector<8x8xf32>
    %205 = arith.addf %201, %204 : vector<8x8xf32>
    %cst_64 = arith.constant -5.000000e+00 : f32
    %206 = vector.broadcast %cst_64 : f32 to vector<8x8xf32>
    %207 = arith.mulf %186, %206 : vector<8x8xf32>
    %208 = math.exp %207 : vector<8x8xf32>
    %209 = arith.addf %205, %208 : vector<8x8xf32>
    %cst_65 = arith.constant -5.000000e-01 : f32
    %210 = vector.broadcast %cst_65 : f32 to vector<8x8xf32>
    %211 = arith.mulf %186, %210 : vector<8x8xf32>
    %212 = math.exp %211 : vector<8x8xf32>
    %213 = arith.addf %209, %212 : vector<8x8xf32>
    %cst_66 = arith.constant -1.000000e-01 : f32
    %214 = vector.broadcast %cst_66 : f32 to vector<8x8xf32>
    %215 = arith.mulf %186, %214 : vector<8x8xf32>
    %216 = math.exp %215 : vector<8x8xf32>
    %217 = arith.addf %213, %216 : vector<8x8xf32>
    %cst_67 = arith.constant -5.000000e-02 : f32
    %218 = vector.broadcast %cst_67 : f32 to vector<8x8xf32>
    %219 = arith.mulf %186, %218 : vector<8x8xf32>
    %220 = math.exp %219 : vector<8x8xf32>
    %221 = arith.addf %217, %220 : vector<8x8xf32>
    %cst_68 = arith.constant -0.0333333351 : f32
    %222 = vector.broadcast %cst_68 : f32 to vector<8x8xf32>
    %223 = arith.mulf %186, %222 : vector<8x8xf32>
    %224 = math.exp %223 : vector<8x8xf32>
    %225 = arith.addf %221, %224 : vector<8x8xf32>
    %cst_69 = arith.constant -2.500000e-02 : f32
    %226 = vector.broadcast %cst_69 : f32 to vector<8x8xf32>
    %227 = arith.mulf %186, %226 : vector<8x8xf32>
    %228 = math.exp %227 : vector<8x8xf32>
    %229 = arith.addf %225, %228 : vector<8x8xf32>
    %cst_70 = arith.constant -2.000000e-02 : f32
    %230 = vector.broadcast %cst_70 : f32 to vector<8x8xf32>
    %231 = arith.mulf %186, %230 : vector<8x8xf32>
    %232 = math.exp %231 : vector<8x8xf32>
    %233 = arith.addf %229, %232 : vector<8x8xf32>
    %cst_71 = arith.constant -0.0166666675 : f32
    %234 = vector.broadcast %cst_71 : f32 to vector<8x8xf32>
    %235 = arith.mulf %186, %234 : vector<8x8xf32>
    %236 = math.exp %235 : vector<8x8xf32>
    %237 = arith.addf %233, %236 : vector<8x8xf32>
    %cst_72 = arith.constant -0.0142857144 : f32
    %238 = vector.broadcast %cst_72 : f32 to vector<8x8xf32>
    %239 = arith.mulf %186, %238 : vector<8x8xf32>
    %240 = math.exp %239 : vector<8x8xf32>
    %241 = arith.addf %237, %240 : vector<8x8xf32>
    %cst_73 = arith.constant -5.000000e-03 : f32
    %242 = vector.broadcast %cst_73 : f32 to vector<8x8xf32>
    %243 = arith.mulf %186, %242 : vector<8x8xf32>
    %244 = math.exp %243 : vector<8x8xf32>
    %245 = arith.addf %241, %244 : vector<8x8xf32>
    %cst_74 = arith.constant -5.000000e-04 : f32
    %246 = vector.broadcast %cst_74 : f32 to vector<8x8xf32>
    %247 = arith.mulf %186, %246 : vector<8x8xf32>
    %248 = math.exp %247 : vector<8x8xf32>
    %249 = arith.addf %245, %248 : vector<8x8xf32>
    %cst_75 = arith.constant -5.000000e-05 : f32
    %250 = vector.broadcast %cst_75 : f32 to vector<8x8xf32>
    %251 = arith.mulf %186, %250 : vector<8x8xf32>
    %252 = math.exp %251 : vector<8x8xf32>
    %253 = arith.addf %249, %252 : vector<8x8xf32>
    %cst_76 = arith.constant -5.000000e-06 : f32
    %254 = vector.broadcast %cst_76 : f32 to vector<8x8xf32>
    %255 = arith.mulf %186, %254 : vector<8x8xf32>
    %256 = math.exp %255 : vector<8x8xf32>
    %257 = arith.addf %253, %256 : vector<8x8xf32>
    %cst_77 = arith.constant -5.000000e-07 : f32
    %258 = vector.broadcast %cst_77 : f32 to vector<8x8xf32>
    %259 = arith.mulf %186, %258 : vector<8x8xf32>
    %260 = math.exp %259 : vector<8x8xf32>
    %261 = arith.addf %257, %260 : vector<8x8xf32>
    %262 = vector.shape_cast %261 : vector<8x8xf32> to vector<1x8x8xf32>
    %cst_78 = arith.constant dense<0.000000e+00> : vector<1xf32>
    %263 = vector.multi_reduction <add>, %262, %cst_78 [1, 2] : vector<1x8x8xf32> to vector<1xf32>
    %264 = vector.shape_cast %263 : vector<1xf32> to vector<1x1x1xf32>
    %265 = vector.extract %264[0, 0, 0] : f32 from vector<1x1x1xf32>
    %266 = vector.extract_strided_slice %37 {offsets = [0, 0], sizes = [8, 1], strides = [1, 1]} : vector<8x4xf32> to vector<8x1xf32>
    %267 = vector.extract_strided_slice %41 {offsets = [0, 0], sizes = [1, 8], strides = [1, 1]} : vector<4x8xf32> to vector<1x8xf32>
    %268 = vector.broadcast %266 : vector<8x1xf32> to vector<8x8xf32>
    %269 = vector.broadcast %267 : vector<1x8xf32> to vector<8x8xf32>
    %270 = arith.subf %268, %269 : vector<8x8xf32>
    %271 = arith.mulf %270, %270 : vector<8x8xf32>
    %272 = vector.extract_strided_slice %37 {offsets = [0, 1], sizes = [8, 1], strides = [1, 1]} : vector<8x4xf32> to vector<8x1xf32>
    %273 = vector.extract_strided_slice %41 {offsets = [1, 0], sizes = [1, 8], strides = [1, 1]} : vector<4x8xf32> to vector<1x8xf32>
    %274 = vector.broadcast %272 : vector<8x1xf32> to vector<8x8xf32>
    %275 = vector.broadcast %273 : vector<1x8xf32> to vector<8x8xf32>
    %276 = arith.subf %274, %275 : vector<8x8xf32>
    %277 = arith.mulf %276, %276 : vector<8x8xf32>
    %278 = arith.addf %271, %277 : vector<8x8xf32>
    %279 = vector.extract_strided_slice %37 {offsets = [0, 2], sizes = [8, 1], strides = [1, 1]} : vector<8x4xf32> to vector<8x1xf32>
    %280 = vector.extract_strided_slice %41 {offsets = [2, 0], sizes = [1, 8], strides = [1, 1]} : vector<4x8xf32> to vector<1x8xf32>
    %281 = vector.broadcast %279 : vector<8x1xf32> to vector<8x8xf32>
    %282 = vector.broadcast %280 : vector<1x8xf32> to vector<8x8xf32>
    %283 = arith.subf %281, %282 : vector<8x8xf32>
    %284 = arith.mulf %283, %283 : vector<8x8xf32>
    %285 = arith.addf %278, %284 : vector<8x8xf32>
    %286 = vector.extract_strided_slice %37 {offsets = [0, 3], sizes = [8, 1], strides = [1, 1]} : vector<8x4xf32> to vector<8x1xf32>
    %287 = vector.extract_strided_slice %41 {offsets = [3, 0], sizes = [1, 8], strides = [1, 1]} : vector<4x8xf32> to vector<1x8xf32>
    %288 = vector.broadcast %286 : vector<8x1xf32> to vector<8x8xf32>
    %289 = vector.broadcast %287 : vector<1x8xf32> to vector<8x8xf32>
    %290 = arith.subf %288, %289 : vector<8x8xf32>
    %291 = arith.mulf %290, %290 : vector<8x8xf32>
    %292 = arith.addf %285, %291 : vector<8x8xf32>
    %cst_79 = arith.constant -5.000000e+05 : f32
    %293 = vector.broadcast %cst_79 : f32 to vector<8x8xf32>
    %294 = arith.mulf %292, %293 : vector<8x8xf32>
    %295 = math.exp %294 : vector<8x8xf32>
    %cst_80 = arith.constant -5.000000e+04 : f32
    %296 = vector.broadcast %cst_80 : f32 to vector<8x8xf32>
    %297 = arith.mulf %292, %296 : vector<8x8xf32>
    %298 = math.exp %297 : vector<8x8xf32>
    %299 = arith.addf %295, %298 : vector<8x8xf32>
    %cst_81 = arith.constant -5.000000e+03 : f32
    %300 = vector.broadcast %cst_81 : f32 to vector<8x8xf32>
    %301 = arith.mulf %292, %300 : vector<8x8xf32>
    %302 = math.exp %301 : vector<8x8xf32>
    %303 = arith.addf %299, %302 : vector<8x8xf32>
    %cst_82 = arith.constant -5.000000e+02 : f32
    %304 = vector.broadcast %cst_82 : f32 to vector<8x8xf32>
    %305 = arith.mulf %292, %304 : vector<8x8xf32>
    %306 = math.exp %305 : vector<8x8xf32>
    %307 = arith.addf %303, %306 : vector<8x8xf32>
    %cst_83 = arith.constant -5.000000e+01 : f32
    %308 = vector.broadcast %cst_83 : f32 to vector<8x8xf32>
    %309 = arith.mulf %292, %308 : vector<8x8xf32>
    %310 = math.exp %309 : vector<8x8xf32>
    %311 = arith.addf %307, %310 : vector<8x8xf32>
    %cst_84 = arith.constant -5.000000e+00 : f32
    %312 = vector.broadcast %cst_84 : f32 to vector<8x8xf32>
    %313 = arith.mulf %292, %312 : vector<8x8xf32>
    %314 = math.exp %313 : vector<8x8xf32>
    %315 = arith.addf %311, %314 : vector<8x8xf32>
    %cst_85 = arith.constant -5.000000e-01 : f32
    %316 = vector.broadcast %cst_85 : f32 to vector<8x8xf32>
    %317 = arith.mulf %292, %316 : vector<8x8xf32>
    %318 = math.exp %317 : vector<8x8xf32>
    %319 = arith.addf %315, %318 : vector<8x8xf32>
    %cst_86 = arith.constant -1.000000e-01 : f32
    %320 = vector.broadcast %cst_86 : f32 to vector<8x8xf32>
    %321 = arith.mulf %292, %320 : vector<8x8xf32>
    %322 = math.exp %321 : vector<8x8xf32>
    %323 = arith.addf %319, %322 : vector<8x8xf32>
    %cst_87 = arith.constant -5.000000e-02 : f32
    %324 = vector.broadcast %cst_87 : f32 to vector<8x8xf32>
    %325 = arith.mulf %292, %324 : vector<8x8xf32>
    %326 = math.exp %325 : vector<8x8xf32>
    %327 = arith.addf %323, %326 : vector<8x8xf32>
    %cst_88 = arith.constant -0.0333333351 : f32
    %328 = vector.broadcast %cst_88 : f32 to vector<8x8xf32>
    %329 = arith.mulf %292, %328 : vector<8x8xf32>
    %330 = math.exp %329 : vector<8x8xf32>
    %331 = arith.addf %327, %330 : vector<8x8xf32>
    %cst_89 = arith.constant -2.500000e-02 : f32
    %332 = vector.broadcast %cst_89 : f32 to vector<8x8xf32>
    %333 = arith.mulf %292, %332 : vector<8x8xf32>
    %334 = math.exp %333 : vector<8x8xf32>
    %335 = arith.addf %331, %334 : vector<8x8xf32>
    %cst_90 = arith.constant -2.000000e-02 : f32
    %336 = vector.broadcast %cst_90 : f32 to vector<8x8xf32>
    %337 = arith.mulf %292, %336 : vector<8x8xf32>
    %338 = math.exp %337 : vector<8x8xf32>
    %339 = arith.addf %335, %338 : vector<8x8xf32>
    %cst_91 = arith.constant -0.0166666675 : f32
    %340 = vector.broadcast %cst_91 : f32 to vector<8x8xf32>
    %341 = arith.mulf %292, %340 : vector<8x8xf32>
    %342 = math.exp %341 : vector<8x8xf32>
    %343 = arith.addf %339, %342 : vector<8x8xf32>
    %cst_92 = arith.constant -0.0142857144 : f32
    %344 = vector.broadcast %cst_92 : f32 to vector<8x8xf32>
    %345 = arith.mulf %292, %344 : vector<8x8xf32>
    %346 = math.exp %345 : vector<8x8xf32>
    %347 = arith.addf %343, %346 : vector<8x8xf32>
    %cst_93 = arith.constant -5.000000e-03 : f32
    %348 = vector.broadcast %cst_93 : f32 to vector<8x8xf32>
    %349 = arith.mulf %292, %348 : vector<8x8xf32>
    %350 = math.exp %349 : vector<8x8xf32>
    %351 = arith.addf %347, %350 : vector<8x8xf32>
    %cst_94 = arith.constant -5.000000e-04 : f32
    %352 = vector.broadcast %cst_94 : f32 to vector<8x8xf32>
    %353 = arith.mulf %292, %352 : vector<8x8xf32>
    %354 = math.exp %353 : vector<8x8xf32>
    %355 = arith.addf %351, %354 : vector<8x8xf32>
    %cst_95 = arith.constant -5.000000e-05 : f32
    %356 = vector.broadcast %cst_95 : f32 to vector<8x8xf32>
    %357 = arith.mulf %292, %356 : vector<8x8xf32>
    %358 = math.exp %357 : vector<8x8xf32>
    %359 = arith.addf %355, %358 : vector<8x8xf32>
    %cst_96 = arith.constant -5.000000e-06 : f32
    %360 = vector.broadcast %cst_96 : f32 to vector<8x8xf32>
    %361 = arith.mulf %292, %360 : vector<8x8xf32>
    %362 = math.exp %361 : vector<8x8xf32>
    %363 = arith.addf %359, %362 : vector<8x8xf32>
    %cst_97 = arith.constant -5.000000e-07 : f32
    %364 = vector.broadcast %cst_97 : f32 to vector<8x8xf32>
    %365 = arith.mulf %292, %364 : vector<8x8xf32>
    %366 = math.exp %365 : vector<8x8xf32>
    %367 = arith.addf %363, %366 : vector<8x8xf32>
    %368 = vector.shape_cast %367 : vector<8x8xf32> to vector<1x8x8xf32>
    %cst_98 = arith.constant dense<0.000000e+00> : vector<1xf32>
    %369 = vector.multi_reduction <add>, %368, %cst_98 [1, 2] : vector<1x8x8xf32> to vector<1xf32>
    %370 = vector.shape_cast %369 : vector<1xf32> to vector<1x1x1xf32>
    %371 = vector.extract %370[0, 0, 0] : f32 from vector<1x1x1xf32>
    %372 = arith.addf %159, %265 : f32
    %cst_99 = arith.constant 2.000000e+00 : f32
    %373 = arith.mulf %cst_99, %371 : f32
    %374 = arith.subf %372, %373 : f32
    %cst_100 = arith.constant 6.400000e+01 : f32
    %375 = arith.divf %374, %cst_100 : f32
    %c0_101 = arith.constant 0 : index
    %376 = memref.load %arg9[%c0_101] : memref<2xf32, #tpu.memory_space<smem>>
    memref.store %375, %arg9[%c0_101] : memref<2xf32, #tpu.memory_space<smem>>
    %377 = vector.extract_strided_slice %44 {offsets = [0, 0], sizes = [8, 1], strides = [1, 1]} : vector<8x4xf32> to vector<8x1xf32>
    %378 = vector.extract_strided_slice %47 {offsets = [0, 0], sizes = [1, 8], strides = [1, 1]} : vector<4x8xf32> to vector<1x8xf32>
    %379 = vector.broadcast %377 : vector<8x1xf32> to vector<8x8xf32>
    %380 = vector.broadcast %378 : vector<1x8xf32> to vector<8x8xf32>
    %381 = arith.subf %379, %380 : vector<8x8xf32>
    %382 = arith.mulf %381, %381 : vector<8x8xf32>
    %383 = vector.extract_strided_slice %44 {offsets = [0, 1], sizes = [8, 1], strides = [1, 1]} : vector<8x4xf32> to vector<8x1xf32>
    %384 = vector.extract_strided_slice %47 {offsets = [1, 0], sizes = [1, 8], strides = [1, 1]} : vector<4x8xf32> to vector<1x8xf32>
    %385 = vector.broadcast %383 : vector<8x1xf32> to vector<8x8xf32>
    %386 = vector.broadcast %384 : vector<1x8xf32> to vector<8x8xf32>
    %387 = arith.subf %385, %386 : vector<8x8xf32>
    %388 = arith.mulf %387, %387 : vector<8x8xf32>
    %389 = arith.addf %382, %388 : vector<8x8xf32>
    %390 = vector.extract_strided_slice %44 {offsets = [0, 2], sizes = [8, 1], strides = [1, 1]} : vector<8x4xf32> to vector<8x1xf32>
    %391 = vector.extract_strided_slice %47 {offsets = [2, 0], sizes = [1, 8], strides = [1, 1]} : vector<4x8xf32> to vector<1x8xf32>
    %392 = vector.broadcast %390 : vector<8x1xf32> to vector<8x8xf32>
    %393 = vector.broadcast %391 : vector<1x8xf32> to vector<8x8xf32>
    %394 = arith.subf %392, %393 : vector<8x8xf32>
    %395 = arith.mulf %394, %394 : vector<8x8xf32>
    %396 = arith.addf %389, %395 : vector<8x8xf32>
    %397 = vector.extract_strided_slice %44 {offsets = [0, 3], sizes = [8, 1], strides = [1, 1]} : vector<8x4xf32> to vector<8x1xf32>
    %398 = vector.extract_strided_slice %47 {offsets = [3, 0], sizes = [1, 8], strides = [1, 1]} : vector<4x8xf32> to vector<1x8xf32>
    %399 = vector.broadcast %397 : vector<8x1xf32> to vector<8x8xf32>
    %400 = vector.broadcast %398 : vector<1x8xf32> to vector<8x8xf32>
    %401 = arith.subf %399, %400 : vector<8x8xf32>
    %402 = arith.mulf %401, %401 : vector<8x8xf32>
    %403 = arith.addf %396, %402 : vector<8x8xf32>
    %cst_102 = arith.constant -5.000000e+05 : f32
    %404 = vector.broadcast %cst_102 : f32 to vector<8x8xf32>
    %405 = arith.mulf %403, %404 : vector<8x8xf32>
    %406 = math.exp %405 : vector<8x8xf32>
    %cst_103 = arith.constant -5.000000e+04 : f32
    %407 = vector.broadcast %cst_103 : f32 to vector<8x8xf32>
    %408 = arith.mulf %403, %407 : vector<8x8xf32>
    %409 = math.exp %408 : vector<8x8xf32>
    %410 = arith.addf %406, %409 : vector<8x8xf32>
    %cst_104 = arith.constant -5.000000e+03 : f32
    %411 = vector.broadcast %cst_104 : f32 to vector<8x8xf32>
    %412 = arith.mulf %403, %411 : vector<8x8xf32>
    %413 = math.exp %412 : vector<8x8xf32>
    %414 = arith.addf %410, %413 : vector<8x8xf32>
    %cst_105 = arith.constant -5.000000e+02 : f32
    %415 = vector.broadcast %cst_105 : f32 to vector<8x8xf32>
    %416 = arith.mulf %403, %415 : vector<8x8xf32>
    %417 = math.exp %416 : vector<8x8xf32>
    %418 = arith.addf %414, %417 : vector<8x8xf32>
    %cst_106 = arith.constant -5.000000e+01 : f32
    %419 = vector.broadcast %cst_106 : f32 to vector<8x8xf32>
    %420 = arith.mulf %403, %419 : vector<8x8xf32>
    %421 = math.exp %420 : vector<8x8xf32>
    %422 = arith.addf %418, %421 : vector<8x8xf32>
    %cst_107 = arith.constant -5.000000e+00 : f32
    %423 = vector.broadcast %cst_107 : f32 to vector<8x8xf32>
    %424 = arith.mulf %403, %423 : vector<8x8xf32>
    %425 = math.exp %424 : vector<8x8xf32>
    %426 = arith.addf %422, %425 : vector<8x8xf32>
    %cst_108 = arith.constant -5.000000e-01 : f32
    %427 = vector.broadcast %cst_108 : f32 to vector<8x8xf32>
    %428 = arith.mulf %403, %427 : vector<8x8xf32>
    %429 = math.exp %428 : vector<8x8xf32>
    %430 = arith.addf %426, %429 : vector<8x8xf32>
    %cst_109 = arith.constant -1.000000e-01 : f32
    %431 = vector.broadcast %cst_109 : f32 to vector<8x8xf32>
    %432 = arith.mulf %403, %431 : vector<8x8xf32>
    %433 = math.exp %432 : vector<8x8xf32>
    %434 = arith.addf %430, %433 : vector<8x8xf32>
    %cst_110 = arith.constant -5.000000e-02 : f32
    %435 = vector.broadcast %cst_110 : f32 to vector<8x8xf32>
    %436 = arith.mulf %403, %435 : vector<8x8xf32>
    %437 = math.exp %436 : vector<8x8xf32>
    %438 = arith.addf %434, %437 : vector<8x8xf32>
    %cst_111 = arith.constant -0.0333333351 : f32
    %439 = vector.broadcast %cst_111 : f32 to vector<8x8xf32>
    %440 = arith.mulf %403, %439 : vector<8x8xf32>
    %441 = math.exp %440 : vector<8x8xf32>
    %442 = arith.addf %438, %441 : vector<8x8xf32>
    %cst_112 = arith.constant -2.500000e-02 : f32
    %443 = vector.broadcast %cst_112 : f32 to vector<8x8xf32>
    %444 = arith.mulf %403, %443 : vector<8x8xf32>
    %445 = math.exp %444 : vector<8x8xf32>
    %446 = arith.addf %442, %445 : vector<8x8xf32>
    %cst_113 = arith.constant -2.000000e-02 : f32
    %447 = vector.broadcast %cst_113 : f32 to vector<8x8xf32>
    %448 = arith.mulf %403, %447 : vector<8x8xf32>
    %449 = math.exp %448 : vector<8x8xf32>
    %450 = arith.addf %446, %449 : vector<8x8xf32>
    %cst_114 = arith.constant -0.0166666675 : f32
    %451 = vector.broadcast %cst_114 : f32 to vector<8x8xf32>
    %452 = arith.mulf %403, %451 : vector<8x8xf32>
    %453 = math.exp %452 : vector<8x8xf32>
    %454 = arith.addf %450, %453 : vector<8x8xf32>
    %cst_115 = arith.constant -0.0142857144 : f32
    %455 = vector.broadcast %cst_115 : f32 to vector<8x8xf32>
    %456 = arith.mulf %403, %455 : vector<8x8xf32>
    %457 = math.exp %456 : vector<8x8xf32>
    %458 = arith.addf %454, %457 : vector<8x8xf32>
    %cst_116 = arith.constant -5.000000e-03 : f32
    %459 = vector.broadcast %cst_116 : f32 to vector<8x8xf32>
    %460 = arith.mulf %403, %459 : vector<8x8xf32>
    %461 = math.exp %460 : vector<8x8xf32>
    %462 = arith.addf %458, %461 : vector<8x8xf32>
    %cst_117 = arith.constant -5.000000e-04 : f32
    %463 = vector.broadcast %cst_117 : f32 to vector<8x8xf32>
    %464 = arith.mulf %403, %463 : vector<8x8xf32>
    %465 = math.exp %464 : vector<8x8xf32>
    %466 = arith.addf %462, %465 : vector<8x8xf32>
    %cst_118 = arith.constant -5.000000e-05 : f32
    %467 = vector.broadcast %cst_118 : f32 to vector<8x8xf32>
    %468 = arith.mulf %403, %467 : vector<8x8xf32>
    %469 = math.exp %468 : vector<8x8xf32>
    %470 = arith.addf %466, %469 : vector<8x8xf32>
    %cst_119 = arith.constant -5.000000e-06 : f32
    %471 = vector.broadcast %cst_119 : f32 to vector<8x8xf32>
    %472 = arith.mulf %403, %471 : vector<8x8xf32>
    %473 = math.exp %472 : vector<8x8xf32>
    %474 = arith.addf %470, %473 : vector<8x8xf32>
    %cst_120 = arith.constant -5.000000e-07 : f32
    %475 = vector.broadcast %cst_120 : f32 to vector<8x8xf32>
    %476 = arith.mulf %403, %475 : vector<8x8xf32>
    %477 = math.exp %476 : vector<8x8xf32>
    %478 = arith.addf %474, %477 : vector<8x8xf32>
    %479 = vector.shape_cast %478 : vector<8x8xf32> to vector<1x8x8xf32>
    %cst_121 = arith.constant dense<0.000000e+00> : vector<1xf32>
    %480 = vector.multi_reduction <add>, %479, %cst_121 [1, 2] : vector<1x8x8xf32> to vector<1xf32>
    %481 = vector.shape_cast %480 : vector<1xf32> to vector<1x1x1xf32>
    %482 = vector.extract %481[0, 0, 0] : f32 from vector<1x1x1xf32>
    %483 = vector.extract_strided_slice %50 {offsets = [0, 0], sizes = [8, 1], strides = [1, 1]} : vector<8x4xf32> to vector<8x1xf32>
    %484 = vector.extract_strided_slice %53 {offsets = [0, 0], sizes = [1, 8], strides = [1, 1]} : vector<4x8xf32> to vector<1x8xf32>
    %485 = vector.broadcast %483 : vector<8x1xf32> to vector<8x8xf32>
    %486 = vector.broadcast %484 : vector<1x8xf32> to vector<8x8xf32>
    %487 = arith.subf %485, %486 : vector<8x8xf32>
    %488 = arith.mulf %487, %487 : vector<8x8xf32>
    %489 = vector.extract_strided_slice %50 {offsets = [0, 1], sizes = [8, 1], strides = [1, 1]} : vector<8x4xf32> to vector<8x1xf32>
    %490 = vector.extract_strided_slice %53 {offsets = [1, 0], sizes = [1, 8], strides = [1, 1]} : vector<4x8xf32> to vector<1x8xf32>
    %491 = vector.broadcast %489 : vector<8x1xf32> to vector<8x8xf32>
    %492 = vector.broadcast %490 : vector<1x8xf32> to vector<8x8xf32>
    %493 = arith.subf %491, %492 : vector<8x8xf32>
    %494 = arith.mulf %493, %493 : vector<8x8xf32>
    %495 = arith.addf %488, %494 : vector<8x8xf32>
    %496 = vector.extract_strided_slice %50 {offsets = [0, 2], sizes = [8, 1], strides = [1, 1]} : vector<8x4xf32> to vector<8x1xf32>
    %497 = vector.extract_strided_slice %53 {offsets = [2, 0], sizes = [1, 8], strides = [1, 1]} : vector<4x8xf32> to vector<1x8xf32>
    %498 = vector.broadcast %496 : vector<8x1xf32> to vector<8x8xf32>
    %499 = vector.broadcast %497 : vector<1x8xf32> to vector<8x8xf32>
    %500 = arith.subf %498, %499 : vector<8x8xf32>
    %501 = arith.mulf %500, %500 : vector<8x8xf32>
    %502 = arith.addf %495, %501 : vector<8x8xf32>
    %503 = vector.extract_strided_slice %50 {offsets = [0, 3], sizes = [8, 1], strides = [1, 1]} : vector<8x4xf32> to vector<8x1xf32>
    %504 = vector.extract_strided_slice %53 {offsets = [3, 0], sizes = [1, 8], strides = [1, 1]} : vector<4x8xf32> to vector<1x8xf32>
    %505 = vector.broadcast %503 : vector<8x1xf32> to vector<8x8xf32>
    %506 = vector.broadcast %504 : vector<1x8xf32> to vector<8x8xf32>
    %507 = arith.subf %505, %506 : vector<8x8xf32>
    %508 = arith.mulf %507, %507 : vector<8x8xf32>
    %509 = arith.addf %502, %508 : vector<8x8xf32>
    %cst_122 = arith.constant -5.000000e+05 : f32
    %510 = vector.broadcast %cst_122 : f32 to vector<8x8xf32>
    %511 = arith.mulf %509, %510 : vector<8x8xf32>
    %512 = math.exp %511 : vector<8x8xf32>
    %cst_123 = arith.constant -5.000000e+04 : f32
    %513 = vector.broadcast %cst_123 : f32 to vector<8x8xf32>
    %514 = arith.mulf %509, %513 : vector<8x8xf32>
    %515 = math.exp %514 : vector<8x8xf32>
    %516 = arith.addf %512, %515 : vector<8x8xf32>
    %cst_124 = arith.constant -5.000000e+03 : f32
    %517 = vector.broadcast %cst_124 : f32 to vector<8x8xf32>
    %518 = arith.mulf %509, %517 : vector<8x8xf32>
    %519 = math.exp %518 : vector<8x8xf32>
    %520 = arith.addf %516, %519 : vector<8x8xf32>
    %cst_125 = arith.constant -5.000000e+02 : f32
    %521 = vector.broadcast %cst_125 : f32 to vector<8x8xf32>
    %522 = arith.mulf %509, %521 : vector<8x8xf32>
    %523 = math.exp %522 : vector<8x8xf32>
    %524 = arith.addf %520, %523 : vector<8x8xf32>
    %cst_126 = arith.constant -5.000000e+01 : f32
    %525 = vector.broadcast %cst_126 : f32 to vector<8x8xf32>
    %526 = arith.mulf %509, %525 : vector<8x8xf32>
    %527 = math.exp %526 : vector<8x8xf32>
    %528 = arith.addf %524, %527 : vector<8x8xf32>
    %cst_127 = arith.constant -5.000000e+00 : f32
    %529 = vector.broadcast %cst_127 : f32 to vector<8x8xf32>
    %530 = arith.mulf %509, %529 : vector<8x8xf32>
    %531 = math.exp %530 : vector<8x8xf32>
    %532 = arith.addf %528, %531 : vector<8x8xf32>
    %cst_128 = arith.constant -5.000000e-01 : f32
    %533 = vector.broadcast %cst_128 : f32 to vector<8x8xf32>
    %534 = arith.mulf %509, %533 : vector<8x8xf32>
    %535 = math.exp %534 : vector<8x8xf32>
    %536 = arith.addf %532, %535 : vector<8x8xf32>
    %cst_129 = arith.constant -1.000000e-01 : f32
    %537 = vector.broadcast %cst_129 : f32 to vector<8x8xf32>
    %538 = arith.mulf %509, %537 : vector<8x8xf32>
    %539 = math.exp %538 : vector<8x8xf32>
    %540 = arith.addf %536, %539 : vector<8x8xf32>
    %cst_130 = arith.constant -5.000000e-02 : f32
    %541 = vector.broadcast %cst_130 : f32 to vector<8x8xf32>
    %542 = arith.mulf %509, %541 : vector<8x8xf32>
    %543 = math.exp %542 : vector<8x8xf32>
    %544 = arith.addf %540, %543 : vector<8x8xf32>
    %cst_131 = arith.constant -0.0333333351 : f32
    %545 = vector.broadcast %cst_131 : f32 to vector<8x8xf32>
    %546 = arith.mulf %509, %545 : vector<8x8xf32>
    %547 = math.exp %546 : vector<8x8xf32>
    %548 = arith.addf %544, %547 : vector<8x8xf32>
    %cst_132 = arith.constant -2.500000e-02 : f32
    %549 = vector.broadcast %cst_132 : f32 to vector<8x8xf32>
    %550 = arith.mulf %509, %549 : vector<8x8xf32>
    %551 = math.exp %550 : vector<8x8xf32>
    %552 = arith.addf %548, %551 : vector<8x8xf32>
    %cst_133 = arith.constant -2.000000e-02 : f32
    %553 = vector.broadcast %cst_133 : f32 to vector<8x8xf32>
    %554 = arith.mulf %509, %553 : vector<8x8xf32>
    %555 = math.exp %554 : vector<8x8xf32>
    %556 = arith.addf %552, %555 : vector<8x8xf32>
    %cst_134 = arith.constant -0.0166666675 : f32
    %557 = vector.broadcast %cst_134 : f32 to vector<8x8xf32>
    %558 = arith.mulf %509, %557 : vector<8x8xf32>
    %559 = math.exp %558 : vector<8x8xf32>
    %560 = arith.addf %556, %559 : vector<8x8xf32>
    %cst_135 = arith.constant -0.0142857144 : f32
    %561 = vector.broadcast %cst_135 : f32 to vector<8x8xf32>
    %562 = arith.mulf %509, %561 : vector<8x8xf32>
    %563 = math.exp %562 : vector<8x8xf32>
    %564 = arith.addf %560, %563 : vector<8x8xf32>
    %cst_136 = arith.constant -5.000000e-03 : f32
    %565 = vector.broadcast %cst_136 : f32 to vector<8x8xf32>
    %566 = arith.mulf %509, %565 : vector<8x8xf32>
    %567 = math.exp %566 : vector<8x8xf32>
    %568 = arith.addf %564, %567 : vector<8x8xf32>
    %cst_137 = arith.constant -5.000000e-04 : f32
    %569 = vector.broadcast %cst_137 : f32 to vector<8x8xf32>
    %570 = arith.mulf %509, %569 : vector<8x8xf32>
    %571 = math.exp %570 : vector<8x8xf32>
    %572 = arith.addf %568, %571 : vector<8x8xf32>
    %cst_138 = arith.constant -5.000000e-05 : f32
    %573 = vector.broadcast %cst_138 : f32 to vector<8x8xf32>
    %574 = arith.mulf %509, %573 : vector<8x8xf32>
    %575 = math.exp %574 : vector<8x8xf32>
    %576 = arith.addf %572, %575 : vector<8x8xf32>
    %cst_139 = arith.constant -5.000000e-06 : f32
    %577 = vector.broadcast %cst_139 : f32 to vector<8x8xf32>
    %578 = arith.mulf %509, %577 : vector<8x8xf32>
    %579 = math.exp %578 : vector<8x8xf32>
    %580 = arith.addf %576, %579 : vector<8x8xf32>
    %cst_140 = arith.constant -5.000000e-07 : f32
    %581 = vector.broadcast %cst_140 : f32 to vector<8x8xf32>
    %582 = arith.mulf %509, %581 : vector<8x8xf32>
    %583 = math.exp %582 : vector<8x8xf32>
    %584 = arith.addf %580, %583 : vector<8x8xf32>
    %585 = vector.shape_cast %584 : vector<8x8xf32> to vector<1x8x8xf32>
    %cst_141 = arith.constant dense<0.000000e+00> : vector<1xf32>
    %586 = vector.multi_reduction <add>, %585, %cst_141 [1, 2] : vector<1x8x8xf32> to vector<1xf32>
    %587 = vector.shape_cast %586 : vector<1xf32> to vector<1x1x1xf32>
    %588 = vector.extract %587[0, 0, 0] : f32 from vector<1x1x1xf32>
    %589 = vector.extract_strided_slice %44 {offsets = [0, 0], sizes = [8, 1], strides = [1, 1]} : vector<8x4xf32> to vector<8x1xf32>
    %590 = vector.extract_strided_slice %53 {offsets = [0, 0], sizes = [1, 8], strides = [1, 1]} : vector<4x8xf32> to vector<1x8xf32>
    %591 = vector.broadcast %589 : vector<8x1xf32> to vector<8x8xf32>
    %592 = vector.broadcast %590 : vector<1x8xf32> to vector<8x8xf32>
    %593 = arith.subf %591, %592 : vector<8x8xf32>
    %594 = arith.mulf %593, %593 : vector<8x8xf32>
    %595 = vector.extract_strided_slice %44 {offsets = [0, 1], sizes = [8, 1], strides = [1, 1]} : vector<8x4xf32> to vector<8x1xf32>
    %596 = vector.extract_strided_slice %53 {offsets = [1, 0], sizes = [1, 8], strides = [1, 1]} : vector<4x8xf32> to vector<1x8xf32>
    %597 = vector.broadcast %595 : vector<8x1xf32> to vector<8x8xf32>
    %598 = vector.broadcast %596 : vector<1x8xf32> to vector<8x8xf32>
    %599 = arith.subf %597, %598 : vector<8x8xf32>
    %600 = arith.mulf %599, %599 : vector<8x8xf32>
    %601 = arith.addf %594, %600 : vector<8x8xf32>
    %602 = vector.extract_strided_slice %44 {offsets = [0, 2], sizes = [8, 1], strides = [1, 1]} : vector<8x4xf32> to vector<8x1xf32>
    %603 = vector.extract_strided_slice %53 {offsets = [2, 0], sizes = [1, 8], strides = [1, 1]} : vector<4x8xf32> to vector<1x8xf32>
    %604 = vector.broadcast %602 : vector<8x1xf32> to vector<8x8xf32>
    %605 = vector.broadcast %603 : vector<1x8xf32> to vector<8x8xf32>
    %606 = arith.subf %604, %605 : vector<8x8xf32>
    %607 = arith.mulf %606, %606 : vector<8x8xf32>
    %608 = arith.addf %601, %607 : vector<8x8xf32>
    %609 = vector.extract_strided_slice %44 {offsets = [0, 3], sizes = [8, 1], strides = [1, 1]} : vector<8x4xf32> to vector<8x1xf32>
    %610 = vector.extract_strided_slice %53 {offsets = [3, 0], sizes = [1, 8], strides = [1, 1]} : vector<4x8xf32> to vector<1x8xf32>
    %611 = vector.broadcast %609 : vector<8x1xf32> to vector<8x8xf32>
    %612 = vector.broadcast %610 : vector<1x8xf32> to vector<8x8xf32>
    %613 = arith.subf %611, %612 : vector<8x8xf32>
    %614 = arith.mulf %613, %613 : vector<8x8xf32>
    %615 = arith.addf %608, %614 : vector<8x8xf32>
    %cst_142 = arith.constant -5.000000e+05 : f32
    %616 = vector.broadcast %cst_142 : f32 to vector<8x8xf32>
    %617 = arith.mulf %615, %616 : vector<8x8xf32>
    %618 = math.exp %617 : vector<8x8xf32>
    %cst_143 = arith.constant -5.000000e+04 : f32
    %619 = vector.broadcast %cst_143 : f32 to vector<8x8xf32>
    %620 = arith.mulf %615, %619 : vector<8x8xf32>
    %621 = math.exp %620 : vector<8x8xf32>
    %622 = arith.addf %618, %621 : vector<8x8xf32>
    %cst_144 = arith.constant -5.000000e+03 : f32
    %623 = vector.broadcast %cst_144 : f32 to vector<8x8xf32>
    %624 = arith.mulf %615, %623 : vector<8x8xf32>
    %625 = math.exp %624 : vector<8x8xf32>
    %626 = arith.addf %622, %625 : vector<8x8xf32>
    %cst_145 = arith.constant -5.000000e+02 : f32
    %627 = vector.broadcast %cst_145 : f32 to vector<8x8xf32>
    %628 = arith.mulf %615, %627 : vector<8x8xf32>
    %629 = math.exp %628 : vector<8x8xf32>
    %630 = arith.addf %626, %629 : vector<8x8xf32>
    %cst_146 = arith.constant -5.000000e+01 : f32
    %631 = vector.broadcast %cst_146 : f32 to vector<8x8xf32>
    %632 = arith.mulf %615, %631 : vector<8x8xf32>
    %633 = math.exp %632 : vector<8x8xf32>
    %634 = arith.addf %630, %633 : vector<8x8xf32>
    %cst_147 = arith.constant -5.000000e+00 : f32
    %635 = vector.broadcast %cst_147 : f32 to vector<8x8xf32>
    %636 = arith.mulf %615, %635 : vector<8x8xf32>
    %637 = math.exp %636 : vector<8x8xf32>
    %638 = arith.addf %634, %637 : vector<8x8xf32>
    %cst_148 = arith.constant -5.000000e-01 : f32
    %639 = vector.broadcast %cst_148 : f32 to vector<8x8xf32>
    %640 = arith.mulf %615, %639 : vector<8x8xf32>
    %641 = math.exp %640 : vector<8x8xf32>
    %642 = arith.addf %638, %641 : vector<8x8xf32>
    %cst_149 = arith.constant -1.000000e-01 : f32
    %643 = vector.broadcast %cst_149 : f32 to vector<8x8xf32>
    %644 = arith.mulf %615, %643 : vector<8x8xf32>
    %645 = math.exp %644 : vector<8x8xf32>
    %646 = arith.addf %642, %645 : vector<8x8xf32>
    %cst_150 = arith.constant -5.000000e-02 : f32
    %647 = vector.broadcast %cst_150 : f32 to vector<8x8xf32>
    %648 = arith.mulf %615, %647 : vector<8x8xf32>
    %649 = math.exp %648 : vector<8x8xf32>
    %650 = arith.addf %646, %649 : vector<8x8xf32>
    %cst_151 = arith.constant -0.0333333351 : f32
    %651 = vector.broadcast %cst_151 : f32 to vector<8x8xf32>
    %652 = arith.mulf %615, %651 : vector<8x8xf32>
    %653 = math.exp %652 : vector<8x8xf32>
    %654 = arith.addf %650, %653 : vector<8x8xf32>
    %cst_152 = arith.constant -2.500000e-02 : f32
    %655 = vector.broadcast %cst_152 : f32 to vector<8x8xf32>
    %656 = arith.mulf %615, %655 : vector<8x8xf32>
    %657 = math.exp %656 : vector<8x8xf32>
    %658 = arith.addf %654, %657 : vector<8x8xf32>
    %cst_153 = arith.constant -2.000000e-02 : f32
    %659 = vector.broadcast %cst_153 : f32 to vector<8x8xf32>
    %660 = arith.mulf %615, %659 : vector<8x8xf32>
    %661 = math.exp %660 : vector<8x8xf32>
    %662 = arith.addf %658, %661 : vector<8x8xf32>
    %cst_154 = arith.constant -0.0166666675 : f32
    %663 = vector.broadcast %cst_154 : f32 to vector<8x8xf32>
    %664 = arith.mulf %615, %663 : vector<8x8xf32>
    %665 = math.exp %664 : vector<8x8xf32>
    %666 = arith.addf %662, %665 : vector<8x8xf32>
    %cst_155 = arith.constant -0.0142857144 : f32
    %667 = vector.broadcast %cst_155 : f32 to vector<8x8xf32>
    %668 = arith.mulf %615, %667 : vector<8x8xf32>
    %669 = math.exp %668 : vector<8x8xf32>
    %670 = arith.addf %666, %669 : vector<8x8xf32>
    %cst_156 = arith.constant -5.000000e-03 : f32
    %671 = vector.broadcast %cst_156 : f32 to vector<8x8xf32>
    %672 = arith.mulf %615, %671 : vector<8x8xf32>
    %673 = math.exp %672 : vector<8x8xf32>
    %674 = arith.addf %670, %673 : vector<8x8xf32>
    %cst_157 = arith.constant -5.000000e-04 : f32
    %675 = vector.broadcast %cst_157 : f32 to vector<8x8xf32>
    %676 = arith.mulf %615, %675 : vector<8x8xf32>
    %677 = math.exp %676 : vector<8x8xf32>
    %678 = arith.addf %674, %677 : vector<8x8xf32>
    %cst_158 = arith.constant -5.000000e-05 : f32
    %679 = vector.broadcast %cst_158 : f32 to vector<8x8xf32>
    %680 = arith.mulf %615, %679 : vector<8x8xf32>
    %681 = math.exp %680 : vector<8x8xf32>
    %682 = arith.addf %678, %681 : vector<8x8xf32>
    %cst_159 = arith.constant -5.000000e-06 : f32
    %683 = vector.broadcast %cst_159 : f32 to vector<8x8xf32>
    %684 = arith.mulf %615, %683 : vector<8x8xf32>
    %685 = math.exp %684 : vector<8x8xf32>
    %686 = arith.addf %682, %685 : vector<8x8xf32>
    %cst_160 = arith.constant -5.000000e-07 : f32
    %687 = vector.broadcast %cst_160 : f32 to vector<8x8xf32>
    %688 = arith.mulf %615, %687 : vector<8x8xf32>
    %689 = math.exp %688 : vector<8x8xf32>
    %690 = arith.addf %686, %689 : vector<8x8xf32>
    %691 = vector.shape_cast %690 : vector<8x8xf32> to vector<1x8x8xf32>
    %cst_161 = arith.constant dense<0.000000e+00> : vector<1xf32>
    %692 = vector.multi_reduction <add>, %691, %cst_161 [1, 2] : vector<1x8x8xf32> to vector<1xf32>
    %693 = vector.shape_cast %692 : vector<1xf32> to vector<1x1x1xf32>
    %694 = vector.extract %693[0, 0, 0] : f32 from vector<1x1x1xf32>
    %695 = arith.addf %482, %588 : f32
    %cst_162 = arith.constant 2.000000e+00 : f32
    %696 = arith.mulf %cst_162, %694 : f32
    %697 = arith.subf %695, %696 : f32
    %cst_163 = arith.constant 6.400000e+01 : f32
    %698 = arith.divf %697, %cst_163 : f32
    %c1 = arith.constant 1 : index
    %699 = memref.load %arg9[%c1] : memref<2xf32, #tpu.memory_space<smem>>
    memref.store %698, %arg9[%c1] : memref<2xf32, #tpu.memory_space<smem>>
    return
  }
}

</mosaic_0001>

<llo_original>
// kernel: tpu_custom_call.1
$region0: #{tpu_custom_call.1}
  #allocation0 [shape = 'u32[]', space=smem, size = 0x4, offset = 0x4, fixed_abs, tag = 'smem constant byte address 0x4 - core index']
  #allocation1 [shape = 'u32[144,128]{1,0:T(1,128)}', space=vmem, size = 0x12000, scoped, tag = 'internal scratch']
  %s0 = inlined_call_operand.vmem [shape: f32[8,32], index: 0, kind: input, shape index: {}]
  %s1 = inlined_call_operand.hbm [shape: f32[8,32], index: 1, kind: input, shape index: {}]
  %s2 = inlined_call_operand.hbm [shape: f32[8,8], index: 2, kind: input, shape index: {}]
  %s3 = inlined_call_operand.vmem [shape: f32[8,8], index: 3, kind: input, shape index: {}]
  %s4 = inlined_call_operand.hbm [shape: f32[8,8], index: 4, kind: input, shape index: {}]
  %s5 = inlined_call_operand.hbm [shape: f32[8,8], index: 5, kind: input, shape index: {}]
  %s6 = inlined_call_operand.hbm [shape: f32[8,8], index: 6, kind: input, shape index: {}]
  %s7 = inlined_call_operand.vmem [shape: f32[8,4], index: 7, kind: input, shape index: {}]
  %s8 = inlined_call_operand.vmem [shape: f32[4,8], index: 8, kind: input, shape index: {}]
  %s9 = inlined_call_operand.hbm [shape: f32[2], index: 9, kind: output, shape index: {}]
  %s10 = sld [smem:[#allocation0]]
  $region66: #{tpu_custom_call.1} parent=0
    _
  %s12 = ssub.s32 1, %s10
  %s13 = scalar_select 0, %s12, %s10
  $region1: #{tpu_custom_call.1} parent=0
    #allocation2 [shape = 'u8[4096]{0}', space=vmem, size = 0x1000, scoped, tag = 'input window, operand 1, single buffered']
    #allocation3 [shape = 's32[1]{0}', space=sflag, size = 0x4, scoped, tag = 'scoped memory for tpu_custom_call.1']
    #allocation4 [shape = 's32[1]{0}', space=sflag, size = 0x4, scoped, tag = 'scoped memory for tpu_custom_call.1']
    #allocation5 [shape = 'u8[4096]{0}', space=vmem, size = 0x1000, scoped, tag = 'input window, operand 2, single buffered']
    #allocation6 [shape = 's32[1]{0}', space=sflag, size = 0x4, scoped, tag = 'scoped memory for tpu_custom_call.1']
    #allocation7 [shape = 'u8[4096]{0}', space=vmem, size = 0x1000, scoped, tag = 'input window, operand 4, single buffered']
    #allocation8 [shape = 'u8[4096]{0}', space=vmem, size = 0x1000, scoped, tag = 'input window, operand 5, single buffered']
    #allocation9 [shape = 's32[1]{0}', space=sflag, size = 0x4, scoped, tag = 'scoped memory for tpu_custom_call.1']
    #allocation10 [shape = 'u8[4096]{0}', space=vmem, size = 0x1000, scoped, tag = 'input window, operand 6, single buffered']
    #allocation11 [shape = 'u8[512]{0}', space=smem, size = 0x200, scoped, tag = 'output window, operand 0, single buffered']
    %14 = vsyncpa [#allocation3], 0
    %15 = vsyncpa [#allocation6], 0
    %16 = vsyncpa [#allocation9], 0
    %17 = vsyncpa [#allocation4], 0
    // Predicated region
    $region2: #{tpu_custom_call.1} parent=1 // pred_check
      _
    $region3: #{tpu_custom_call.1} parent=1 // pred_check_branch
      %19 = sbr.rel (0) target = $region5
    $region4: #{tpu_custom_call.1} parent=1 // pred_region
      _
    $region5: #{tpu_custom_call.1} parent=1 // pred_fallthru
      _
    // Predicated region
    $region6: #{tpu_custom_call.1} parent=1 // pred_check
      _
    $region7: #{tpu_custom_call.1} parent=1 // pred_check_branch
      %21 = sbr.rel (0) target = $region9
    $region8: #{tpu_custom_call.1} parent=1 // pred_region
      %s23 = ssub.s32 128, 128
      %24 = vsyncadd [#allocation3], %s23
      %s26 = sshll.u32 [#allocation2], 4
      %s27 = int_to_ptr.vmem [resolvable:$true] %s26
      %29 = dma.hbm_to_vmem [thread:$0]  %s1, 128, %s27, [#allocation3]
    $region9: #{tpu_custom_call.1} parent=1 // pred_fallthru
      _
    // Predicated region
    $region10: #{tpu_custom_call.1} parent=1 // pred_check
      _
    $region11: #{tpu_custom_call.1} parent=1 // pred_check_branch
      %31 = sbr.rel (0) target = $region13
    $region12: #{tpu_custom_call.1} parent=1 // pred_region
      %s33 = ssub.s32 128, 128
      %34 = vsyncadd [#allocation6], %s33
      %s36 = sshll.u32 [#allocation5], 4
      %s37 = int_to_ptr.vmem [resolvable:$true] %s36
      %39 = dma.hbm_to_vmem [thread:$0]  %s2, 128, %s37, [#allocation6]
    $region13: #{tpu_custom_call.1} parent=1 // pred_fallthru
      _
    // Predicated region
    $region14: #{tpu_custom_call.1} parent=1 // pred_check
      _
    $region15: #{tpu_custom_call.1} parent=1 // pred_check_branch
      %41 = sbr.rel (0) target = $region17
    $region16: #{tpu_custom_call.1} parent=1 // pred_region
      _
    $region17: #{tpu_custom_call.1} parent=1 // pred_fallthru
      _
    // Predicated region
    $region18: #{tpu_custom_call.1} parent=1 // pred_check
      _
    $region19: #{tpu_custom_call.1} parent=1 // pred_check_branch
      %43 = sbr.rel (0) target = $region21
    $region20: #{tpu_custom_call.1} parent=1 // pred_region
      %s45 = ssub.s32 128, 128
      %46 = vsyncadd [#allocation6], %s45
      %s48 = sshll.u32 [#allocation7], 4
      %s49 = int_to_ptr.vmem [resolvable:$true] %s48
      %51 = dma.hbm_to_vmem [thread:$0]  %s4, 128, %s49, [#allocation6]
    $region21: #{tpu_custom_call.1} parent=1 // pred_fallthru
      _
    // Predicated region
    $region22: #{tpu_custom_call.1} parent=1 // pred_check
      _
    $region23: #{tpu_custom_call.1} parent=1 // pred_check_branch
      %53 = sbr.rel (0) target = $region25
    $region24: #{tpu_custom_call.1} parent=1 // pred_region
      %s55 = ssub.s32 128, 128
      %56 = vsyncadd [#allocation9], %s55
      %s58 = sshll.u32 [#allocation8], 4
      %s59 = int_to_ptr.vmem [resolvable:$true] %s58
      %61 = dma.hbm_to_vmem [thread:$0]  %s5, 128, %s59, [#allocation9]
    $region25: #{tpu_custom_call.1} parent=1 // pred_fallthru
      _
    // Predicated region
    $region26: #{tpu_custom_call.1} parent=1 // pred_check
      _
    $region27: #{tpu_custom_call.1} parent=1 // pred_check_branch
      %63 = sbr.rel (0) target = $region29
    $region28: #{tpu_custom_call.1} parent=1 // pred_region
      %s65 = ssub.s32 128, 128
      %66 = vsyncadd [#allocation9], %s65
      %s68 = sshll.u32 [#allocation10], 4
      %s69 = int_to_ptr.vmem [resolvable:$true] %s68
      %71 = dma.hbm_to_vmem [thread:$0]  %s6, 128, %s69, [#allocation9]
    $region29: #{tpu_custom_call.1} parent=1 // pred_fallthru
      _
    // Predicated region
    $region30: #{tpu_custom_call.1} parent=1 // pred_check
      _
    $region31: #{tpu_custom_call.1} parent=1 // pred_check_branch
      %73 = sbr.rel (0) target = $region33
    $region32: #{tpu_custom_call.1} parent=1 // pred_region
      _
    $region33: #{tpu_custom_call.1} parent=1 // pred_fallthru
      _
    // Predicated region
    $region34: #{tpu_custom_call.1} parent=1 // pred_check
      _
    $region35: #{tpu_custom_call.1} parent=1 // pred_check_branch
      %75 = sbr.rel (0) target = $region37
    $region36: #{tpu_custom_call.1} parent=1 // pred_region
      _
    $region37: #{tpu_custom_call.1} parent=1 // pred_fallthru
      _
    // Predicated region
    $region38: #{tpu_custom_call.1} parent=1 // pred_check
      _
    $region39: #{tpu_custom_call.1} parent=1 // pred_check_branch
      %77 = sbr.rel (0) target = $region41
    $region40: #{tpu_custom_call.1} parent=1 // pred_region
      %78 = dma.done [#allocation3], 128
    $region41: #{tpu_custom_call.1} parent=1 // pred_fallthru
      _
    // Predicated region
    $region42: #{tpu_custom_call.1} parent=1 // pred_check
      _
    $region43: #{tpu_custom_call.1} parent=1 // pred_check_branch
      %80 = sbr.rel (0) target = $region45
    $region44: #{tpu_custom_call.1} parent=1 // pred_region
      %81 = dma.done [#allocation6], 128
    $region45: #{tpu_custom_call.1} parent=1 // pred_fallthru
      _
    // Predicated region
    $region46: #{tpu_custom_call.1} parent=1 // pred_check
      _
    $region47: #{tpu_custom_call.1} parent=1 // pred_check_branch
      %83 = sbr.rel (0) target = $region49
    $region48: #{tpu_custom_call.1} parent=1 // pred_region
      %84 = dma.done [#allocation6], 128
    $region49: #{tpu_custom_call.1} parent=1 // pred_fallthru
      _
    // Predicated region
    $region50: #{tpu_custom_call.1} parent=1 // pred_check
      _
    $region51: #{tpu_custom_call.1} parent=1 // pred_check_branch
      %86 = sbr.rel (0) target = $region53
    $region52: #{tpu_custom_call.1} parent=1 // pred_region
      %87 = dma.done [#allocation9], 128
    $region53: #{tpu_custom_call.1} parent=1 // pred_fallthru
      _
    // Predicated region
    $region54: #{tpu_custom_call.1} parent=1 // pred_check
      _
    $region55: #{tpu_custom_call.1} parent=1 // pred_check_branch
      %89 = sbr.rel (0) target = $region57
    $region56: #{tpu_custom_call.1} parent=1 // pred_region
      %90 = dma.done [#allocation9], 128
    $region57: #{tpu_custom_call.1} parent=1 // pred_fallthru
      _
    %v91 = vld [vmem:[%s0] sm:$0xff]
    %v92 = vld [vmem:[#allocation2] sm:$0xff]
    %v93 = vmul.f32 %v91, %v91
    %vm94 = vcmask 261120
    %v95 = vsel %vm94, %v93, 0.0
    %96 = vadd.xlane.f32.xlu0 %v95
    %v97 = vpop.xlane.xlu0 %96
    %v99 = vsel %vm94, 1.0, 0
    %v102 = vsel %vm94, %v93, 0
    %104 = vmatprep.subr.mxu0 0.0
    %105 = vmatpush1.xpose.msra.mxu0 0.0
    %106 = vmatprep.subr.mxu0 0.0
    %107 = vmatpush1.xpose.msra.mxu0 0.0
    %108 = vmatprep.subr.mxu0 0.0
    %109 = vmatpush1.xpose.msra.mxu0 0.0
    %110 = vmatprep.subr.mxu0 0.0
    %111 = vmatpush1.xpose.msra.mxu0 0.0
    %112 = vmatprep.subr.mxu0 0.0
    %113 = vmatpush1.xpose.msra.mxu0 0.0
    %114 = vmatprep.subr.mxu0 0.0
    %115 = vmatpush1.xpose.msra.mxu0 0.0
    %116 = vmatprep.subr.mxu0 0.0
    %117 = vmatpush1.xpose.msra.mxu0 0.0
    %118 = vmatprep.subr.mxu0 0.0
    %119 = vmatpush1.xpose.msra.mxu0 0.0
    %120 = vmatprep.subr.mxu0 0.0
    %121 = vmatpush1.xpose.msra.mxu0 0.0
    %122 = vmatprep.subr.mxu0 0.0
    %123 = vmatpush1.xpose.msra.mxu0 0.0
    %124 = vmatprep.subr.mxu0 0.0
    %125 = vmatpush1.xpose.msra.mxu0 0.0
    %126 = vmatprep.subr.mxu0 0.0
    %127 = vmatpush1.xpose.msra.mxu0 0.0
    %128 = vmatprep.subr.mxu0 0.0
    %129 = vmatpush1.xpose.msra.mxu0 0.0
    %130 = vmatprep.subr.mxu0 0.0
    %131 = vmatpush1.xpose.msra.mxu0 0.0
    %132 = vmatprep.subr.mxu0 0.0
    %133 = vmatpush1.xpose.msra.mxu0 0.0
    %134 = vmatprep.subr.mxu0 0.0
    %135 = vmatpush1.xpose.msra.mxu0 %v102
    %136 = vmatprep.subr.mxu0 0.0
    %137 = vmatpush2.xpose.msra.mxu0 0.0
    %138 = vmatprep.subr.mxu0 0.0
    %139 = vmatpush2.xpose.msra.mxu0 0.0
    %140 = vmatprep.subr.mxu0 0.0
    %141 = vmatpush2.xpose.msra.mxu0 0.0
    %142 = vmatprep.subr.mxu0 0.0
    %143 = vmatpush2.xpose.msra.mxu0 0.0
    %144 = vmatprep.subr.mxu0 0.0
    %145 = vmatpush2.xpose.msra.mxu0 0.0
    %146 = vmatprep.subr.mxu0 0.0
    %147 = vmatpush2.xpose.msra.mxu0 0.0
    %148 = vmatprep.subr.mxu0 0.0
    %149 = vmatpush2.xpose.msra.mxu0 0.0
    %150 = vmatprep.subr.mxu0 0.0
    %151 = vmatpush2.xpose.msra.mxu0 0.0
    %152 = vmatprep.subr.mxu0 0.0
    %153 = vmatpush2.xpose.msra.mxu0 0.0
    %154 = vmatprep.subr.mxu0 0.0
    %155 = vmatpush2.xpose.msra.mxu0 0.0
    %156 = vmatprep.subr.mxu0 0.0
    %157 = vmatpush2.xpose.msra.mxu0 0.0
    %158 = vmatprep.subr.mxu0 0.0
    %159 = vmatpush2.xpose.msra.mxu0 0.0
    %160 = vmatprep.subr.mxu0 0.0
    %161 = vmatpush2.xpose.msra.mxu0 0.0
    %162 = vmatprep.subr.mxu0 0.0
    %163 = vmatpush2.xpose.msra.mxu0 0.0
    %164 = vmatprep.subr.mxu0 0.0
    %165 = vmatpush2.xpose.msra.mxu0 0.0
    %166 = vmatprep.subr.mxu0 0.0
    %167 = vmatpush2.xpose.msra.mxu0 0.0
    %168 = vmatprep.mubr.f32.mxu0 0.0
    %169 = vmatmul.mubr.f32.gmra.mxu0 %v99
    %v170 = vpop.f32.mrf.mxu0
    %v171 = vadd.f32 0.0, %v170
    %v172 = vpop.f32.mrf.mxu0
    %173 = vdwg.mxu0
    %v174 = vmul.f32 %v92, %v92
    %v175 = vsel %vm94, %v174, 0.0
    %176 = vadd.xlane.f32.xlu0 %v175
    %v177 = vpop.xlane.xlu0 %176
    %v179 = vsel %vm94, %v174, 0
    %181 = vmatprep.subr.mxu0 0.0
    %182 = vmatpush1.xpose.msra.mxu0 0.0
    %183 = vmatprep.subr.mxu0 0.0
    %184 = vmatpush1.xpose.msra.mxu0 0.0
    %185 = vmatprep.subr.mxu0 0.0
    %186 = vmatpush1.xpose.msra.mxu0 0.0
    %187 = vmatprep.subr.mxu0 0.0
    %188 = vmatpush1.xpose.msra.mxu0 0.0
    %189 = vmatprep.subr.mxu0 0.0
    %190 = vmatpush1.xpose.msra.mxu0 0.0
    %191 = vmatprep.subr.mxu0 0.0
    %192 = vmatpush1.xpose.msra.mxu0 0.0
    %193 = vmatprep.subr.mxu0 0.0
    %194 = vmatpush1.xpose.msra.mxu0 0.0
    %195 = vmatprep.subr.mxu0 0.0
    %196 = vmatpush1.xpose.msra.mxu0 0.0
    %197 = vmatprep.subr.mxu0 0.0
    %198 = vmatpush1.xpose.msra.mxu0 0.0
    %199 = vmatprep.subr.mxu0 0.0
    %200 = vmatpush1.xpose.msra.mxu0 0.0
    %201 = vmatprep.subr.mxu0 0.0
    %202 = vmatpush1.xpose.msra.mxu0 0.0
    %203 = vmatprep.subr.mxu0 0.0
    %204 = vmatpush1.xpose.msra.mxu0 0.0
    %205 = vmatprep.subr.mxu0 0.0
    %206 = vmatpush1.xpose.msra.mxu0 0.0
    %207 = vmatprep.subr.mxu0 0.0
    %208 = vmatpush1.xpose.msra.mxu0 0.0
    %209 = vmatprep.subr.mxu0 0.0
    %210 = vmatpush1.xpose.msra.mxu0 0.0
    %211 = vmatprep.subr.mxu0 0.0
    %212 = vmatpush1.xpose.msra.mxu0 %v179
    %213 = vmatprep.subr.mxu0 0.0
    %214 = vmatpush2.xpose.msra.mxu0 0.0
    %215 = vmatprep.subr.mxu0 0.0
    %216 = vmatpush2.xpose.msra.mxu0 0.0
    %217 = vmatprep.subr.mxu0 0.0
    %218 = vmatpush2.xpose.msra.mxu0 0.0
    %219 = vmatprep.subr.mxu0 0.0
    %220 = vmatpush2.xpose.msra.mxu0 0.0
    %221 = vmatprep.subr.mxu0 0.0
    %222 = vmatpush2.xpose.msra.mxu0 0.0
    %223 = vmatprep.subr.mxu0 0.0
    %224 = vmatpush2.xpose.msra.mxu0 0.0
    %225 = vmatprep.subr.mxu0 0.0
    %226 = vmatpush2.xpose.msra.mxu0 0.0
    %227 = vmatprep.subr.mxu0 0.0
    %228 = vmatpush2.xpose.msra.mxu0 0.0
    %229 = vmatprep.subr.mxu0 0.0
    %230 = vmatpush2.xpose.msra.mxu0 0.0
    %231 = vmatprep.subr.mxu0 0.0
    %232 = vmatpush2.xpose.msra.mxu0 0.0
    %233 = vmatprep.subr.mxu0 0.0
    %234 = vmatpush2.xpose.msra.mxu0 0.0
    %235 = vmatprep.subr.mxu0 0.0
    %236 = vmatpush2.xpose.msra.mxu0 0.0
    %237 = vmatprep.subr.mxu0 0.0
    %238 = vmatpush2.xpose.msra.mxu0 0.0
    %239 = vmatprep.subr.mxu0 0.0
    %240 = vmatpush2.xpose.msra.mxu0 0.0
    %241 = vmatprep.subr.mxu0 0.0
    %242 = vmatpush2.xpose.msra.mxu0 0.0
    %243 = vmatprep.subr.mxu0 0.0
    %244 = vmatpush2.xpose.msra.mxu0 0.0
    %245 = vmatprep.mubr.f32.mxu0 0.0
    %246 = vmatmul.mubr.f32.gmra.mxu0 %v99
    %v247 = vpop.f32.mrf.mxu0
    %v248 = vadd.f32 0.0, %v247
    %v249 = vpop.f32.mrf.mxu0
    %250 = vdwg.mxu0
    %v252 = vsel %vm94, %v91, 0
    %254 = vmatprep.subr.mxu0 0.0
    %255 = vmatpush1.xpose.msra.mxu0 0.0
    %256 = vmatprep.subr.mxu0 0.0
    %257 = vmatpush1.xpose.msra.mxu0 0.0
    %258 = vmatprep.subr.mxu0 0.0
    %259 = vmatpush1.xpose.msra.mxu0 0.0
    %260 = vmatprep.subr.mxu0 0.0
    %261 = vmatpush1.xpose.msra.mxu0 0.0
    %262 = vmatprep.subr.mxu0 0.0
    %263 = vmatpush1.xpose.msra.mxu0 0.0
    %264 = vmatprep.subr.mxu0 0.0
    %265 = vmatpush1.xpose.msra.mxu0 0.0
    %266 = vmatprep.subr.mxu0 0.0
    %267 = vmatpush1.xpose.msra.mxu0 0.0
    %268 = vmatprep.subr.mxu0 0.0
    %269 = vmatpush1.xpose.msra.mxu0 0.0
    %270 = vmatprep.subr.mxu0 0.0
    %271 = vmatpush1.xpose.msra.mxu0 0.0
    %272 = vmatprep.subr.mxu0 0.0
    %273 = vmatpush1.xpose.msra.mxu0 0.0
    %274 = vmatprep.subr.mxu0 0.0
    %275 = vmatpush1.xpose.msra.mxu0 0.0
    %276 = vmatprep.subr.mxu0 0.0
    %277 = vmatpush1.xpose.msra.mxu0 0.0
    %278 = vmatprep.subr.mxu0 0.0
    %279 = vmatpush1.xpose.msra.mxu0 0.0
    %280 = vmatprep.subr.mxu0 0.0
    %281 = vmatpush1.xpose.msra.mxu0 0.0
    %282 = vmatprep.subr.mxu0 0.0
    %283 = vmatpush1.xpose.msra.mxu0 0.0
    %284 = vmatprep.subr.mxu0 0.0
    %285 = vmatpush1.xpose.msra.mxu0 %v252
    %286 = vmatprep.subr.mxu0 0.0
    %287 = vmatpush2.xpose.msra.mxu0 0.0
    %288 = vmatprep.subr.mxu0 0.0
    %289 = vmatpush2.xpose.msra.mxu0 0.0
    %290 = vmatprep.subr.mxu0 0.0
    %291 = vmatpush2.xpose.msra.mxu0 0.0
    %292 = vmatprep.subr.mxu0 0.0
    %293 = vmatpush2.xpose.msra.mxu0 0.0
    %294 = vmatprep.subr.mxu0 0.0
    %295 = vmatpush2.xpose.msra.mxu0 0.0
    %296 = vmatprep.subr.mxu0 0.0
    %297 = vmatpush2.xpose.msra.mxu0 0.0
    %298 = vmatprep.subr.mxu0 0.0
    %299 = vmatpush2.xpose.msra.mxu0 0.0
    %300 = vmatprep.subr.mxu0 0.0
    %301 = vmatpush2.xpose.msra.mxu0 0.0
    %302 = vmatprep.subr.mxu0 0.0
    %303 = vmatpush2.xpose.msra.mxu0 0.0
    %304 = vmatprep.subr.mxu0 0.0
    %305 = vmatpush2.xpose.msra.mxu0 0.0
    %306 = vmatprep.subr.mxu0 0.0
    %307 = vmatpush2.xpose.msra.mxu0 0.0
    %308 = vmatprep.subr.mxu0 0.0
    %309 = vmatpush2.xpose.msra.mxu0 0.0
    %310 = vmatprep.subr.mxu0 0.0
    %311 = vmatpush2.xpose.msra.mxu0 0.0
    %312 = vmatprep.subr.mxu0 0.0
    %313 = vmatpush2.xpose.msra.mxu0 0.0
    %314 = vmatprep.subr.mxu0 0.0
    %315 = vmatpush2.xpose.msra.mxu0 0.0
    %316 = vmatprep.subr.mxu0 0.0
    %317 = vmatpush2.xpose.msra.mxu0 0.0
    %318 = vmatprep.mubr.f32.mxu0 0.0
    %319 = vmatmul.mubr.f32.gmra.mxu0 %v252
    %v320 = vpop.f32.mrf.mxu0
    %v321 = vadd.f32 0.0, %v320
    %v322 = vpop.f32.mrf.mxu0
    %323 = vdwg.mxu0
    %v325 = vsel %vm94, %v92, 0
    %327 = vmatprep.subr.mxu0 0.0
    %328 = vmatpush1.xpose.msra.mxu0 0.0
    %329 = vmatprep.subr.mxu0 0.0
    %330 = vmatpush1.xpose.msra.mxu0 0.0
    %331 = vmatprep.subr.mxu0 0.0
    %332 = vmatpush1.xpose.msra.mxu0 0.0
    %333 = vmatprep.subr.mxu0 0.0
    %334 = vmatpush1.xpose.msra.mxu0 0.0
    %335 = vmatprep.subr.mxu0 0.0
    %336 = vmatpush1.xpose.msra.mxu0 0.0
    %337 = vmatprep.subr.mxu0 0.0
    %338 = vmatpush1.xpose.msra.mxu0 0.0
    %339 = vmatprep.subr.mxu0 0.0
    %340 = vmatpush1.xpose.msra.mxu0 0.0
    %341 = vmatprep.subr.mxu0 0.0
    %342 = vmatpush1.xpose.msra.mxu0 0.0
    %343 = vmatprep.subr.mxu0 0.0
    %344 = vmatpush1.xpose.msra.mxu0 0.0
    %345 = vmatprep.subr.mxu0 0.0
    %346 = vmatpush1.xpose.msra.mxu0 0.0
    %347 = vmatprep.subr.mxu0 0.0
    %348 = vmatpush1.xpose.msra.mxu0 0.0
    %349 = vmatprep.subr.mxu0 0.0
    %350 = vmatpush1.xpose.msra.mxu0 0.0
    %351 = vmatprep.subr.mxu0 0.0
    %352 = vmatpush1.xpose.msra.mxu0 0.0
    %353 = vmatprep.subr.mxu0 0.0
    %354 = vmatpush1.xpose.msra.mxu0 0.0
    %355 = vmatprep.subr.mxu0 0.0
    %356 = vmatpush1.xpose.msra.mxu0 0.0
    %357 = vmatprep.subr.mxu0 0.0
    %358 = vmatpush1.xpose.msra.mxu0 %v325
    %359 = vmatprep.subr.mxu0 0.0
    %360 = vmatpush2.xpose.msra.mxu0 0.0
    %361 = vmatprep.subr.mxu0 0.0
    %362 = vmatpush2.xpose.msra.mxu0 0.0
    %363 = vmatprep.subr.mxu0 0.0
    %364 = vmatpush2.xpose.msra.mxu0 0.0
    %365 = vmatprep.subr.mxu0 0.0
    %366 = vmatpush2.xpose.msra.mxu0 0.0
    %367 = vmatprep.subr.mxu0 0.0
    %368 = vmatpush2.xpose.msra.mxu0 0.0
    %369 = vmatprep.subr.mxu0 0.0
    %370 = vmatpush2.xpose.msra.mxu0 0.0
    %371 = vmatprep.subr.mxu0 0.0
    %372 = vmatpush2.xpose.msra.mxu0 0.0
    %373 = vmatprep.subr.mxu0 0.0
    %374 = vmatpush2.xpose.msra.mxu0 0.0
    %375 = vmatprep.subr.mxu0 0.0
    %376 = vmatpush2.xpose.msra.mxu0 0.0
    %377 = vmatprep.subr.mxu0 0.0
    %378 = vmatpush2.xpose.msra.mxu0 0.0
    %379 = vmatprep.subr.mxu0 0.0
    %380 = vmatpush2.xpose.msra.mxu0 0.0
    %381 = vmatprep.subr.mxu0 0.0
    %382 = vmatpush2.xpose.msra.mxu0 0.0
    %383 = vmatprep.subr.mxu0 0.0
    %384 = vmatpush2.xpose.msra.mxu0 0.0
    %385 = vmatprep.subr.mxu0 0.0
    %386 = vmatpush2.xpose.msra.mxu0 0.0
    %387 = vmatprep.subr.mxu0 0.0
    %388 = vmatpush2.xpose.msra.mxu0 0.0
    %389 = vmatprep.subr.mxu0 0.0
    %390 = vmatpush2.xpose.msra.mxu0 0.0
    %391 = vmatprep.mubr.f32.mxu0 0.0
    %392 = vmatmul.mubr.f32.gmra.mxu0 %v325
    %v393 = vpop.f32.mrf.mxu0
    %v394 = vadd.f32 0.0, %v393
    %v395 = vpop.f32.mrf.mxu0
    %396 = vdwg.mxu0
    %v397 = vlaneseq
    %v398 = vshrl.u32 %v397, 7
    %v399 = vsub.s32 0, %v398
    %v400 = vrot.slane %v171, %v399
    %v401 = vadd.f32 %v97, %v400
    %v402 = vmul.f32 %v321, 2.0
    %v403 = vsub.f32 %v401, %v402
    %v404 = vmax.f32 %v403, 0.0
    %v405 = vlaneseq
    %v406 = vshrl.u32 %v405, 7
    %v407 = vsub.s32 0, %v406
    %v408 = vrot.slane %v248, %v407
    %v409 = vadd.f32 %v177, %v408
    %v410 = vmul.f32 %v394, 2.0
    %v411 = vsub.f32 %v409, %v410
    %v412 = vmax.f32 %v411, 0.0
    %v413 = vld [vmem:[#allocation5] sm:$0xff]
    %v414 = vld [vmem:[%s3] sm:$0xff]
    %v415 = vld [vmem:[#allocation7] sm:$0xff]
    %v416 = vld [vmem:[#allocation8] sm:$0xff]
    %v417 = vld [vmem:[#allocation10] sm:$0xff]
    %v418 = vld [vmem:[%s7] sm:$0xff]
    %v419 = vld [vmem:[%s8] sm:$0xf]
    %v420 = vmul.f32 %v404, %v415
    %vm421 = vcmask 64512
    %v423 = vsel %vm421, %v420, 0
    %425 = vmatprep.subr.mxu0 0.0
    %426 = vmatpush1.msra.mxu0 0.0
    %427 = vmatprep.subr.mxu0 0.0
    %428 = vmatpush1.msra.mxu0 0.0
    %429 = vmatprep.subr.mxu0 0.0
    %430 = vmatpush1.msra.mxu0 0.0
    %431 = vmatprep.subr.mxu0 0.0
    %432 = vmatpush1.msra.mxu0 0.0
    %433 = vmatprep.subr.mxu0 0.0
    %434 = vmatpush1.msra.mxu0 0.0
    %435 = vmatprep.subr.mxu0 0.0
    %436 = vmatpush1.msra.mxu0 0.0
    %437 = vmatprep.subr.mxu0 0.0
    %438 = vmatpush1.msra.mxu0 0.0
    %439 = vmatprep.subr.mxu0 0.0
    %440 = vmatpush1.msra.mxu0 0.0
    %441 = vmatprep.subr.mxu0 0.0
    %442 = vmatpush1.msra.mxu0 0.0
    %443 = vmatprep.subr.mxu0 0.0
    %444 = vmatpush1.msra.mxu0 0.0
    %445 = vmatprep.subr.mxu0 0.0
    %446 = vmatpush1.msra.mxu0 0.0
    %447 = vmatprep.subr.mxu0 0.0
    %448 = vmatpush1.msra.mxu0 0.0
    %449 = vmatprep.subr.mxu0 0.0
    %450 = vmatpush1.msra.mxu0 0.0
    %451 = vmatprep.subr.mxu0 0.0
    %452 = vmatpush1.msra.mxu0 0.0
    %453 = vmatprep.subr.mxu0 0.0
    %454 = vmatpush1.msra.mxu0 0.0
    %455 = vmatprep.subr.mxu0 0.0
    %456 = vmatpush1.msra.mxu0 %v418
    %457 = vmatprep.subr.mxu0 0.0
    %458 = vmatpush2.msra.mxu0 0.0
    %459 = vmatprep.subr.mxu0 0.0
    %460 = vmatpush2.msra.mxu0 0.0
    %461 = vmatprep.subr.mxu0 0.0
    %462 = vmatpush2.msra.mxu0 0.0
    %463 = vmatprep.subr.mxu0 0.0
    %464 = vmatpush2.msra.mxu0 0.0
    %465 = vmatprep.subr.mxu0 0.0
    %466 = vmatpush2.msra.mxu0 0.0
    %467 = vmatprep.subr.mxu0 0.0
    %468 = vmatpush2.msra.mxu0 0.0
    %469 = vmatprep.subr.mxu0 0.0
    %470 = vmatpush2.msra.mxu0 0.0
    %471 = vmatprep.subr.mxu0 0.0
    %472 = vmatpush2.msra.mxu0 0.0
    %473 = vmatprep.subr.mxu0 0.0
    %474 = vmatpush2.msra.mxu0 0.0
    %475 = vmatprep.subr.mxu0 0.0
    %476 = vmatpush2.msra.mxu0 0.0
    %477 = vmatprep.subr.mxu0 0.0
    %478 = vmatpush2.msra.mxu0 0.0
    %479 = vmatprep.subr.mxu0 0.0
    %480 = vmatpush2.msra.mxu0 0.0
    %481 = vmatprep.subr.mxu0 0.0
    %482 = vmatpush2.msra.mxu0 0.0
    %483 = vmatprep.subr.mxu0 0.0
    %484 = vmatpush2.msra.mxu0 0.0
    %485 = vmatprep.subr.mxu0 0.0
    %486 = vmatpush2.msra.mxu0 0.0
    %487 = vmatprep.subr.mxu0 0.0
    %488 = vmatpush2.msra.mxu0 0.0
    %489 = vmatprep.mubr.f32.mxu0 0.0
    %490 = vmatmul.mubr.f32.gmra.mxu0 %v423
    %v491 = vpop.f32.mrf.mxu0
    %v492 = vadd.f32 0.0, %v491
    %v493 = vpop.f32.mrf.mxu0
    %494 = vdwg.mxu0
    %v496 = vsel %vm421, %v419, 0
    %498 = vmatprep.subr.mxu0 0.0
    %499 = vmatpush1.msra.mxu0 0.0
    %500 = vmatprep.subr.mxu0 0.0
    %501 = vmatpush1.msra.mxu0 0.0
    %502 = vmatprep.subr.mxu0 0.0
    %503 = vmatpush1.msra.mxu0 0.0
    %504 = vmatprep.subr.mxu0 0.0
    %505 = vmatpush1.msra.mxu0 0.0
    %506 = vmatprep.subr.mxu0 0.0
    %507 = vmatpush1.msra.mxu0 0.0
    %508 = vmatprep.subr.mxu0 0.0
    %509 = vmatpush1.msra.mxu0 0.0
    %510 = vmatprep.subr.mxu0 0.0
    %511 = vmatpush1.msra.mxu0 0.0
    %512 = vmatprep.subr.mxu0 0.0
    %513 = vmatpush1.msra.mxu0 0.0
    %514 = vmatprep.subr.mxu0 0.0
    %515 = vmatpush1.msra.mxu0 0.0
    %516 = vmatprep.subr.mxu0 0.0
    %517 = vmatpush1.msra.mxu0 0.0
    %518 = vmatprep.subr.mxu0 0.0
    %519 = vmatpush1.msra.mxu0 0.0
    %520 = vmatprep.subr.mxu0 0.0
    %521 = vmatpush1.msra.mxu0 0.0
    %522 = vmatprep.subr.mxu0 0.0
    %523 = vmatpush1.msra.mxu0 0.0
    %524 = vmatprep.subr.mxu0 0.0
    %525 = vmatpush1.msra.mxu0 0.0
    %526 = vmatprep.subr.mxu0 0.0
    %527 = vmatpush1.msra.mxu0 0.0
    %528 = vmatprep.subr.mxu0 0.0
    %529 = vmatpush1.msra.mxu0 %v420
    %530 = vmatprep.subr.mxu0 0.0
    %531 = vmatpush2.msra.mxu0 0.0
    %532 = vmatprep.subr.mxu0 0.0
    %533 = vmatpush2.msra.mxu0 0.0
    %534 = vmatprep.subr.mxu0 0.0
    %535 = vmatpush2.msra.mxu0 0.0
    %536 = vmatprep.subr.mxu0 0.0
    %537 = vmatpush2.msra.mxu0 0.0
    %538 = vmatprep.subr.mxu0 0.0
    %539 = vmatpush2.msra.mxu0 0.0
    %540 = vmatprep.subr.mxu0 0.0
    %541 = vmatpush2.msra.mxu0 0.0
    %542 = vmatprep.subr.mxu0 0.0
    %543 = vmatpush2.msra.mxu0 0.0
    %544 = vmatprep.subr.mxu0 0.0
    %545 = vmatpush2.msra.mxu0 0.0
    %546 = vmatprep.subr.mxu0 0.0
    %547 = vmatpush2.msra.mxu0 0.0
    %548 = vmatprep.subr.mxu0 0.0
    %549 = vmatpush2.msra.mxu0 0.0
    %550 = vmatprep.subr.mxu0 0.0
    %551 = vmatpush2.msra.mxu0 0.0
    %552 = vmatprep.subr.mxu0 0.0
    %553 = vmatpush2.msra.mxu0 0.0
    %554 = vmatprep.subr.mxu0 0.0
    %555 = vmatpush2.msra.mxu0 0.0
    %556 = vmatprep.subr.mxu0 0.0
    %557 = vmatpush2.msra.mxu0 0.0
    %558 = vmatprep.subr.mxu0 0.0
    %559 = vmatpush2.msra.mxu0 0.0
    %560 = vmatprep.subr.mxu0 0.0
    %561 = vmatpush2.msra.mxu0 0.0
    %562 = vmatprep.mubr.f32.mxu0 0.0
    %563 = vmatmul.mubr.f32.gmra.mxu0 %v496
    %v564 = vpop.f32.mrf.mxu0
    %v565 = vadd.f32 0.0, %v564
    %v566 = vpop.f32.mrf.mxu0
    %567 = vdwg.mxu0
    %v568 = vmul.f32 %v412, %v415
    %v570 = vsel %vm421, %v568, 0
    %572 = vmatprep.subr.mxu0 0.0
    %573 = vmatpush1.msra.mxu0 0.0
    %574 = vmatprep.subr.mxu0 0.0
    %575 = vmatpush1.msra.mxu0 0.0
    %576 = vmatprep.subr.mxu0 0.0
    %577 = vmatpush1.msra.mxu0 0.0
    %578 = vmatprep.subr.mxu0 0.0
    %579 = vmatpush1.msra.mxu0 0.0
    %580 = vmatprep.subr.mxu0 0.0
    %581 = vmatpush1.msra.mxu0 0.0
    %582 = vmatprep.subr.mxu0 0.0
    %583 = vmatpush1.msra.mxu0 0.0
    %584 = vmatprep.subr.mxu0 0.0
    %585 = vmatpush1.msra.mxu0 0.0
    %586 = vmatprep.subr.mxu0 0.0
    %587 = vmatpush1.msra.mxu0 0.0
    %588 = vmatprep.subr.mxu0 0.0
    %589 = vmatpush1.msra.mxu0 0.0
    %590 = vmatprep.subr.mxu0 0.0
    %591 = vmatpush1.msra.mxu0 0.0
    %592 = vmatprep.subr.mxu0 0.0
    %593 = vmatpush1.msra.mxu0 0.0
    %594 = vmatprep.subr.mxu0 0.0
    %595 = vmatpush1.msra.mxu0 0.0
    %596 = vmatprep.subr.mxu0 0.0
    %597 = vmatpush1.msra.mxu0 0.0
    %598 = vmatprep.subr.mxu0 0.0
    %599 = vmatpush1.msra.mxu0 0.0
    %600 = vmatprep.subr.mxu0 0.0
    %601 = vmatpush1.msra.mxu0 0.0
    %602 = vmatprep.subr.mxu0 0.0
    %603 = vmatpush1.msra.mxu0 %v418
    %604 = vmatprep.subr.mxu0 0.0
    %605 = vmatpush2.msra.mxu0 0.0
    %606 = vmatprep.subr.mxu0 0.0
    %607 = vmatpush2.msra.mxu0 0.0
    %608 = vmatprep.subr.mxu0 0.0
    %609 = vmatpush2.msra.mxu0 0.0
    %610 = vmatprep.subr.mxu0 0.0
    %611 = vmatpush2.msra.mxu0 0.0
    %612 = vmatprep.subr.mxu0 0.0
    %613 = vmatpush2.msra.mxu0 0.0
    %614 = vmatprep.subr.mxu0 0.0
    %615 = vmatpush2.msra.mxu0 0.0
    %616 = vmatprep.subr.mxu0 0.0
    %617 = vmatpush2.msra.mxu0 0.0
    %618 = vmatprep.subr.mxu0 0.0
    %619 = vmatpush2.msra.mxu0 0.0
    %620 = vmatprep.subr.mxu0 0.0
    %621 = vmatpush2.msra.mxu0 0.0
    %622 = vmatprep.subr.mxu0 0.0
    %623 = vmatpush2.msra.mxu0 0.0
    %624 = vmatprep.subr.mxu0 0.0
    %625 = vmatpush2.msra.mxu0 0.0
    %626 = vmatprep.subr.mxu0 0.0
    %627 = vmatpush2.msra.mxu0 0.0
    %628 = vmatprep.subr.mxu0 0.0
    %629 = vmatpush2.msra.mxu0 0.0
    %630 = vmatprep.subr.mxu0 0.0
    %631 = vmatpush2.msra.mxu0 0.0
    %632 = vmatprep.subr.mxu0 0.0
    %633 = vmatpush2.msra.mxu0 0.0
    %634 = vmatprep.subr.mxu0 0.0
    %635 = vmatpush2.msra.mxu0 0.0
    %636 = vmatprep.mubr.f32.mxu0 0.0
    %637 = vmatmul.mubr.f32.gmra.mxu0 %v570
    %v638 = vpop.f32.mrf.mxu0
    %v639 = vadd.f32 0.0, %v638
    %v640 = vpop.f32.mrf.mxu0
    %641 = vdwg.mxu0
    %642 = vmatprep.subr.mxu0 0.0
    %643 = vmatpush1.msra.mxu0 0.0
    %644 = vmatprep.subr.mxu0 0.0
    %645 = vmatpush1.msra.mxu0 0.0
    %646 = vmatprep.subr.mxu0 0.0
    %647 = vmatpush1.msra.mxu0 0.0
    %648 = vmatprep.subr.mxu0 0.0
    %649 = vmatpush1.msra.mxu0 0.0
    %650 = vmatprep.subr.mxu0 0.0
    %651 = vmatpush1.msra.mxu0 0.0
    %652 = vmatprep.subr.mxu0 0.0
    %653 = vmatpush1.msra.mxu0 0.0
    %654 = vmatprep.subr.mxu0 0.0
    %655 = vmatpush1.msra.mxu0 0.0
    %656 = vmatprep.subr.mxu0 0.0
    %657 = vmatpush1.msra.mxu0 0.0
    %658 = vmatprep.subr.mxu0 0.0
    %659 = vmatpush1.msra.mxu0 0.0
    %660 = vmatprep.subr.mxu0 0.0
    %661 = vmatpush1.msra.mxu0 0.0
    %662 = vmatprep.subr.mxu0 0.0
    %663 = vmatpush1.msra.mxu0 0.0
    %664 = vmatprep.subr.mxu0 0.0
    %665 = vmatpush1.msra.mxu0 0.0
    %666 = vmatprep.subr.mxu0 0.0
    %667 = vmatpush1.msra.mxu0 0.0
    %668 = vmatprep.subr.mxu0 0.0
    %669 = vmatpush1.msra.mxu0 0.0
    %670 = vmatprep.subr.mxu0 0.0
    %671 = vmatpush1.msra.mxu0 0.0
    %672 = vmatprep.subr.mxu0 0.0
    %673 = vmatpush1.msra.mxu0 %v568
    %674 = vmatprep.subr.mxu0 0.0
    %675 = vmatpush2.msra.mxu0 0.0
    %676 = vmatprep.subr.mxu0 0.0
    %677 = vmatpush2.msra.mxu0 0.0
    %678 = vmatprep.subr.mxu0 0.0
    %679 = vmatpush2.msra.mxu0 0.0
    %680 = vmatprep.subr.mxu0 0.0
    %681 = vmatpush2.msra.mxu0 0.0
    %682 = vmatprep.subr.mxu0 0.0
    %683 = vmatpush2.msra.mxu0 0.0
    %684 = vmatprep.subr.mxu0 0.0
    %685 = vmatpush2.msra.mxu0 0.0
    %686 = vmatprep.subr.mxu0 0.0
    %687 = vmatpush2.msra.mxu0 0.0
    %688 = vmatprep.subr.mxu0 0.0
    %689 = vmatpush2.msra.mxu0 0.0
    %690 = vmatprep.subr.mxu0 0.0
    %691 = vmatpush2.msra.mxu0 0.0
    %692 = vmatprep.subr.mxu0 0.0
    %693 = vmatpush2.msra.mxu0 0.0
    %694 = vmatprep.subr.mxu0 0.0
    %695 = vmatpush2.msra.mxu0 0.0
    %696 = vmatprep.subr.mxu0 0.0
    %697 = vmatpush2.msra.mxu0 0.0
    %698 = vmatprep.subr.mxu0 0.0
    %699 = vmatpush2.msra.mxu0 0.0
    %700 = vmatprep.subr.mxu0 0.0
    %701 = vmatpush2.msra.mxu0 0.0
    %702 = vmatprep.subr.mxu0 0.0
    %703 = vmatpush2.msra.mxu0 0.0
    %704 = vmatprep.subr.mxu0 0.0
    %705 = vmatpush2.msra.mxu0 0.0
    %706 = vmatprep.mubr.f32.mxu0 0.0
    %707 = vmatmul.mubr.f32.gmra.mxu0 %v496
    %v708 = vpop.f32.mrf.mxu0
    %v709 = vadd.f32 0.0, %v708
    %v710 = vpop.f32.mrf.mxu0
    %711 = vdwg.mxu0
    %v713 = vsel %vm421, %v413, 0
    %715 = vmatprep.subr.mxu0 0.0
    %716 = vmatpush1.msra.mxu0 0.0
    %717 = vmatprep.subr.mxu0 0.0
    %718 = vmatpush1.msra.mxu0 0.0
    %719 = vmatprep.subr.mxu0 0.0
    %720 = vmatpush1.msra.mxu0 0.0
    %721 = vmatprep.subr.mxu0 0.0
    %722 = vmatpush1.msra.mxu0 0.0
    %723 = vmatprep.subr.mxu0 0.0
    %724 = vmatpush1.msra.mxu0 0.0
    %725 = vmatprep.subr.mxu0 0.0
    %726 = vmatpush1.msra.mxu0 0.0
    %727 = vmatprep.subr.mxu0 0.0
    %728 = vmatpush1.msra.mxu0 0.0
    %729 = vmatprep.subr.mxu0 0.0
    %730 = vmatpush1.msra.mxu0 0.0
    %731 = vmatprep.subr.mxu0 0.0
    %732 = vmatpush1.msra.mxu0 0.0
    %733 = vmatprep.subr.mxu0 0.0
    %734 = vmatpush1.msra.mxu0 0.0
    %735 = vmatprep.subr.mxu0 0.0
    %736 = vmatpush1.msra.mxu0 0.0
    %737 = vmatprep.subr.mxu0 0.0
    %738 = vmatpush1.msra.mxu0 0.0
    %739 = vmatprep.subr.mxu0 0.0
    %740 = vmatpush1.msra.mxu0 0.0
    %741 = vmatprep.subr.mxu0 0.0
    %742 = vmatpush1.msra.mxu0 0.0
    %743 = vmatprep.subr.mxu0 0.0
    %744 = vmatpush1.msra.mxu0 0.0
    %745 = vmatprep.subr.mxu0 0.0
    %746 = vmatpush1.msra.mxu0 %v404
    %747 = vmatprep.subr.mxu0 0.0
    %748 = vmatpush2.msra.mxu0 0.0
    %749 = vmatprep.subr.mxu0 0.0
    %750 = vmatpush2.msra.mxu0 0.0
    %751 = vmatprep.subr.mxu0 0.0
    %752 = vmatpush2.msra.mxu0 0.0
    %753 = vmatprep.subr.mxu0 0.0
    %754 = vmatpush2.msra.mxu0 0.0
    %755 = vmatprep.subr.mxu0 0.0
    %756 = vmatpush2.msra.mxu0 0.0
    %757 = vmatprep.subr.mxu0 0.0
    %758 = vmatpush2.msra.mxu0 0.0
    %759 = vmatprep.subr.mxu0 0.0
    %760 = vmatpush2.msra.mxu0 0.0
    %761 = vmatprep.subr.mxu0 0.0
    %762 = vmatpush2.msra.mxu0 0.0
    %763 = vmatprep.subr.mxu0 0.0
    %764 = vmatpush2.msra.mxu0 0.0
    %765 = vmatprep.subr.mxu0 0.0
    %766 = vmatpush2.msra.mxu0 0.0
    %767 = vmatprep.subr.mxu0 0.0
    %768 = vmatpush2.msra.mxu0 0.0
    %769 = vmatprep.subr.mxu0 0.0
    %770 = vmatpush2.msra.mxu0 0.0
    %771 = vmatprep.subr.mxu0 0.0
    %772 = vmatpush2.msra.mxu0 0.0
    %773 = vmatprep.subr.mxu0 0.0
    %774 = vmatpush2.msra.mxu0 0.0
    %775 = vmatprep.subr.mxu0 0.0
    %776 = vmatpush2.msra.mxu0 0.0
    %777 = vmatprep.subr.mxu0 0.0
    %778 = vmatpush2.msra.mxu0 0.0
    %779 = vmatprep.mubr.f32.mxu0 0.0
    %780 = vmatmul.mubr.f32.gmra.mxu0 %v713
    %v781 = vpop.f32.mrf.mxu0
    %v782 = vadd.f32 0.0, %v781
    %v783 = vpop.f32.mrf.mxu0
    %784 = vdwg.mxu0
    %v785 = vmul.f32 %v782, %v416
    %v787 = vsel %vm421, %v785, 0
    %789 = vmatprep.subr.mxu0 0.0
    %790 = vmatpush1.msra.mxu0 0.0
    %791 = vmatprep.subr.mxu0 0.0
    %792 = vmatpush1.msra.mxu0 0.0
    %793 = vmatprep.subr.mxu0 0.0
    %794 = vmatpush1.msra.mxu0 0.0
    %795 = vmatprep.subr.mxu0 0.0
    %796 = vmatpush1.msra.mxu0 0.0
    %797 = vmatprep.subr.mxu0 0.0
    %798 = vmatpush1.msra.mxu0 0.0
    %799 = vmatprep.subr.mxu0 0.0
    %800 = vmatpush1.msra.mxu0 0.0
    %801 = vmatprep.subr.mxu0 0.0
    %802 = vmatpush1.msra.mxu0 0.0
    %803 = vmatprep.subr.mxu0 0.0
    %804 = vmatpush1.msra.mxu0 0.0
    %805 = vmatprep.subr.mxu0 0.0
    %806 = vmatpush1.msra.mxu0 0.0
    %807 = vmatprep.subr.mxu0 0.0
    %808 = vmatpush1.msra.mxu0 0.0
    %809 = vmatprep.subr.mxu0 0.0
    %810 = vmatpush1.msra.mxu0 0.0
    %811 = vmatprep.subr.mxu0 0.0
    %812 = vmatpush1.msra.mxu0 0.0
    %813 = vmatprep.subr.mxu0 0.0
    %814 = vmatpush1.msra.mxu0 0.0
    %815 = vmatprep.subr.mxu0 0.0
    %816 = vmatpush1.msra.mxu0 0.0
    %817 = vmatprep.subr.mxu0 0.0
    %818 = vmatpush1.msra.mxu0 0.0
    %819 = vmatprep.subr.mxu0 0.0
    %820 = vmatpush1.msra.mxu0 %v418
    %821 = vmatprep.subr.mxu0 0.0
    %822 = vmatpush2.msra.mxu0 0.0
    %823 = vmatprep.subr.mxu0 0.0
    %824 = vmatpush2.msra.mxu0 0.0
    %825 = vmatprep.subr.mxu0 0.0
    %826 = vmatpush2.msra.mxu0 0.0
    %827 = vmatprep.subr.mxu0 0.0
    %828 = vmatpush2.msra.mxu0 0.0
    %829 = vmatprep.subr.mxu0 0.0
    %830 = vmatpush2.msra.mxu0 0.0
    %831 = vmatprep.subr.mxu0 0.0
    %832 = vmatpush2.msra.mxu0 0.0
    %833 = vmatprep.subr.mxu0 0.0
    %834 = vmatpush2.msra.mxu0 0.0
    %835 = vmatprep.subr.mxu0 0.0
    %836 = vmatpush2.msra.mxu0 0.0
    %837 = vmatprep.subr.mxu0 0.0
    %838 = vmatpush2.msra.mxu0 0.0
    %839 = vmatprep.subr.mxu0 0.0
    %840 = vmatpush2.msra.mxu0 0.0
    %841 = vmatprep.subr.mxu0 0.0
    %842 = vmatpush2.msra.mxu0 0.0
    %843 = vmatprep.subr.mxu0 0.0
    %844 = vmatpush2.msra.mxu0 0.0
    %845 = vmatprep.subr.mxu0 0.0
    %846 = vmatpush2.msra.mxu0 0.0
    %847 = vmatprep.subr.mxu0 0.0
    %848 = vmatpush2.msra.mxu0 0.0
    %849 = vmatprep.subr.mxu0 0.0
    %850 = vmatpush2.msra.mxu0 0.0
    %851 = vmatprep.subr.mxu0 0.0
    %852 = vmatpush2.msra.mxu0 0.0
    %853 = vmatprep.mubr.f32.mxu0 0.0
    %854 = vmatmul.mubr.f32.gmra.mxu0 %v787
    %v855 = vpop.f32.mrf.mxu0
    %v856 = vadd.f32 0.0, %v855
    %v857 = vpop.f32.mrf.mxu0
    %858 = vdwg.mxu0
    %v860 = vsel %vm421, %v404, 0
    %862 = vmatprep.subr.mxu0 0.0
    %863 = vmatpush1.msra.mxu0 0.0
    %864 = vmatprep.subr.mxu0 0.0
    %865 = vmatpush1.msra.mxu0 0.0
    %866 = vmatprep.subr.mxu0 0.0
    %867 = vmatpush1.msra.mxu0 0.0
    %868 = vmatprep.subr.mxu0 0.0
    %869 = vmatpush1.msra.mxu0 0.0
    %870 = vmatprep.subr.mxu0 0.0
    %871 = vmatpush1.msra.mxu0 0.0
    %872 = vmatprep.subr.mxu0 0.0
    %873 = vmatpush1.msra.mxu0 0.0
    %874 = vmatprep.subr.mxu0 0.0
    %875 = vmatpush1.msra.mxu0 0.0
    %876 = vmatprep.subr.mxu0 0.0
    %877 = vmatpush1.msra.mxu0 0.0
    %878 = vmatprep.subr.mxu0 0.0
    %879 = vmatpush1.msra.mxu0 0.0
    %880 = vmatprep.subr.mxu0 0.0
    %881 = vmatpush1.msra.mxu0 0.0
    %882 = vmatprep.subr.mxu0 0.0
    %883 = vmatpush1.msra.mxu0 0.0
    %884 = vmatprep.subr.mxu0 0.0
    %885 = vmatpush1.msra.mxu0 0.0
    %886 = vmatprep.subr.mxu0 0.0
    %887 = vmatpush1.msra.mxu0 0.0
    %888 = vmatprep.subr.mxu0 0.0
    %889 = vmatpush1.msra.mxu0 0.0
    %890 = vmatprep.subr.mxu0 0.0
    %891 = vmatpush1.msra.mxu0 0.0
    %892 = vmatprep.subr.mxu0 0.0
    %893 = vmatpush1.msra.mxu0 %v414
    %894 = vmatprep.subr.mxu0 0.0
    %895 = vmatpush2.msra.mxu0 0.0
    %896 = vmatprep.subr.mxu0 0.0
    %897 = vmatpush2.msra.mxu0 0.0
    %898 = vmatprep.subr.mxu0 0.0
    %899 = vmatpush2.msra.mxu0 0.0
    %900 = vmatprep.subr.mxu0 0.0
    %901 = vmatpush2.msra.mxu0 0.0
    %902 = vmatprep.subr.mxu0 0.0
    %903 = vmatpush2.msra.mxu0 0.0
    %904 = vmatprep.subr.mxu0 0.0
    %905 = vmatpush2.msra.mxu0 0.0
    %906 = vmatprep.subr.mxu0 0.0
    %907 = vmatpush2.msra.mxu0 0.0
    %908 = vmatprep.subr.mxu0 0.0
    %909 = vmatpush2.msra.mxu0 0.0
    %910 = vmatprep.subr.mxu0 0.0
    %911 = vmatpush2.msra.mxu0 0.0
    %912 = vmatprep.subr.mxu0 0.0
    %913 = vmatpush2.msra.mxu0 0.0
    %914 = vmatprep.subr.mxu0 0.0
    %915 = vmatpush2.msra.mxu0 0.0
    %916 = vmatprep.subr.mxu0 0.0
    %917 = vmatpush2.msra.mxu0 0.0
    %918 = vmatprep.subr.mxu0 0.0
    %919 = vmatpush2.msra.mxu0 0.0
    %920 = vmatprep.subr.mxu0 0.0
    %921 = vmatpush2.msra.mxu0 0.0
    %922 = vmatprep.subr.mxu0 0.0
    %923 = vmatpush2.msra.mxu0 0.0
    %924 = vmatprep.subr.mxu0 0.0
    %925 = vmatpush2.msra.mxu0 0.0
    %926 = vmatprep.mubr.f32.mxu0 0.0
    %927 = vmatmul.mubr.f32.gmra.mxu0 %v860
    %v928 = vpop.f32.mrf.mxu0
    %v929 = vadd.f32 0.0, %v928
    %v930 = vpop.f32.mrf.mxu0
    %931 = vdwg.mxu0
    %v932 = vmul.f32 %v929, %v417
    %933 = vmatprep.subr.mxu0 0.0
    %934 = vmatpush1.msra.mxu0 0.0
    %935 = vmatprep.subr.mxu0 0.0
    %936 = vmatpush1.msra.mxu0 0.0
    %937 = vmatprep.subr.mxu0 0.0
    %938 = vmatpush1.msra.mxu0 0.0
    %939 = vmatprep.subr.mxu0 0.0
    %940 = vmatpush1.msra.mxu0 0.0
    %941 = vmatprep.subr.mxu0 0.0
    %942 = vmatpush1.msra.mxu0 0.0
    %943 = vmatprep.subr.mxu0 0.0
    %944 = vmatpush1.msra.mxu0 0.0
    %945 = vmatprep.subr.mxu0 0.0
    %946 = vmatpush1.msra.mxu0 0.0
    %947 = vmatprep.subr.mxu0 0.0
    %948 = vmatpush1.msra.mxu0 0.0
    %949 = vmatprep.subr.mxu0 0.0
    %950 = vmatpush1.msra.mxu0 0.0
    %951 = vmatprep.subr.mxu0 0.0
    %952 = vmatpush1.msra.mxu0 0.0
    %953 = vmatprep.subr.mxu0 0.0
    %954 = vmatpush1.msra.mxu0 0.0
    %955 = vmatprep.subr.mxu0 0.0
    %956 = vmatpush1.msra.mxu0 0.0
    %957 = vmatprep.subr.mxu0 0.0
    %958 = vmatpush1.msra.mxu0 0.0
    %959 = vmatprep.subr.mxu0 0.0
    %960 = vmatpush1.msra.mxu0 0.0
    %961 = vmatprep.subr.mxu0 0.0
    %962 = vmatpush1.msra.mxu0 0.0
    %963 = vmatprep.subr.mxu0 0.0
    %964 = vmatpush1.msra.mxu0 %v932
    %965 = vmatprep.subr.mxu0 0.0
    %966 = vmatpush2.msra.mxu0 0.0
    %967 = vmatprep.subr.mxu0 0.0
    %968 = vmatpush2.msra.mxu0 0.0
    %969 = vmatprep.subr.mxu0 0.0
    %970 = vmatpush2.msra.mxu0 0.0
    %971 = vmatprep.subr.mxu0 0.0
    %972 = vmatpush2.msra.mxu0 0.0
    %973 = vmatprep.subr.mxu0 0.0
    %974 = vmatpush2.msra.mxu0 0.0
    %975 = vmatprep.subr.mxu0 0.0
    %976 = vmatpush2.msra.mxu0 0.0
    %977 = vmatprep.subr.mxu0 0.0
    %978 = vmatpush2.msra.mxu0 0.0
    %979 = vmatprep.subr.mxu0 0.0
    %980 = vmatpush2.msra.mxu0 0.0
    %981 = vmatprep.subr.mxu0 0.0
    %982 = vmatpush2.msra.mxu0 0.0
    %983 = vmatprep.subr.mxu0 0.0
    %984 = vmatpush2.msra.mxu0 0.0
    %985 = vmatprep.subr.mxu0 0.0
    %986 = vmatpush2.msra.mxu0 0.0
    %987 = vmatprep.subr.mxu0 0.0
    %988 = vmatpush2.msra.mxu0 0.0
    %989 = vmatprep.subr.mxu0 0.0
    %990 = vmatpush2.msra.mxu0 0.0
    %991 = vmatprep.subr.mxu0 0.0
    %992 = vmatpush2.msra.mxu0 0.0
    %993 = vmatprep.subr.mxu0 0.0
    %994 = vmatpush2.msra.mxu0 0.0
    %995 = vmatprep.subr.mxu0 0.0
    %996 = vmatpush2.msra.mxu0 0.0
    %997 = vmatprep.mubr.f32.mxu0 0.0
    %998 = vmatmul.mubr.f32.gmra.mxu0 %v496
    %v999 = vpop.f32.mrf.mxu0
    %v1000 = vadd.f32 0.0, %v999
    %v1001 = vpop.f32.mrf.mxu0
    %1002 = vdwg.mxu0
    %1003 = vmatprep.subr.mxu0 0.0
    %1004 = vmatpush1.msra.mxu0 0.0
    %1005 = vmatprep.subr.mxu0 0.0
    %1006 = vmatpush1.msra.mxu0 0.0
    %1007 = vmatprep.subr.mxu0 0.0
    %1008 = vmatpush1.msra.mxu0 0.0
    %1009 = vmatprep.subr.mxu0 0.0
    %1010 = vmatpush1.msra.mxu0 0.0
    %1011 = vmatprep.subr.mxu0 0.0
    %1012 = vmatpush1.msra.mxu0 0.0
    %1013 = vmatprep.subr.mxu0 0.0
    %1014 = vmatpush1.msra.mxu0 0.0
    %1015 = vmatprep.subr.mxu0 0.0
    %1016 = vmatpush1.msra.mxu0 0.0
    %1017 = vmatprep.subr.mxu0 0.0
    %1018 = vmatpush1.msra.mxu0 0.0
    %1019 = vmatprep.subr.mxu0 0.0
    %1020 = vmatpush1.msra.mxu0 0.0
    %1021 = vmatprep.subr.mxu0 0.0
    %1022 = vmatpush1.msra.mxu0 0.0
    %1023 = vmatprep.subr.mxu0 0.0
    %1024 = vmatpush1.msra.mxu0 0.0
    %1025 = vmatprep.subr.mxu0 0.0
    %1026 = vmatpush1.msra.mxu0 0.0
    %1027 = vmatprep.subr.mxu0 0.0
    %1028 = vmatpush1.msra.mxu0 0.0
    %1029 = vmatprep.subr.mxu0 0.0
    %1030 = vmatpush1.msra.mxu0 0.0
    %1031 = vmatprep.subr.mxu0 0.0
    %1032 = vmatpush1.msra.mxu0 0.0
    %1033 = vmatprep.subr.mxu0 0.0
    %1034 = vmatpush1.msra.mxu0 %v412
    %1035 = vmatprep.subr.mxu0 0.0
    %1036 = vmatpush2.msra.mxu0 0.0
    %1037 = vmatprep.subr.mxu0 0.0
    %1038 = vmatpush2.msra.mxu0 0.0
    %1039 = vmatprep.subr.mxu0 0.0
    %1040 = vmatpush2.msra.mxu0 0.0
    %1041 = vmatprep.subr.mxu0 0.0
    %1042 = vmatpush2.msra.mxu0 0.0
    %1043 = vmatprep.subr.mxu0 0.0
    %1044 = vmatpush2.msra.mxu0 0.0
    %1045 = vmatprep.subr.mxu0 0.0
    %1046 = vmatpush2.msra.mxu0 0.0
    %1047 = vmatprep.subr.mxu0 0.0
    %1048 = vmatpush2.msra.mxu0 0.0
    %1049 = vmatprep.subr.mxu0 0.0
    %1050 = vmatpush2.msra.mxu0 0.0
    %1051 = vmatprep.subr.mxu0 0.0
    %1052 = vmatpush2.msra.mxu0 0.0
    %1053 = vmatprep.subr.mxu0 0.0
    %1054 = vmatpush2.msra.mxu0 0.0
    %1055 = vmatprep.subr.mxu0 0.0
    %1056 = vmatpush2.msra.mxu0 0.0
    %1057 = vmatprep.subr.mxu0 0.0
    %1058 = vmatpush2.msra.mxu0 0.0
    %1059 = vmatprep.subr.mxu0 0.0
    %1060 = vmatpush2.msra.mxu0 0.0
    %1061 = vmatprep.subr.mxu0 0.0
    %1062 = vmatpush2.msra.mxu0 0.0
    %1063 = vmatprep.subr.mxu0 0.0
    %1064 = vmatpush2.msra.mxu0 0.0
    %1065 = vmatprep.subr.mxu0 0.0
    %1066 = vmatpush2.msra.mxu0 0.0
    %1067 = vmatprep.mubr.f32.mxu0 0.0
    %1068 = vmatmul.mubr.f32.gmra.mxu0 %v713
    %v1069 = vpop.f32.mrf.mxu0
    %v1070 = vadd.f32 0.0, %v1069
    %v1071 = vpop.f32.mrf.mxu0
    %1072 = vdwg.mxu0
    %v1073 = vmul.f32 %v1070, %v416
    %v1075 = vsel %vm421, %v1073, 0
    %1077 = vmatprep.subr.mxu0 0.0
    %1078 = vmatpush1.msra.mxu0 0.0
    %1079 = vmatprep.subr.mxu0 0.0
    %1080 = vmatpush1.msra.mxu0 0.0
    %1081 = vmatprep.subr.mxu0 0.0
    %1082 = vmatpush1.msra.mxu0 0.0
    %1083 = vmatprep.subr.mxu0 0.0
    %1084 = vmatpush1.msra.mxu0 0.0
    %1085 = vmatprep.subr.mxu0 0.0
    %1086 = vmatpush1.msra.mxu0 0.0
    %1087 = vmatprep.subr.mxu0 0.0
    %1088 = vmatpush1.msra.mxu0 0.0
    %1089 = vmatprep.subr.mxu0 0.0
    %1090 = vmatpush1.msra.mxu0 0.0
    %1091 = vmatprep.subr.mxu0 0.0
    %1092 = vmatpush1.msra.mxu0 0.0
    %1093 = vmatprep.subr.mxu0 0.0
    %1094 = vmatpush1.msra.mxu0 0.0
    %1095 = vmatprep.subr.mxu0 0.0
    %1096 = vmatpush1.msra.mxu0 0.0
    %1097 = vmatprep.subr.mxu0 0.0
    %1098 = vmatpush1.msra.mxu0 0.0
    %1099 = vmatprep.subr.mxu0 0.0
    %1100 = vmatpush1.msra.mxu0 0.0
    %1101 = vmatprep.subr.mxu0 0.0
    %1102 = vmatpush1.msra.mxu0 0.0
    %1103 = vmatprep.subr.mxu0 0.0
    %1104 = vmatpush1.msra.mxu0 0.0
    %1105 = vmatprep.subr.mxu0 0.0
    %1106 = vmatpush1.msra.mxu0 0.0
    %1107 = vmatprep.subr.mxu0 0.0
    %1108 = vmatpush1.msra.mxu0 %v418
    %1109 = vmatprep.subr.mxu0 0.0
    %1110 = vmatpush2.msra.mxu0 0.0
    %1111 = vmatprep.subr.mxu0 0.0
    %1112 = vmatpush2.msra.mxu0 0.0
    %1113 = vmatprep.subr.mxu0 0.0
    %1114 = vmatpush2.msra.mxu0 0.0
    %1115 = vmatprep.subr.mxu0 0.0
    %1116 = vmatpush2.msra.mxu0 0.0
    %1117 = vmatprep.subr.mxu0 0.0
    %1118 = vmatpush2.msra.mxu0 0.0
    %1119 = vmatprep.subr.mxu0 0.0
    %1120 = vmatpush2.msra.mxu0 0.0
    %1121 = vmatprep.subr.mxu0 0.0
    %1122 = vmatpush2.msra.mxu0 0.0
    %1123 = vmatprep.subr.mxu0 0.0
    %1124 = vmatpush2.msra.mxu0 0.0
    %1125 = vmatprep.subr.mxu0 0.0
    %1126 = vmatpush2.msra.mxu0 0.0
    %1127 = vmatprep.subr.mxu0 0.0
    %1128 = vmatpush2.msra.mxu0 0.0
    %1129 = vmatprep.subr.mxu0 0.0
    %1130 = vmatpush2.msra.mxu0 0.0
    %1131 = vmatprep.subr.mxu0 0.0
    %1132 = vmatpush2.msra.mxu0 0.0
    %1133 = vmatprep.subr.mxu0 0.0
    %1134 = vmatpush2.msra.mxu0 0.0
    %1135 = vmatprep.subr.mxu0 0.0
    %1136 = vmatpush2.msra.mxu0 0.0
    %1137 = vmatprep.subr.mxu0 0.0
    %1138 = vmatpush2.msra.mxu0 0.0
    %1139 = vmatprep.subr.mxu0 0.0
    %1140 = vmatpush2.msra.mxu0 0.0
    %1141 = vmatprep.mubr.f32.mxu0 0.0
    %1142 = vmatmul.mubr.f32.gmra.mxu0 %v1075
    %v1143 = vpop.f32.mrf.mxu0
    %v1144 = vadd.f32 0.0, %v1143
    %v1145 = vpop.f32.mrf.mxu0
    %1146 = vdwg.mxu0
    %v1148 = vsel %vm421, %v412, 0
    %1150 = vmatprep.subr.mxu0 0.0
    %1151 = vmatpush1.msra.mxu0 0.0
    %1152 = vmatprep.subr.mxu0 0.0
    %1153 = vmatpush1.msra.mxu0 0.0
    %1154 = vmatprep.subr.mxu0 0.0
    %1155 = vmatpush1.msra.mxu0 0.0
    %1156 = vmatprep.subr.mxu0 0.0
    %1157 = vmatpush1.msra.mxu0 0.0
    %1158 = vmatprep.subr.mxu0 0.0
    %1159 = vmatpush1.msra.mxu0 0.0
    %1160 = vmatprep.subr.mxu0 0.0
    %1161 = vmatpush1.msra.mxu0 0.0
    %1162 = vmatprep.subr.mxu0 0.0
    %1163 = vmatpush1.msra.mxu0 0.0
    %1164 = vmatprep.subr.mxu0 0.0
    %1165 = vmatpush1.msra.mxu0 0.0
    %1166 = vmatprep.subr.mxu0 0.0
    %1167 = vmatpush1.msra.mxu0 0.0
    %1168 = vmatprep.subr.mxu0 0.0
    %1169 = vmatpush1.msra.mxu0 0.0
    %1170 = vmatprep.subr.mxu0 0.0
    %1171 = vmatpush1.msra.mxu0 0.0
    %1172 = vmatprep.subr.mxu0 0.0
    %1173 = vmatpush1.msra.mxu0 0.0
    %1174 = vmatprep.subr.mxu0 0.0
    %1175 = vmatpush1.msra.mxu0 0.0
    %1176 = vmatprep.subr.mxu0 0.0
    %1177 = vmatpush1.msra.mxu0 0.0
    %1178 = vmatprep.subr.mxu0 0.0
    %1179 = vmatpush1.msra.mxu0 0.0
    %1180 = vmatprep.subr.mxu0 0.0
    %1181 = vmatpush1.msra.mxu0 %v414
    %1182 = vmatprep.subr.mxu0 0.0
    %1183 = vmatpush2.msra.mxu0 0.0
    %1184 = vmatprep.subr.mxu0 0.0
    %1185 = vmatpush2.msra.mxu0 0.0
    %1186 = vmatprep.subr.mxu0 0.0
    %1187 = vmatpush2.msra.mxu0 0.0
    %1188 = vmatprep.subr.mxu0 0.0
    %1189 = vmatpush2.msra.mxu0 0.0
    %1190 = vmatprep.subr.mxu0 0.0
    %1191 = vmatpush2.msra.mxu0 0.0
    %1192 = vmatprep.subr.mxu0 0.0
    %1193 = vmatpush2.msra.mxu0 0.0
    %1194 = vmatprep.subr.mxu0 0.0
    %1195 = vmatpush2.msra.mxu0 0.0
    %1196 = vmatprep.subr.mxu0 0.0
    %1197 = vmatpush2.msra.mxu0 0.0
    %1198 = vmatprep.subr.mxu0 0.0
    %1199 = vmatpush2.msra.mxu0 0.0
    %1200 = vmatprep.subr.mxu0 0.0
    %1201 = vmatpush2.msra.mxu0 0.0
    %1202 = vmatprep.subr.mxu0 0.0
    %1203 = vmatpush2.msra.mxu0 0.0
    %1204 = vmatprep.subr.mxu0 0.0
    %1205 = vmatpush2.msra.mxu0 0.0
    %1206 = vmatprep.subr.mxu0 0.0
    %1207 = vmatpush2.msra.mxu0 0.0
    %1208 = vmatprep.subr.mxu0 0.0
    %1209 = vmatpush2.msra.mxu0 0.0
    %1210 = vmatprep.subr.mxu0 0.0
    %1211 = vmatpush2.msra.mxu0 0.0
    %1212 = vmatprep.subr.mxu0 0.0
    %1213 = vmatpush2.msra.mxu0 0.0
    %1214 = vmatprep.mubr.f32.mxu0 0.0
    %1215 = vmatmul.mubr.f32.gmra.mxu0 %v1148
    %v1216 = vpop.f32.mrf.mxu0
    %v1217 = vadd.f32 0.0, %v1216
    %v1218 = vpop.f32.mrf.mxu0
    %1219 = vdwg.mxu0
    %v1220 = vmul.f32 %v1217, %v417
    %1221 = vmatprep.subr.mxu0 0.0
    %1222 = vmatpush1.msra.mxu0 0.0
    %1223 = vmatprep.subr.mxu0 0.0
    %1224 = vmatpush1.msra.mxu0 0.0
    %1225 = vmatprep.subr.mxu0 0.0
    %1226 = vmatpush1.msra.mxu0 0.0
    %1227 = vmatprep.subr.mxu0 0.0
    %1228 = vmatpush1.msra.mxu0 0.0
    %1229 = vmatprep.subr.mxu0 0.0
    %1230 = vmatpush1.msra.mxu0 0.0
    %1231 = vmatprep.subr.mxu0 0.0
    %1232 = vmatpush1.msra.mxu0 0.0
    %1233 = vmatprep.subr.mxu0 0.0
    %1234 = vmatpush1.msra.mxu0 0.0
    %1235 = vmatprep.subr.mxu0 0.0
    %1236 = vmatpush1.msra.mxu0 0.0
    %1237 = vmatprep.subr.mxu0 0.0
    %1238 = vmatpush1.msra.mxu0 0.0
    %1239 = vmatprep.subr.mxu0 0.0
    %1240 = vmatpush1.msra.mxu0 0.0
    %1241 = vmatprep.subr.mxu0 0.0
    %1242 = vmatpush1.msra.mxu0 0.0
    %1243 = vmatprep.subr.mxu0 0.0
    %1244 = vmatpush1.msra.mxu0 0.0
    %1245 = vmatprep.subr.mxu0 0.0
    %1246 = vmatpush1.msra.mxu0 0.0
    %1247 = vmatprep.subr.mxu0 0.0
    %1248 = vmatpush1.msra.mxu0 0.0
    %1249 = vmatprep.subr.mxu0 0.0
    %1250 = vmatpush1.msra.mxu0 0.0
    %1251 = vmatprep.subr.mxu0 0.0
    %1252 = vmatpush1.msra.mxu0 %v1220
    %1253 = vmatprep.subr.mxu0 0.0
    %1254 = vmatpush2.msra.mxu0 0.0
    %1255 = vmatprep.subr.mxu0 0.0
    %1256 = vmatpush2.msra.mxu0 0.0
    %1257 = vmatprep.subr.mxu0 0.0
    %1258 = vmatpush2.msra.mxu0 0.0
    %1259 = vmatprep.subr.mxu0 0.0
    %1260 = vmatpush2.msra.mxu0 0.0
    %1261 = vmatprep.subr.mxu0 0.0
    %1262 = vmatpush2.msra.mxu0 0.0
    %1263 = vmatprep.subr.mxu0 0.0
    %1264 = vmatpush2.msra.mxu0 0.0
    %1265 = vmatprep.subr.mxu0 0.0
    %1266 = vmatpush2.msra.mxu0 0.0
    %1267 = vmatprep.subr.mxu0 0.0
    %1268 = vmatpush2.msra.mxu0 0.0
    %1269 = vmatprep.subr.mxu0 0.0
    %1270 = vmatpush2.msra.mxu0 0.0
    %1271 = vmatprep.subr.mxu0 0.0
    %1272 = vmatpush2.msra.mxu0 0.0
    %1273 = vmatprep.subr.mxu0 0.0
    %1274 = vmatpush2.msra.mxu0 0.0
    %1275 = vmatprep.subr.mxu0 0.0
    %1276 = vmatpush2.msra.mxu0 0.0
    %1277 = vmatprep.subr.mxu0 0.0
    %1278 = vmatpush2.msra.mxu0 0.0
    %1279 = vmatprep.subr.mxu0 0.0
    %1280 = vmatpush2.msra.mxu0 0.0
    %1281 = vmatprep.subr.mxu0 0.0
    %1282 = vmatpush2.msra.mxu0 0.0
    %1283 = vmatprep.subr.mxu0 0.0
    %1284 = vmatpush2.msra.mxu0 0.0
    %1285 = vmatprep.mubr.f32.mxu0 0.0
    %1286 = vmatmul.mubr.f32.gmra.mxu0 %v496
    %v1287 = vpop.f32.mrf.mxu0
    %v1288 = vadd.f32 0.0, %v1287
    %v1289 = vpop.f32.mrf.mxu0
    %1290 = vdwg.mxu0
    %1292 = vset.pattern.permute.xlu0 0
    %1293 = vperm.xlu0 %1292, %v492
    %v1294 = vpop.permute.xlu0 %1293
    %v1296 = vlaneseq
    %v1297 = vshrl.u32 %v1296, 7
    %v1298 = vsub.s32 0, %v1297
    %v1299 = vrot.slane %v565, %v1298
    %v1300 = vsub.f32 %v1294, %v1299
    %v1301 = vmul.f32 %v1300, %v1300
    %1302 = vset.pattern.permute.xlu0 1
    %1303 = vperm.xlu0 %1302, %v492
    %v1304 = vpop.permute.xlu0 %1303
    %v1306 = vlaneseq
    %v1307 = vshrl.u32 %v1306, 7
    %v1308 = vsub.s32 1, %v1307
    %v1309 = vrot.slane %v565, %v1308
    %v1310 = vsub.f32 %v1304, %v1309
    %v1311 = vmul.f32 %v1310, %v1310
    %v1312 = vadd.f32 %v1301, %v1311
    %1313 = vset.pattern.permute.xlu0 2
    %1314 = vperm.xlu0 %1313, %v492
    %v1315 = vpop.permute.xlu0 %1314
    %v1317 = vlaneseq
    %v1318 = vshrl.u32 %v1317, 7
    %v1319 = vsub.s32 2, %v1318
    %v1320 = vrot.slane %v565, %v1319
    %v1321 = vsub.f32 %v1315, %v1320
    %v1322 = vmul.f32 %v1321, %v1321
    %v1323 = vadd.f32 %v1312, %v1322
    %1324 = vset.pattern.permute.xlu0 3
    %1325 = vperm.xlu0 %1324, %v492
    %v1326 = vpop.permute.xlu0 %1325
    %v1328 = vlaneseq
    %v1329 = vshrl.u32 %v1328, 7
    %v1330 = vsub.s32 3, %v1329
    %v1331 = vrot.slane %v565, %v1330
    %v1332 = vsub.f32 %v1326, %v1331
    %v1333 = vmul.f32 %v1332, %v1332
    %v1334 = vadd.f32 %v1323, %v1333
    %v1335 = vmul.f32 %v1334, -500000.0
    %v1336 = vmul.f32 %v1335, 1.442695
    %v1337 = vpow.pop %v1336
    %v1338 = vmul.f32 %v1334, -50000.0
    %v1339 = vmul.f32 %v1338, 1.442695
    %v1340 = vpow.pop %v1339
    %v1341 = vadd.f32 %v1337, %v1340
    %v1342 = vmul.f32 %v1334, -5000.0
    %v1343 = vmul.f32 %v1342, 1.442695
    %v1344 = vpow.pop %v1343
    %v1345 = vadd.f32 %v1341, %v1344
    %v1346 = vmul.f32 %v1334, -500.0
    %v1347 = vmul.f32 %v1346, 1.442695
    %v1348 = vpow.pop %v1347
    %v1349 = vadd.f32 %v1345, %v1348
    %v1350 = vmul.f32 %v1334, -50.0
    %v1351 = vmul.f32 %v1350, 1.442695
    %v1352 = vpow.pop %v1351
    %v1353 = vadd.f32 %v1349, %v1352
    %v1354 = vmul.f32 %v1334, -5.0
    %v1355 = vmul.f32 %v1354, 1.442695
    %v1356 = vpow.pop %v1355
    %v1357 = vadd.f32 %v1353, %v1356
    %v1358 = vmul.f32 %v1334, -0.5
    %v1359 = vmul.f32 %v1358, 1.442695
    %v1360 = vpow.pop %v1359
    %v1361 = vadd.f32 %v1357, %v1360
    %v1362 = vmul.f32 %v1334, -0.1
    %v1363 = vmul.f32 %v1362, 1.442695
    %v1364 = vpow.pop %v1363
    %v1365 = vadd.f32 %v1361, %v1364
    %v1366 = vmul.f32 %v1334, -0.05
    %v1367 = vmul.f32 %v1366, 1.442695
    %v1368 = vpow.pop %v1367
    %v1369 = vadd.f32 %v1365, %v1368
    %v1370 = vmul.f32 %v1334, -0.033333335
    %v1371 = vmul.f32 %v1370, 1.442695
    %v1372 = vpow.pop %v1371
    %v1373 = vadd.f32 %v1369, %v1372
    %v1374 = vmul.f32 %v1334, -0.025
    %v1375 = vmul.f32 %v1374, 1.442695
    %v1376 = vpow.pop %v1375
    %v1377 = vadd.f32 %v1373, %v1376
    %v1378 = vmul.f32 %v1334, -0.02
    %v1379 = vmul.f32 %v1378, 1.442695
    %v1380 = vpow.pop %v1379
    %v1381 = vadd.f32 %v1377, %v1380
    %v1382 = vmul.f32 %v1334, -0.016666668
    %v1383 = vmul.f32 %v1382, 1.442695
    %v1384 = vpow.pop %v1383
    %v1385 = vadd.f32 %v1381, %v1384
    %v1386 = vmul.f32 %v1334, -0.014285714
    %v1387 = vmul.f32 %v1386, 1.442695
    %v1388 = vpow.pop %v1387
    %v1389 = vadd.f32 %v1385, %v1388
    %v1390 = vmul.f32 %v1334, -0.005
    %v1391 = vmul.f32 %v1390, 1.442695
    %v1392 = vpow.pop %v1391
    %v1393 = vadd.f32 %v1389, %v1392
    %v1394 = vmul.f32 %v1334, -0.0005
    %v1395 = vmul.f32 %v1394, 1.442695
    %v1396 = vpow.pop %v1395
    %v1397 = vadd.f32 %v1393, %v1396
    %v1398 = vmul.f32 %v1334, -5e-05
    %v1399 = vmul.f32 %v1398, 1.442695
    %v1400 = vpow.pop %v1399
    %v1401 = vadd.f32 %v1397, %v1400
    %v1402 = vmul.f32 %v1334, -5e-06
    %v1403 = vmul.f32 %v1402, 1.442695
    %v1404 = vpow.pop %v1403
    %v1405 = vadd.f32 %v1401, %v1404
    %v1406 = vmul.f32 %v1334, -5e-07
    %v1407 = vmul.f32 %v1406, 1.442695
    %v1408 = vpow.pop %v1407
    %v1409 = vadd.f32 %v1405, %v1408
    %v1410 = vsel %vm421, %v1409, 0.0
    %1411 = vadd.xlane.f32.xlu0 %v1410
    %v1412 = vpop.xlane.xlu0 %1411
    %v1413 = vrot.slane %v1412, 4
    %v1414 = vadd.f32 %v1412, %v1413
    %v1415 = vrot.slane %v1414, 2
    %v1416 = vadd.f32 %v1414, %v1415
    %v1417 = vrot.slane %v1416, 1
    %v1418 = vadd.f32 %v1416, %v1417
    %s1419 = vtos %v1418
    %1421 = vset.pattern.permute.xlu0 0
    %1422 = vperm.xlu0 %1421, %v639
    %v1423 = vpop.permute.xlu0 %1422
    %v1425 = vlaneseq
    %v1426 = vshrl.u32 %v1425, 7
    %v1427 = vsub.s32 0, %v1426
    %v1428 = vrot.slane %v709, %v1427
    %v1429 = vsub.f32 %v1423, %v1428
    %v1430 = vmul.f32 %v1429, %v1429
    %1431 = vset.pattern.permute.xlu0 1
    %1432 = vperm.xlu0 %1431, %v639
    %v1433 = vpop.permute.xlu0 %1432
    %v1435 = vlaneseq
    %v1436 = vshrl.u32 %v1435, 7
    %v1437 = vsub.s32 1, %v1436
    %v1438 = vrot.slane %v709, %v1437
    %v1439 = vsub.f32 %v1433, %v1438
    %v1440 = vmul.f32 %v1439, %v1439
    %v1441 = vadd.f32 %v1430, %v1440
    %1442 = vset.pattern.permute.xlu0 2
    %1443 = vperm.xlu0 %1442, %v639
    %v1444 = vpop.permute.xlu0 %1443
    %v1446 = vlaneseq
    %v1447 = vshrl.u32 %v1446, 7
    %v1448 = vsub.s32 2, %v1447
    %v1449 = vrot.slane %v709, %v1448
    %v1450 = vsub.f32 %v1444, %v1449
    %v1451 = vmul.f32 %v1450, %v1450
    %v1452 = vadd.f32 %v1441, %v1451
    %1453 = vset.pattern.permute.xlu0 3
    %1454 = vperm.xlu0 %1453, %v639
    %v1455 = vpop.permute.xlu0 %1454
    %v1457 = vlaneseq
    %v1458 = vshrl.u32 %v1457, 7
    %v1459 = vsub.s32 3, %v1458
    %v1460 = vrot.slane %v709, %v1459
    %v1461 = vsub.f32 %v1455, %v1460
    %v1462 = vmul.f32 %v1461, %v1461
    %v1463 = vadd.f32 %v1452, %v1462
    %v1464 = vmul.f32 %v1463, -500000.0
    %v1465 = vmul.f32 %v1464, 1.442695
    %v1466 = vpow.pop %v1465
    %v1467 = vmul.f32 %v1463, -50000.0
    %v1468 = vmul.f32 %v1467, 1.442695
    %v1469 = vpow.pop %v1468
    %v1470 = vadd.f32 %v1466, %v1469
    %v1471 = vmul.f32 %v1463, -5000.0
    %v1472 = vmul.f32 %v1471, 1.442695
    %v1473 = vpow.pop %v1472
    %v1474 = vadd.f32 %v1470, %v1473
    %v1475 = vmul.f32 %v1463, -500.0
    %v1476 = vmul.f32 %v1475, 1.442695
    %v1477 = vpow.pop %v1476
    %v1478 = vadd.f32 %v1474, %v1477
    %v1479 = vmul.f32 %v1463, -50.0
    %v1480 = vmul.f32 %v1479, 1.442695
    %v1481 = vpow.pop %v1480
    %v1482 = vadd.f32 %v1478, %v1481
    %v1483 = vmul.f32 %v1463, -5.0
    %v1484 = vmul.f32 %v1483, 1.442695
    %v1485 = vpow.pop %v1484
    %v1486 = vadd.f32 %v1482, %v1485
    %v1487 = vmul.f32 %v1463, -0.5
    %v1488 = vmul.f32 %v1487, 1.442695
    %v1489 = vpow.pop %v1488
    %v1490 = vadd.f32 %v1486, %v1489
    %v1491 = vmul.f32 %v1463, -0.1
    %v1492 = vmul.f32 %v1491, 1.442695
    %v1493 = vpow.pop %v1492
    %v1494 = vadd.f32 %v1490, %v1493
    %v1495 = vmul.f32 %v1463, -0.05
    %v1496 = vmul.f32 %v1495, 1.442695
    %v1497 = vpow.pop %v1496
    %v1498 = vadd.f32 %v1494, %v1497
    %v1499 = vmul.f32 %v1463, -0.033333335
    %v1500 = vmul.f32 %v1499, 1.442695
    %v1501 = vpow.pop %v1500
    %v1502 = vadd.f32 %v1498, %v1501
    %v1503 = vmul.f32 %v1463, -0.025
    %v1504 = vmul.f32 %v1503, 1.442695
    %v1505 = vpow.pop %v1504
    %v1506 = vadd.f32 %v1502, %v1505
    %v1507 = vmul.f32 %v1463, -0.02
    %v1508 = vmul.f32 %v1507, 1.442695
    %v1509 = vpow.pop %v1508
    %v1510 = vadd.f32 %v1506, %v1509
    %v1511 = vmul.f32 %v1463, -0.016666668
    %v1512 = vmul.f32 %v1511, 1.442695
    %v1513 = vpow.pop %v1512
    %v1514 = vadd.f32 %v1510, %v1513
    %v1515 = vmul.f32 %v1463, -0.014285714
    %v1516 = vmul.f32 %v1515, 1.442695
    %v1517 = vpow.pop %v1516
    %v1518 = vadd.f32 %v1514, %v1517
    %v1519 = vmul.f32 %v1463, -0.005
    %v1520 = vmul.f32 %v1519, 1.442695
    %v1521 = vpow.pop %v1520
    %v1522 = vadd.f32 %v1518, %v1521
    %v1523 = vmul.f32 %v1463, -0.0005
    %v1524 = vmul.f32 %v1523, 1.442695
    %v1525 = vpow.pop %v1524
    %v1526 = vadd.f32 %v1522, %v1525
    %v1527 = vmul.f32 %v1463, -5e-05
    %v1528 = vmul.f32 %v1527, 1.442695
    %v1529 = vpow.pop %v1528
    %v1530 = vadd.f32 %v1526, %v1529
    %v1531 = vmul.f32 %v1463, -5e-06
    %v1532 = vmul.f32 %v1531, 1.442695
    %v1533 = vpow.pop %v1532
    %v1534 = vadd.f32 %v1530, %v1533
    %v1535 = vmul.f32 %v1463, -5e-07
    %v1536 = vmul.f32 %v1535, 1.442695
    %v1537 = vpow.pop %v1536
    %v1538 = vadd.f32 %v1534, %v1537
    %v1539 = vsel %vm421, %v1538, 0.0
    %1540 = vadd.xlane.f32.xlu0 %v1539
    %v1541 = vpop.xlane.xlu0 %1540
    %v1542 = vrot.slane %v1541, 4
    %v1543 = vadd.f32 %v1541, %v1542
    %v1544 = vrot.slane %v1543, 2
    %v1545 = vadd.f32 %v1543, %v1544
    %v1546 = vrot.slane %v1545, 1
    %v1547 = vadd.f32 %v1545, %v1546
    %s1548 = vtos %v1547
    %v1549 = vsub.f32 %v1294, %v1428
    %v1550 = vmul.f32 %v1549, %v1549
    %v1551 = vsub.f32 %v1304, %v1438
    %v1552 = vmul.f32 %v1551, %v1551
    %v1553 = vadd.f32 %v1550, %v1552
    %v1554 = vsub.f32 %v1315, %v1449
    %v1555 = vmul.f32 %v1554, %v1554
    %v1556 = vadd.f32 %v1553, %v1555
    %v1557 = vsub.f32 %v1326, %v1460
    %v1558 = vmul.f32 %v1557, %v1557
    %v1559 = vadd.f32 %v1556, %v1558
    %v1560 = vmul.f32 %v1559, -500000.0
    %v1561 = vmul.f32 %v1560, 1.442695
    %v1562 = vpow.pop %v1561
    %v1563 = vmul.f32 %v1559, -50000.0
    %v1564 = vmul.f32 %v1563, 1.442695
    %v1565 = vpow.pop %v1564
    %v1566 = vadd.f32 %v1562, %v1565
    %v1567 = vmul.f32 %v1559, -5000.0
    %v1568 = vmul.f32 %v1567, 1.442695
    %v1569 = vpow.pop %v1568
    %v1570 = vadd.f32 %v1566, %v1569
    %v1571 = vmul.f32 %v1559, -500.0
    %v1572 = vmul.f32 %v1571, 1.442695
    %v1573 = vpow.pop %v1572
    %v1574 = vadd.f32 %v1570, %v1573
    %v1575 = vmul.f32 %v1559, -50.0
    %v1576 = vmul.f32 %v1575, 1.442695
    %v1577 = vpow.pop %v1576
    %v1578 = vadd.f32 %v1574, %v1577
    %v1579 = vmul.f32 %v1559, -5.0
    %v1580 = vmul.f32 %v1579, 1.442695
    %v1581 = vpow.pop %v1580
    %v1582 = vadd.f32 %v1578, %v1581
    %v1583 = vmul.f32 %v1559, -0.5
    %v1584 = vmul.f32 %v1583, 1.442695
    %v1585 = vpow.pop %v1584
    %v1586 = vadd.f32 %v1582, %v1585
    %v1587 = vmul.f32 %v1559, -0.1
    %v1588 = vmul.f32 %v1587, 1.442695
    %v1589 = vpow.pop %v1588
    %v1590 = vadd.f32 %v1586, %v1589
    %v1591 = vmul.f32 %v1559, -0.05
    %v1592 = vmul.f32 %v1591, 1.442695
    %v1593 = vpow.pop %v1592
    %v1594 = vadd.f32 %v1590, %v1593
    %v1595 = vmul.f32 %v1559, -0.033333335
    %v1596 = vmul.f32 %v1595, 1.442695
    %v1597 = vpow.pop %v1596
    %v1598 = vadd.f32 %v1594, %v1597
    %v1599 = vmul.f32 %v1559, -0.025
    %v1600 = vmul.f32 %v1599, 1.442695
    %v1601 = vpow.pop %v1600
    %v1602 = vadd.f32 %v1598, %v1601
    %v1603 = vmul.f32 %v1559, -0.02
    %v1604 = vmul.f32 %v1603, 1.442695
    %v1605 = vpow.pop %v1604
    %v1606 = vadd.f32 %v1602, %v1605
    %v1607 = vmul.f32 %v1559, -0.016666668
    %v1608 = vmul.f32 %v1607, 1.442695
    %v1609 = vpow.pop %v1608
    %v1610 = vadd.f32 %v1606, %v1609
    %v1611 = vmul.f32 %v1559, -0.014285714
    %v1612 = vmul.f32 %v1611, 1.442695
    %v1613 = vpow.pop %v1612
    %v1614 = vadd.f32 %v1610, %v1613
    %v1615 = vmul.f32 %v1559, -0.005
    %v1616 = vmul.f32 %v1615, 1.442695
    %v1617 = vpow.pop %v1616
    %v1618 = vadd.f32 %v1614, %v1617
    %v1619 = vmul.f32 %v1559, -0.0005
    %v1620 = vmul.f32 %v1619, 1.442695
    %v1621 = vpow.pop %v1620
    %v1622 = vadd.f32 %v1618, %v1621
    %v1623 = vmul.f32 %v1559, -5e-05
    %v1624 = vmul.f32 %v1623, 1.442695
    %v1625 = vpow.pop %v1624
    %v1626 = vadd.f32 %v1622, %v1625
    %v1627 = vmul.f32 %v1559, -5e-06
    %v1628 = vmul.f32 %v1627, 1.442695
    %v1629 = vpow.pop %v1628
    %v1630 = vadd.f32 %v1626, %v1629
    %v1631 = vmul.f32 %v1559, -5e-07
    %v1632 = vmul.f32 %v1631, 1.442695
    %v1633 = vpow.pop %v1632
    %v1634 = vadd.f32 %v1630, %v1633
    %v1635 = vsel %vm421, %v1634, 0.0
    %1636 = vadd.xlane.f32.xlu0 %v1635
    %v1637 = vpop.xlane.xlu0 %1636
    %v1638 = vrot.slane %v1637, 4
    %v1639 = vadd.f32 %v1637, %v1638
    %v1640 = vrot.slane %v1639, 2
    %v1641 = vadd.f32 %v1639, %v1640
    %v1642 = vrot.slane %v1641, 1
    %v1643 = vadd.f32 %v1641, %v1642
    %s1644 = vtos %v1643
    %s1645 = sadd.f32 %s1419, %s1548
    %s1646 = smul.f32 %s1644, 2.0
    %s1647 = ssub.f32 %s1645, %s1646
    %v1648 = vrcp.pop 64.0
    %s1649 = vtos %v1648
    %s1650 = smul.f32 %s1647, %s1649
    %s1651 = scalar_lea.smem [#allocation11], 0
    %1652 = sst [smem:[%s1651]] %s1650
    %1654 = vset.pattern.permute.xlu0 0
    %1655 = vperm.xlu0 %1654, %v856
    %v1656 = vpop.permute.xlu0 %1655
    %v1658 = vlaneseq
    %v1659 = vshrl.u32 %v1658, 7
    %v1660 = vsub.s32 0, %v1659
    %v1661 = vrot.slane %v1000, %v1660
    %v1662 = vsub.f32 %v1656, %v1661
    %v1663 = vmul.f32 %v1662, %v1662
    %1664 = vset.pattern.permute.xlu0 1
    %1665 = vperm.xlu0 %1664, %v856
    %v1666 = vpop.permute.xlu0 %1665
    %v1668 = vlaneseq
    %v1669 = vshrl.u32 %v1668, 7
    %v1670 = vsub.s32 1, %v1669
    %v1671 = vrot.slane %v1000, %v1670
    %v1672 = vsub.f32 %v1666, %v1671
    %v1673 = vmul.f32 %v1672, %v1672
    %v1674 = vadd.f32 %v1663, %v1673
    %1675 = vset.pattern.permute.xlu0 2
    %1676 = vperm.xlu0 %1675, %v856
    %v1677 = vpop.permute.xlu0 %1676
    %v1679 = vlaneseq
    %v1680 = vshrl.u32 %v1679, 7
    %v1681 = vsub.s32 2, %v1680
    %v1682 = vrot.slane %v1000, %v1681
    %v1683 = vsub.f32 %v1677, %v1682
    %v1684 = vmul.f32 %v1683, %v1683
    %v1685 = vadd.f32 %v1674, %v1684
    %1686 = vset.pattern.permute.xlu0 3
    %1687 = vperm.xlu0 %1686, %v856
    %v1688 = vpop.permute.xlu0 %1687
    %v1690 = vlaneseq
    %v1691 = vshrl.u32 %v1690, 7
    %v1692 = vsub.s32 3, %v1691
    %v1693 = vrot.slane %v1000, %v1692
    %v1694 = vsub.f32 %v1688, %v1693
    %v1695 = vmul.f32 %v1694, %v1694
    %v1696 = vadd.f32 %v1685, %v1695
    %v1697 = vmul.f32 %v1696, -500000.0
    %v1698 = vmul.f32 %v1697, 1.442695
    %v1699 = vpow.pop %v1698
    %v1700 = vmul.f32 %v1696, -50000.0
    %v1701 = vmul.f32 %v1700, 1.442695
    %v1702 = vpow.pop %v1701
    %v1703 = vadd.f32 %v1699, %v1702
    %v1704 = vmul.f32 %v1696, -5000.0
    %v1705 = vmul.f32 %v1704, 1.442695
    %v1706 = vpow.pop %v1705
    %v1707 = vadd.f32 %v1703, %v1706
    %v1708 = vmul.f32 %v1696, -500.0
    %v1709 = vmul.f32 %v1708, 1.442695
    %v1710 = vpow.pop %v1709
    %v1711 = vadd.f32 %v1707, %v1710
    %v1712 = vmul.f32 %v1696, -50.0
    %v1713 = vmul.f32 %v1712, 1.442695
    %v1714 = vpow.pop %v1713
    %v1715 = vadd.f32 %v1711, %v1714
    %v1716 = vmul.f32 %v1696, -5.0
    %v1717 = vmul.f32 %v1716, 1.442695
    %v1718 = vpow.pop %v1717
    %v1719 = vadd.f32 %v1715, %v1718
    %v1720 = vmul.f32 %v1696, -0.5
    %v1721 = vmul.f32 %v1720, 1.442695
    %v1722 = vpow.pop %v1721
    %v1723 = vadd.f32 %v1719, %v1722
    %v1724 = vmul.f32 %v1696, -0.1
    %v1725 = vmul.f32 %v1724, 1.442695
    %v1726 = vpow.pop %v1725
    %v1727 = vadd.f32 %v1723, %v1726
    %v1728 = vmul.f32 %v1696, -0.05
    %v1729 = vmul.f32 %v1728, 1.442695
    %v1730 = vpow.pop %v1729
    %v1731 = vadd.f32 %v1727, %v1730
    %v1732 = vmul.f32 %v1696, -0.033333335
    %v1733 = vmul.f32 %v1732, 1.442695
    %v1734 = vpow.pop %v1733
    %v1735 = vadd.f32 %v1731, %v1734
    %v1736 = vmul.f32 %v1696, -0.025
    %v1737 = vmul.f32 %v1736, 1.442695
    %v1738 = vpow.pop %v1737
    %v1739 = vadd.f32 %v1735, %v1738
    %v1740 = vmul.f32 %v1696, -0.02
    %v1741 = vmul.f32 %v1740, 1.442695
    %v1742 = vpow.pop %v1741
    %v1743 = vadd.f32 %v1739, %v1742
    %v1744 = vmul.f32 %v1696, -0.016666668
    %v1745 = vmul.f32 %v1744, 1.442695
    %v1746 = vpow.pop %v1745
    %v1747 = vadd.f32 %v1743, %v1746
    %v1748 = vmul.f32 %v1696, -0.014285714
    %v1749 = vmul.f32 %v1748, 1.442695
    %v1750 = vpow.pop %v1749
    %v1751 = vadd.f32 %v1747, %v1750
    %v1752 = vmul.f32 %v1696, -0.005
    %v1753 = vmul.f32 %v1752, 1.442695
    %v1754 = vpow.pop %v1753
    %v1755 = vadd.f32 %v1751, %v1754
    %v1756 = vmul.f32 %v1696, -0.0005
    %v1757 = vmul.f32 %v1756, 1.442695
    %v1758 = vpow.pop %v1757
    %v1759 = vadd.f32 %v1755, %v1758
    %v1760 = vmul.f32 %v1696, -5e-05
    %v1761 = vmul.f32 %v1760, 1.442695
    %v1762 = vpow.pop %v1761
    %v1763 = vadd.f32 %v1759, %v1762
    %v1764 = vmul.f32 %v1696, -5e-06
    %v1765 = vmul.f32 %v1764, 1.442695
    %v1766 = vpow.pop %v1765
    %v1767 = vadd.f32 %v1763, %v1766
    %v1768 = vmul.f32 %v1696, -5e-07
    %v1769 = vmul.f32 %v1768, 1.442695
    %v1770 = vpow.pop %v1769
    %v1771 = vadd.f32 %v1767, %v1770
    %v1772 = vsel %vm421, %v1771, 0.0
    %1773 = vadd.xlane.f32.xlu0 %v1772
    %v1774 = vpop.xlane.xlu0 %1773
    %v1775 = vrot.slane %v1774, 4
    %v1776 = vadd.f32 %v1774, %v1775
    %v1777 = vrot.slane %v1776, 2
    %v1778 = vadd.f32 %v1776, %v1777
    %v1779 = vrot.slane %v1778, 1
    %v1780 = vadd.f32 %v1778, %v1779
    %s1781 = vtos %v1780
    %1783 = vset.pattern.permute.xlu0 0
    %1784 = vperm.xlu0 %1783, %v1144
    %v1785 = vpop.permute.xlu0 %1784
    %v1787 = vlaneseq
    %v1788 = vshrl.u32 %v1787, 7
    %v1789 = vsub.s32 0, %v1788
    %v1790 = vrot.slane %v1288, %v1789
    %v1791 = vsub.f32 %v1785, %v1790
    %v1792 = vmul.f32 %v1791, %v1791
    %1793 = vset.pattern.permute.xlu0 1
    %1794 = vperm.xlu0 %1793, %v1144
    %v1795 = vpop.permute.xlu0 %1794
    %v1797 = vlaneseq
    %v1798 = vshrl.u32 %v1797, 7
    %v1799 = vsub.s32 1, %v1798
    %v1800 = vrot.slane %v1288, %v1799
    %v1801 = vsub.f32 %v1795, %v1800
    %v1802 = vmul.f32 %v1801, %v1801
    %v1803 = vadd.f32 %v1792, %v1802
    %1804 = vset.pattern.permute.xlu0 2
    %1805 = vperm.xlu0 %1804, %v1144
    %v1806 = vpop.permute.xlu0 %1805
    %v1808 = vlaneseq
    %v1809 = vshrl.u32 %v1808, 7
    %v1810 = vsub.s32 2, %v1809
    %v1811 = vrot.slane %v1288, %v1810
    %v1812 = vsub.f32 %v1806, %v1811
    %v1813 = vmul.f32 %v1812, %v1812
    %v1814 = vadd.f32 %v1803, %v1813
    %1815 = vset.pattern.permute.xlu0 3
    %1816 = vperm.xlu0 %1815, %v1144
    %v1817 = vpop.permute.xlu0 %1816
    %v1819 = vlaneseq
    %v1820 = vshrl.u32 %v1819, 7
    %v1821 = vsub.s32 3, %v1820
    %v1822 = vrot.slane %v1288, %v1821
    %v1823 = vsub.f32 %v1817, %v1822
    %v1824 = vmul.f32 %v1823, %v1823
    %v1825 = vadd.f32 %v1814, %v1824
    %v1826 = vmul.f32 %v1825, -500000.0
    %v1827 = vmul.f32 %v1826, 1.442695
    %v1828 = vpow.pop %v1827
    %v1829 = vmul.f32 %v1825, -50000.0
    %v1830 = vmul.f32 %v1829, 1.442695
    %v1831 = vpow.pop %v1830
    %v1832 = vadd.f32 %v1828, %v1831
    %v1833 = vmul.f32 %v1825, -5000.0
    %v1834 = vmul.f32 %v1833, 1.442695
    %v1835 = vpow.pop %v1834
    %v1836 = vadd.f32 %v1832, %v1835
    %v1837 = vmul.f32 %v1825, -500.0
    %v1838 = vmul.f32 %v1837, 1.442695
    %v1839 = vpow.pop %v1838
    %v1840 = vadd.f32 %v1836, %v1839
    %v1841 = vmul.f32 %v1825, -50.0
    %v1842 = vmul.f32 %v1841, 1.442695
    %v1843 = vpow.pop %v1842
    %v1844 = vadd.f32 %v1840, %v1843
    %v1845 = vmul.f32 %v1825, -5.0
    %v1846 = vmul.f32 %v1845, 1.442695
    %v1847 = vpow.pop %v1846
    %v1848 = vadd.f32 %v1844, %v1847
    %v1849 = vmul.f32 %v1825, -0.5
    %v1850 = vmul.f32 %v1849, 1.442695
    %v1851 = vpow.pop %v1850
    %v1852 = vadd.f32 %v1848, %v1851
    %v1853 = vmul.f32 %v1825, -0.1
    %v1854 = vmul.f32 %v1853, 1.442695
    %v1855 = vpow.pop %v1854
    %v1856 = vadd.f32 %v1852, %v1855
    %v1857 = vmul.f32 %v1825, -0.05
    %v1858 = vmul.f32 %v1857, 1.442695
    %v1859 = vpow.pop %v1858
    %v1860 = vadd.f32 %v1856, %v1859
    %v1861 = vmul.f32 %v1825, -0.033333335
    %v1862 = vmul.f32 %v1861, 1.442695
    %v1863 = vpow.pop %v1862
    %v1864 = vadd.f32 %v1860, %v1863
    %v1865 = vmul.f32 %v1825, -0.025
    %v1866 = vmul.f32 %v1865, 1.442695
    %v1867 = vpow.pop %v1866
    %v1868 = vadd.f32 %v1864, %v1867
    %v1869 = vmul.f32 %v1825, -0.02
    %v1870 = vmul.f32 %v1869, 1.442695
    %v1871 = vpow.pop %v1870
    %v1872 = vadd.f32 %v1868, %v1871
    %v1873 = vmul.f32 %v1825, -0.016666668
    %v1874 = vmul.f32 %v1873, 1.442695
    %v1875 = vpow.pop %v1874
    %v1876 = vadd.f32 %v1872, %v1875
    %v1877 = vmul.f32 %v1825, -0.014285714
    %v1878 = vmul.f32 %v1877, 1.442695
    %v1879 = vpow.pop %v1878
    %v1880 = vadd.f32 %v1876, %v1879
    %v1881 = vmul.f32 %v1825, -0.005
    %v1882 = vmul.f32 %v1881, 1.442695
    %v1883 = vpow.pop %v1882
    %v1884 = vadd.f32 %v1880, %v1883
    %v1885 = vmul.f32 %v1825, -0.0005
    %v1886 = vmul.f32 %v1885, 1.442695
    %v1887 = vpow.pop %v1886
    %v1888 = vadd.f32 %v1884, %v1887
    %v1889 = vmul.f32 %v1825, -5e-05
    %v1890 = vmul.f32 %v1889, 1.442695
    %v1891 = vpow.pop %v1890
    %v1892 = vadd.f32 %v1888, %v1891
    %v1893 = vmul.f32 %v1825, -5e-06
    %v1894 = vmul.f32 %v1893, 1.442695
    %v1895 = vpow.pop %v1894
    %v1896 = vadd.f32 %v1892, %v1895
    %v1897 = vmul.f32 %v1825, -5e-07
    %v1898 = vmul.f32 %v1897, 1.442695
    %v1899 = vpow.pop %v1898
    %v1900 = vadd.f32 %v1896, %v1899
    %v1901 = vsel %vm421, %v1900, 0.0
    %1902 = vadd.xlane.f32.xlu0 %v1901
    %v1903 = vpop.xlane.xlu0 %1902
    %v1904 = vrot.slane %v1903, 4
    %v1905 = vadd.f32 %v1903, %v1904
    %v1906 = vrot.slane %v1905, 2
    %v1907 = vadd.f32 %v1905, %v1906
    %v1908 = vrot.slane %v1907, 1
    %v1909 = vadd.f32 %v1907, %v1908
    %s1910 = vtos %v1909
    %v1911 = vsub.f32 %v1656, %v1790
    %v1912 = vmul.f32 %v1911, %v1911
    %v1913 = vsub.f32 %v1666, %v1800
    %v1914 = vmul.f32 %v1913, %v1913
    %v1915 = vadd.f32 %v1912, %v1914
    %v1916 = vsub.f32 %v1677, %v1811
    %v1917 = vmul.f32 %v1916, %v1916
    %v1918 = vadd.f32 %v1915, %v1917
    %v1919 = vsub.f32 %v1688, %v1822
    %v1920 = vmul.f32 %v1919, %v1919
    %v1921 = vadd.f32 %v1918, %v1920
    %v1922 = vmul.f32 %v1921, -500000.0
    %v1923 = vmul.f32 %v1922, 1.442695
    %v1924 = vpow.pop %v1923
    %v1925 = vmul.f32 %v1921, -50000.0
    %v1926 = vmul.f32 %v1925, 1.442695
    %v1927 = vpow.pop %v1926
    %v1928 = vadd.f32 %v1924, %v1927
    %v1929 = vmul.f32 %v1921, -5000.0
    %v1930 = vmul.f32 %v1929, 1.442695
    %v1931 = vpow.pop %v1930
    %v1932 = vadd.f32 %v1928, %v1931
    %v1933 = vmul.f32 %v1921, -500.0
    %v1934 = vmul.f32 %v1933, 1.442695
    %v1935 = vpow.pop %v1934
    %v1936 = vadd.f32 %v1932, %v1935
    %v1937 = vmul.f32 %v1921, -50.0
    %v1938 = vmul.f32 %v1937, 1.442695
    %v1939 = vpow.pop %v1938
    %v1940 = vadd.f32 %v1936, %v1939
    %v1941 = vmul.f32 %v1921, -5.0
    %v1942 = vmul.f32 %v1941, 1.442695
    %v1943 = vpow.pop %v1942
    %v1944 = vadd.f32 %v1940, %v1943
    %v1945 = vmul.f32 %v1921, -0.5
    %v1946 = vmul.f32 %v1945, 1.442695
    %v1947 = vpow.pop %v1946
    %v1948 = vadd.f32 %v1944, %v1947
    %v1949 = vmul.f32 %v1921, -0.1
    %v1950 = vmul.f32 %v1949, 1.442695
    %v1951 = vpow.pop %v1950
    %v1952 = vadd.f32 %v1948, %v1951
    %v1953 = vmul.f32 %v1921, -0.05
    %v1954 = vmul.f32 %v1953, 1.442695
    %v1955 = vpow.pop %v1954
    %v1956 = vadd.f32 %v1952, %v1955
    %v1957 = vmul.f32 %v1921, -0.033333335
    %v1958 = vmul.f32 %v1957, 1.442695
    %v1959 = vpow.pop %v1958
    %v1960 = vadd.f32 %v1956, %v1959
    %v1961 = vmul.f32 %v1921, -0.025
    %v1962 = vmul.f32 %v1961, 1.442695
    %v1963 = vpow.pop %v1962
    %v1964 = vadd.f32 %v1960, %v1963
    %v1965 = vmul.f32 %v1921, -0.02
    %v1966 = vmul.f32 %v1965, 1.442695
    %v1967 = vpow.pop %v1966
    %v1968 = vadd.f32 %v1964, %v1967
    %v1969 = vmul.f32 %v1921, -0.016666668
    %v1970 = vmul.f32 %v1969, 1.442695
    %v1971 = vpow.pop %v1970
    %v1972 = vadd.f32 %v1968, %v1971
    %v1973 = vmul.f32 %v1921, -0.014285714
    %v1974 = vmul.f32 %v1973, 1.442695
    %v1975 = vpow.pop %v1974
    %v1976 = vadd.f32 %v1972, %v1975
    %v1977 = vmul.f32 %v1921, -0.005
    %v1978 = vmul.f32 %v1977, 1.442695
    %v1979 = vpow.pop %v1978
    %v1980 = vadd.f32 %v1976, %v1979
    %v1981 = vmul.f32 %v1921, -0.0005
    %v1982 = vmul.f32 %v1981, 1.442695
    %v1983 = vpow.pop %v1982
    %v1984 = vadd.f32 %v1980, %v1983
    %v1985 = vmul.f32 %v1921, -5e-05
    %v1986 = vmul.f32 %v1985, 1.442695
    %v1987 = vpow.pop %v1986
    %v1988 = vadd.f32 %v1984, %v1987
    %v1989 = vmul.f32 %v1921, -5e-06
    %v1990 = vmul.f32 %v1989, 1.442695
    %v1991 = vpow.pop %v1990
    %v1992 = vadd.f32 %v1988, %v1991
    %v1993 = vmul.f32 %v1921, -5e-07
    %v1994 = vmul.f32 %v1993, 1.442695
    %v1995 = vpow.pop %v1994
    %v1996 = vadd.f32 %v1992, %v1995
    %v1997 = vsel %vm421, %v1996, 0.0
    %1998 = vadd.xlane.f32.xlu0 %v1997
    %v1999 = vpop.xlane.xlu0 %1998
    %v2000 = vrot.slane %v1999, 4
    %v2001 = vadd.f32 %v1999, %v2000
    %v2002 = vrot.slane %v2001, 2
    %v2003 = vadd.f32 %v2001, %v2002
    %v2004 = vrot.slane %v2003, 1
    %v2005 = vadd.f32 %v2003, %v2004
    %s2006 = vtos %v2005
    %s2007 = sadd.f32 %s1781, %s1910
    %s2008 = smul.f32 %s2006, 2.0
    %s2009 = ssub.f32 %s2007, %s2008
    %v2010 = vrcp.pop 64.0
    %s2011 = vtos %v2010
    %s2012 = smul.f32 %s2009, %s2011
    %s2013 = scalar_lea.smem [#allocation11], 1
    %2014 = sst [smem:[%s2013]] %s2012
    // Predicated region
    $region58: #{tpu_custom_call.1} parent=1 // pred_check
      _
    $region59: #{tpu_custom_call.1} parent=1 // pred_check_branch
      %2016 = sbr.rel (0) target = $region61
    $region60: #{tpu_custom_call.1} parent=1 // pred_region
      %s2018 = ssub.s32 16, 16
      %2019 = vsyncadd [#allocation4], %s2018
      %2022 = dma.smem_to_hbm [#allocation11], 16, %s9, [#allocation4]
    $region61: #{tpu_custom_call.1} parent=1 // pred_fallthru
      _
    // Predicated region
    $region62: #{tpu_custom_call.1} parent=1 // pred_check
      _
    $region63: #{tpu_custom_call.1} parent=1 // pred_check_branch
      %2024 = sbr.rel (0) target = $region65
    $region64: #{tpu_custom_call.1} parent=1 // pred_region
      %2025 = dma.done [#allocation4], 16
    $region65: #{tpu_custom_call.1} parent=1 // pred_fallthru
      _
    %2026 = sfence
    %2027 = vsyncpa [#allocation3], 1
    %2028 = vsyncpa [#allocation6], 1
    %2029 = vsyncpa [#allocation9], 1
    %2030 = vsyncpa [#allocation4], 1

</llo_original>
